<compile_context>
chip_gen: v6e
topology: v6e:2x2x1
jax: 0.10.0
libtpu: 0.0.40
codegen_flags: <defaults>
</compile_context>

<pallas_src>
import functools

import jax
import jax.numpy as jnp
from jax.experimental import pallas as pl
from jax.experimental.pallas import tpu as pltpu


def _round_up(x, m):
    return (x + m - 1) // m * m


def make_cnn_kernel(ksizes, kmax, c_pad, l_pad):
    """Fused kernel: one packed conv matmul + shifted adds + ReLU + max-pool + FC."""
    tap_start = [0]
    for k in ksizes[:-1]:
        tap_start.append(tap_start[-1] + k)

    def kernel(emb_ref, wconv_ref, bconv_ref, fcw_ref, fcb_ref, out_ref,
               xpad_ref, rep_ref):
        tB, L, D = emb_ref.shape
        n_tot = wconv_ref.shape[1]

        # Build the kmax-zero-padded activation block in VMEM (no HBM pad copy).
        xpad_ref[...] = jnp.zeros(xpad_ref.shape, xpad_ref.dtype)
        xpad_ref[:, kmax:kmax + L, :] = emb_ref[...]

        # One lane-dense MXU matmul covering every tap of every kernel size:
        # (tB * l_pad, D) @ (D, sum(k) * C_pad), f32 accumulation.
        x2 = xpad_ref[...].reshape(tB * l_pad, D)
        y = jnp.dot(x2, wconv_ref[...], preferred_element_type=jnp.float32)
        y = y.reshape(tB, l_pad, n_tot)

        bias = bconv_ref[...].astype(jnp.float32)            # (1, n_k * c_pad)

        for i, k in enumerate(ksizes):
            l_out = L + k + 1          # Conv1d(padding=k) output length
            off = kmax - k             # static offset into the kmax-padded buffer
            base = tap_start[i]
            # Rebuild the conv output with k shifted sublane-slice adds (VPU).
            acc = y[:, off:off + l_out, base * c_pad:(base + 1) * c_pad]
            for t in range(1, k):
                lo = (base + t) * c_pad
                acc = acc + y[:, off + t:off + t + l_out, lo:lo + c_pad]
            b_i = bias[:, i * c_pad:(i + 1) * c_pad].reshape(1, 1, c_pad)
            act = jnp.maximum(acc + b_i, 0.0)                # bias + ReLU (VPU)
            # Max over length (XLU), write into a 128-aligned lane slice of rep.
            rep_ref[:, i * c_pad:(i + 1) * c_pad] = jnp.max(act, axis=1)

        # TODO(synk): nn.Dropout is identity in inference mode; training-mode
        # random dropout is not implemented.
        logits = jnp.dot(rep_ref[...].astype(fcw_ref.dtype), fcw_ref[...],
                         preferred_element_type=jnp.float32)
        logits = logits + fcb_ref[...].astype(jnp.float32)
        out_ref[...] = logits.astype(out_ref.dtype)          # single block store

    return kernel


@functools.partial(jax.jit, static_argnames=("ksizes", "compute_dtype", "block_b"))
def cnn_forward(x_tokens, params, ksizes, compute_dtype=jnp.bfloat16, block_b=8):
    emb_table = params["emb"]            # (n_emb, D)
    conv_ws   = params["conv_w"]         # list of (k, D, C)
    conv_bs   = params["conv_b"]         # list of (1, C)
    fc_w      = params["fc_w"]           # (n_k * C, n_cls)
    fc_b      = params["fc_b"]           # (1, n_cls)

    B, L = x_tokens.shape
    D = emb_table.shape[1]
    C = conv_ws[0].shape[2]
    n_cls = fc_w.shape[1]
    n_k = len(ksizes)
    kmax = max(ksizes)
    n_taps = sum(ksizes)

    c_pad = _round_up(C, 128)                # lane-dense channel groups
    n_tot = n_taps * c_pad
    l_pad = _round_up(L + 2 * kmax, 8)       # sublane-aligned padded length

    if B % block_b != 0:                     # static fallback: single batch tile
        block_b = B
    n_blocks = B // block_b

    # --- pack weights into lane-dense, 128-aligned layouts (zero-padded) -----
    w_packed = jnp.zeros((D, n_tot), jnp.float32)
    tap = 0
    for w in conv_ws:                        # w: (k, D, C)
        for t in range(w.shape[0]):
            w_packed = w_packed.at[:, tap * c_pad:tap * c_pad + C].set(w[t])
            tap += 1
    b_packed = jnp.zeros((1, n_k * c_pad), jnp.float32)
    for i, b in enumerate(conv_bs):          # b: (1, C)
        b_packed = b_packed.at[:, i * c_pad:i * c_pad + C].set(b)
    fcw_packed = jnp.zeros((n_k * c_pad, n_cls), jnp.float32)
    for i in range(n_k):
        fcw_packed = fcw_packed.at[i * c_pad:i * c_pad + C, :].set(
            fc_w[i * C:(i + 1) * C, :])

    # Embedding gather stays in plain JAX (no extra padded HBM copy any more).
    # TODO(synk): fold the gather into the kernel (scalar-prefetch token ids +
    # per-tile DMA row gather) to remove the (B, L, D) HBM round trip entirely.
    emb = emb_table[x_tokens].astype(compute_dtype)          # (B, L, D)
    w_packed_c = w_packed.astype(compute_dtype)              # matmul operands only
    fcw_packed_c = fcw_packed.astype(compute_dtype)

    # --- VMEM budget estimate (with headroom), capped v7x-safe ---------------
    itemsize = jnp.dtype(compute_dtype).itemsize
    work = (block_b * l_pad * D * itemsize                   # xpad scratch
            + block_b * l_pad * n_tot * 4                    # y (f32)
            + 4 * block_b * (L + kmax + 1) * c_pad * 4       # acc/act temporaries
            + block_b * n_k * c_pad * 4)                     # rep scratch
    resident = (D * n_tot * itemsize + n_k * c_pad * 4
                + n_k * c_pad * n_cls * itemsize + n_cls * 4)
    io = 2 * block_b * L * D * itemsize + 2 * block_b * n_cls * 4
    vmem_limit = int(min(max(io + 2 * resident + 2 * work, 16 * 2**20), 48 * 2**20))

    kernel = make_cnn_kernel(tuple(ksizes), kmax, c_pad, l_pad)
    return pl.pallas_call(
        kernel,
        out_shape=jax.ShapeDtypeStruct((B, n_cls), jnp.float32),
        grid=(n_blocks,),
        in_specs=[
            pl.BlockSpec((block_b, L, D), lambda i: (i, 0, 0)),       # per-tile
            pl.BlockSpec((D, n_tot), lambda i: (0, 0)),               # resident
            pl.BlockSpec((1, n_k * c_pad), lambda i: (0, 0)),         # resident
            pl.BlockSpec((n_k * c_pad, n_cls), lambda i: (0, 0)),     # resident
            pl.BlockSpec((1, n_cls), lambda i: (0, 0)),               # resident
        ],
        out_specs=pl.BlockSpec((block_b, n_cls), lambda i: (i, 0)),
        scratch_shapes=[
            pltpu.VMEM((block_b, l_pad, D), compute_dtype),           # padded acts
            pltpu.VMEM((block_b, n_k * c_pad), jnp.float32),          # pooled rep
        ],
        compiler_params=pltpu.CompilerParams(
            dimension_semantics=("parallel",),
            vmem_limit_bytes=vmem_limit),
    )(emb, w_packed_c, b_packed, fcw_packed_c, fc_b)


def cnn_reference(x_tokens, params, ksizes):
    """Pure-JAX f32 reference mirroring the PyTorch forward (NCL conv layout)."""
    emb = params["emb"][x_tokens]                              # (B, L, D)
    emb_ncl = jnp.transpose(emb, (0, 2, 1))                    # (B, D, L)
    reps = []
    for w, b, k in zip(params["conv_w"], params["conv_b"], ksizes):
        w_oik = jnp.transpose(w, (2, 1, 0))                    # (C, D, k) = PyTorch layout
        y = jax.lax.conv_general_dilated(
            emb_ncl, w_oik, window_strides=(1,), padding=[(k, k)],
            dimension_numbers=("NCH", "OIH", "NCH"))           # (B, C, L + k + 1)
        y = jnp.maximum(y + b[:, :, None], 0.0)
        reps.append(jnp.max(y, axis=2))                        # (B, C)
    rep = jnp.concatenate(reps, axis=1)                        # (B, n_k * C)
    return rep @ params["fc_w"] + params["fc_b"]               # (B, n_cls)


if __name__ == "__main__":
    B, L = 16, 16
    n_emb, emb_dim, n_chan, n_cls = 32, 16, 8, 4
    ksizes = (3, 4, 5)

    key = jax.random.PRNGKey(0)
    keys = jax.random.split(key, 10)
    x = jax.random.randint(keys[0], (B, L), 0, n_emb, dtype=jnp.int32)

    params = {
        "emb": 0.1 * jax.random.normal(keys[1], (n_emb, emb_dim), jnp.float32),
        "conv_w": [],
        "conv_b": [],
    }
    for i, k in enumerate(ksizes):
        params["conv_w"].append(
            0.1 * jax.random.normal(keys[2 + 2 * i], (k, emb_dim, n_chan), jnp.float32))
        params["conv_b"].append(
            0.1 * jax.random.normal(keys[3 + 2 * i], (1, n_chan), jnp.float32))
    params["fc_w"] = 0.1 * jax.random.normal(
        keys[8], (n_chan * len(ksizes), n_cls), jnp.float32)
    params["fc_b"] = 0.1 * jax.random.normal(keys[9], (1, n_cls), jnp.float32)

    ref = cnn_reference(x, params, ksizes)

    # f32 operand path: bit-faithful to the PyTorch module.
    out = jax.block_until_ready(
        cnn_forward(x, params, ksizes, compute_dtype=jnp.float32, block_b=8))
    assert out.shape == (B, n_cls), out.shape
    assert jnp.allclose(out, ref, atol=1e-4, rtol=1e-4), (out, ref)

    # bf16 matmul-operand path (MXU-native on v5e/v6e/v7x), f32 accumulation.
    out_bf16 = jax.block_until_ready(
        cnn_forward(x, params, ksizes, compute_dtype=jnp.bfloat16, block_b=8))
    assert jnp.allclose(out_bf16, ref, atol=2e-2, rtol=2e-2), (out_bf16, ref)

    print("KERNEL_OK")
</pallas_src>

<mosaic_0001>
module attributes {stable_mosaic.version = 11 : i64} {
  func.func @kernel(%arg0: i32, %arg1: memref<8x16x16xf32, #tpu.memory_space<vmem>>, %arg2: memref<16x1536xf32, #tpu.memory_space<vmem>>, %arg3: memref<1x384xf32, #tpu.memory_space<vmem>>, %arg4: memref<384x4xf32, #tpu.memory_space<vmem>>, %arg5: memref<1x4xf32, #tpu.memory_space<vmem>>, %arg6: memref<8x4xf32, #tpu.memory_space<vmem>>, %arg7: memref<8x32x16xf32, #tpu.memory_space<vmem>>, %arg8: memref<8x384xf32, #tpu.memory_space<vmem>>) attributes {dimension_semantics = [#tpu.dimension_semantics<parallel>], iteration_bounds = array<i64: 2>, scalar_prefetch = 0 : i64, scratch_operands = 2 : i64, tpu.core_type = #tpu.core_type<tc>, window_params = [{transform_indices = @transform_0, window_bounds = array<i64: 8, 16, 16>}, {pipeline_mode = #tpu.pipeline_mode<synchronous>, transform_indices = @transform_1, window_bounds = array<i64: 16, 1536>}, {pipeline_mode = #tpu.pipeline_mode<synchronous>, transform_indices = @transform_2, window_bounds = array<i64: 1, 384>}, {pipeline_mode = #tpu.pipeline_mode<synchronous>, transform_indices = @transform_3, window_bounds = array<i64: 384, 4>}, {pipeline_mode = #tpu.pipeline_mode<synchronous>, transform_indices = @transform_4, window_bounds = array<i64: 1, 4>}, {transform_indices = @transform_5, window_bounds = array<i64: 8, 4>}]} {
    %cst = arith.constant 0.000000e+00 : f32
    %0 = vector.broadcast %cst : f32 to vector<8x32x16xf32>
    %c0 = arith.constant 0 : index
    %c0_0 = arith.constant 0 : index
    %c0_1 = arith.constant 0 : index
    %1 = vector.load %arg7[%c0, %c0_0, %c0_1] : memref<8x32x16xf32, #tpu.memory_space<vmem>>, vector<8x32x16xf32>
    tpu.vector_store %arg7[%c0, %c0_0, %c0_1], %0 {strides = array<i32>} : memref<8x32x16xf32, #tpu.memory_space<vmem>>, vector<8x32x16xf32>,
    %c0_2 = arith.constant 0 : index
    %c0_3 = arith.constant 0 : index
    %c0_4 = arith.constant 0 : index
    %2 = vector.load %arg1[%c0_2, %c0_3, %c0_4] : memref<8x16x16xf32, #tpu.memory_space<vmem>>, vector<8x16x16xf32>
    %c0_5 = arith.constant 0 : index
    %c5 = arith.constant 5 : index
    %c0_6 = arith.constant 0 : index
    %3 = vector.load %arg7[%c0_5, %c5, %c0_6] : memref<8x32x16xf32, #tpu.memory_space<vmem>>, vector<8x16x16xf32>
    tpu.vector_store %arg7[%c0_5, %c5, %c0_6], %2 {strides = array<i32>} : memref<8x32x16xf32, #tpu.memory_space<vmem>>, vector<8x16x16xf32>,
    %c0_7 = arith.constant 0 : index
    %c0_8 = arith.constant 0 : index
    %c0_9 = arith.constant 0 : index
    %4 = vector.load %arg7[%c0_7, %c0_8, %c0_9] : memref<8x32x16xf32, #tpu.memory_space<vmem>>, vector<8x32x16xf32>
    %5 = vector.shape_cast %4 : vector<8x32x16xf32> to vector<256x16xf32>
    %c0_10 = arith.constant 0 : index
    %c0_11 = arith.constant 0 : index
    %6 = vector.load %arg2[%c0_10, %c0_11] : memref<16x1536xf32, #tpu.memory_space<vmem>>, vector<16x1536xf32>
    %cst_12 = arith.constant dense<0.000000e+00> : vector<256x1536xf32>
    %7 = tpu.matmul %5, %6, %cst_12 {dimension_numbers = #tpu.dot_dimension_numbers<[1], [0], [0], [1], [0, 0, 1, 1], [], []>} : vector<256x16xf32>, vector<16x1536xf32>, vector<256x1536xf32> -> vector<256x1536xf32>
    %8 = vector.shape_cast %7 : vector<256x1536xf32> to vector<8x32x1536xf32>
    %c0_13 = arith.constant 0 : index
    %c0_14 = arith.constant 0 : index
    %9 = vector.load %arg3[%c0_13, %c0_14] : memref<1x384xf32, #tpu.memory_space<vmem>>, vector<1x384xf32>
    %10 = vector.extract_strided_slice %8 {offsets = [0, 2, 0], sizes = [8, 20, 128], strides = [1, 1, 1]} : vector<8x32x1536xf32> to vector<8x20x128xf32>
    %11 = vector.extract_strided_slice %8 {offsets = [0, 3, 128], sizes = [8, 20, 128], strides = [1, 1, 1]} : vector<8x32x1536xf32> to vector<8x20x128xf32>
    %12 = arith.addf %10, %11 : vector<8x20x128xf32>
    %13 = vector.extract_strided_slice %8 {offsets = [0, 4, 256], sizes = [8, 20, 128], strides = [1, 1, 1]} : vector<8x32x1536xf32> to vector<8x20x128xf32>
    %14 = arith.addf %12, %13 : vector<8x20x128xf32>
    %15 = vector.extract_strided_slice %9 {offsets = [0, 0], sizes = [1, 128], strides = [1, 1]} : vector<1x384xf32> to vector<1x128xf32>
    %16 = vector.shape_cast %15 : vector<1x128xf32> to vector<1x1x128xf32>
    %17 = vector.broadcast %16 : vector<1x1x128xf32> to vector<8x20x128xf32>
    %18 = arith.addf %14, %17 : vector<8x20x128xf32>
    %cst_15 = arith.constant 0.000000e+00 : f32
    %19 = vector.broadcast %cst_15 : f32 to vector<8x20x128xf32>
    %20 = arith.maximumf %18, %19 : vector<8x20x128xf32>
    %cst_16 = arith.constant dense<0xFF800000> : vector<8x128xf32>
    %21 = vector.multi_reduction <maximumf>, %20, %cst_16 [1] : vector<8x20x128xf32> to vector<8x128xf32>
    %c0_17 = arith.constant 0 : index
    %c0_18 = arith.constant 0 : index
    %22 = vector.load %arg8[%c0_17, %c0_18] : memref<8x384xf32, #tpu.memory_space<vmem>>, vector<8x128xf32>
    tpu.vector_store %arg8[%c0_17, %c0_18], %21 {strides = array<i32>} : memref<8x384xf32, #tpu.memory_space<vmem>>, vector<8x128xf32>,
    %23 = vector.extract_strided_slice %8 {offsets = [0, 1, 384], sizes = [8, 21, 128], strides = [1, 1, 1]} : vector<8x32x1536xf32> to vector<8x21x128xf32>
    %24 = vector.extract_strided_slice %8 {offsets = [0, 2, 512], sizes = [8, 21, 128], strides = [1, 1, 1]} : vector<8x32x1536xf32> to vector<8x21x128xf32>
    %25 = arith.addf %23, %24 : vector<8x21x128xf32>
    %26 = vector.extract_strided_slice %8 {offsets = [0, 3, 640], sizes = [8, 21, 128], strides = [1, 1, 1]} : vector<8x32x1536xf32> to vector<8x21x128xf32>
    %27 = arith.addf %25, %26 : vector<8x21x128xf32>
    %28 = vector.extract_strided_slice %8 {offsets = [0, 4, 768], sizes = [8, 21, 128], strides = [1, 1, 1]} : vector<8x32x1536xf32> to vector<8x21x128xf32>
    %29 = arith.addf %27, %28 : vector<8x21x128xf32>
    %30 = vector.extract_strided_slice %9 {offsets = [0, 128], sizes = [1, 128], strides = [1, 1]} : vector<1x384xf32> to vector<1x128xf32>
    %31 = vector.shape_cast %30 : vector<1x128xf32> to vector<1x1x128xf32>
    %32 = vector.broadcast %31 : vector<1x1x128xf32> to vector<8x21x128xf32>
    %33 = arith.addf %29, %32 : vector<8x21x128xf32>
    %cst_19 = arith.constant 0.000000e+00 : f32
    %34 = vector.broadcast %cst_19 : f32 to vector<8x21x128xf32>
    %35 = arith.maximumf %33, %34 : vector<8x21x128xf32>
    %cst_20 = arith.constant dense<0xFF800000> : vector<8x128xf32>
    %36 = vector.multi_reduction <maximumf>, %35, %cst_20 [1] : vector<8x21x128xf32> to vector<8x128xf32>
    %c0_21 = arith.constant 0 : index
    %c128 = arith.constant 128 : index
    %37 = vector.load %arg8[%c0_21, %c128] : memref<8x384xf32, #tpu.memory_space<vmem>>, vector<8x128xf32>
    tpu.vector_store %arg8[%c0_21, %c128], %36 {strides = array<i32>} : memref<8x384xf32, #tpu.memory_space<vmem>>, vector<8x128xf32>,
    %38 = vector.extract_strided_slice %8 {offsets = [0, 0, 896], sizes = [8, 22, 128], strides = [1, 1, 1]} : vector<8x32x1536xf32> to vector<8x22x128xf32>
    %39 = vector.extract_strided_slice %8 {offsets = [0, 1, 1024], sizes = [8, 22, 128], strides = [1, 1, 1]} : vector<8x32x1536xf32> to vector<8x22x128xf32>
    %40 = arith.addf %38, %39 : vector<8x22x128xf32>
    %41 = vector.extract_strided_slice %8 {offsets = [0, 2, 1152], sizes = [8, 22, 128], strides = [1, 1, 1]} : vector<8x32x1536xf32> to vector<8x22x128xf32>
    %42 = arith.addf %40, %41 : vector<8x22x128xf32>
    %43 = vector.extract_strided_slice %8 {offsets = [0, 3, 1280], sizes = [8, 22, 128], strides = [1, 1, 1]} : vector<8x32x1536xf32> to vector<8x22x128xf32>
    %44 = arith.addf %42, %43 : vector<8x22x128xf32>
    %45 = vector.extract_strided_slice %8 {offsets = [0, 4, 1408], sizes = [8, 22, 128], strides = [1, 1, 1]} : vector<8x32x1536xf32> to vector<8x22x128xf32>
    %46 = arith.addf %44, %45 : vector<8x22x128xf32>
    %47 = vector.extract_strided_slice %9 {offsets = [0, 256], sizes = [1, 128], strides = [1, 1]} : vector<1x384xf32> to vector<1x128xf32>
    %48 = vector.shape_cast %47 : vector<1x128xf32> to vector<1x1x128xf32>
    %49 = vector.broadcast %48 : vector<1x1x128xf32> to vector<8x22x128xf32>
    %50 = arith.addf %46, %49 : vector<8x22x128xf32>
    %cst_22 = arith.constant 0.000000e+00 : f32
    %51 = vector.broadcast %cst_22 : f32 to vector<8x22x128xf32>
    %52 = arith.maximumf %50, %51 : vector<8x22x128xf32>
    %cst_23 = arith.constant dense<0xFF800000> : vector<8x128xf32>
    %53 = vector.multi_reduction <maximumf>, %52, %cst_23 [1] : vector<8x22x128xf32> to vector<8x128xf32>
    %c0_24 = arith.constant 0 : index
    %c256 = arith.constant 256 : index
    %54 = vector.load %arg8[%c0_24, %c256] : memref<8x384xf32, #tpu.memory_space<vmem>>, vector<8x128xf32>
    tpu.vector_store %arg8[%c0_24, %c256], %53 {strides = array<i32>} : memref<8x384xf32, #tpu.memory_space<vmem>>, vector<8x128xf32>,
    %c0_25 = arith.constant 0 : index
    %c0_26 = arith.constant 0 : index
    %55 = vector.load %arg8[%c0_25, %c0_26] : memref<8x384xf32, #tpu.memory_space<vmem>>, vector<8x384xf32>
    %c0_27 = arith.constant 0 : index
    %c0_28 = arith.constant 0 : index
    %56 = vector.load %arg4[%c0_27, %c0_28] : memref<384x4xf32, #tpu.memory_space<vmem>>, vector<384x4xf32>
    %cst_29 = arith.constant dense<0.000000e+00> : vector<8x4xf32>
    %57 = tpu.matmul %55, %56, %cst_29 {dimension_numbers = #tpu.dot_dimension_numbers<[1], [0], [0], [1], [0, 0, 1, 1], [], []>} : vector<8x384xf32>, vector<384x4xf32>, vector<8x4xf32> -> vector<8x4xf32>
    %c0_30 = arith.constant 0 : index
    %c0_31 = arith.constant 0 : index
    %58 = vector.load %arg5[%c0_30, %c0_31] : memref<1x4xf32, #tpu.memory_space<vmem>>, vector<1x4xf32>
    %59 = vector.broadcast %58 : vector<1x4xf32> to vector<8x4xf32>
    %60 = arith.addf %57, %59 : vector<8x4xf32>
    %c0_32 = arith.constant 0 : index
    %c0_33 = arith.constant 0 : index
    %61 = vector.load %arg6[%c0_32, %c0_33] : memref<8x4xf32, #tpu.memory_space<vmem>>, vector<8x4xf32>
    tpu.vector_store %arg6[%c0_32, %c0_33], %60 {strides = array<i32>} : memref<8x4xf32, #tpu.memory_space<vmem>>, vector<8x4xf32>,
    return
  }
  func.func @transform_0(%arg0: i32) -> (i32, i32, i32) {
    %c0_i32 = arith.constant 0 : i32
    %c0_i32_0 = arith.constant 0 : i32
    %c0_i32_1 = arith.constant 0 : i32
    return %arg0, %c0_i32, %c0_i32_0 : i32, i32, i32
  }
  func.func @transform_1(%arg0: i32) -> (i32, i32) {
    %c0_i32 = arith.constant 0 : i32
    %c0_i32_0 = arith.constant 0 : i32
    %c0_i32_1 = arith.constant 0 : i32
    return %c0_i32, %c0_i32_0 : i32, i32
  }
  func.func @transform_2(%arg0: i32) -> (i32, i32) {
    %c0_i32 = arith.constant 0 : i32
    %c0_i32_0 = arith.constant 0 : i32
    %c0_i32_1 = arith.constant 0 : i32
    return %c0_i32, %c0_i32_0 : i32, i32
  }
  func.func @transform_3(%arg0: i32) -> (i32, i32) {
    %c0_i32 = arith.constant 0 : i32
    %c0_i32_0 = arith.constant 0 : i32
    %c0_i32_1 = arith.constant 0 : i32
    return %c0_i32, %c0_i32_0 : i32, i32
  }
  func.func @transform_4(%arg0: i32) -> (i32, i32) {
    %c0_i32 = arith.constant 0 : i32
    %c0_i32_0 = arith.constant 0 : i32
    %c0_i32_1 = arith.constant 0 : i32
    return %c0_i32, %c0_i32_0 : i32, i32
  }
  func.func @transform_5(%arg0: i32) -> (i32, i32) {
    %c0_i32 = arith.constant 0 : i32
    %c0_i32_0 = arith.constant 0 : i32
    return %arg0, %c0_i32 : i32, i32
  }
}

</mosaic_0001>

<llo_original>
// kernel: cnn_forward.1
$region0: #{cnn_forward.1}
  #allocation0 [shape = 'u32[]', space=smem, size = 0x4, offset = 0x4, fixed_abs, tag = 'smem constant byte address 0x4 - core index']
  #allocation1 [shape = 'u32[144,128]{1,0:T(1,128)}', space=vmem, size = 0x12000, scoped, tag = 'internal scratch']
  #allocation2 [shape = 'f32[8,32,16]{2,1,0:T(8,128)}', space=vmem, size = 0x20000, scoped, tag = 'scratch operand']
  #allocation3 [shape = 'f32[8,384]{1,0:T(8,128)}', space=vmem, size = 0x3000, scoped, tag = 'scratch operand']
  %s0 = inlined_call_operand.vmem [shape: f32[16,16,16], index: 0, kind: input, shape index: {}]
  %s1 = inlined_call_operand.vmem [shape: f32[16,1536], index: 1, kind: input, shape index: {}]
  %s2 = inlined_call_operand.vmem [shape: f32[1,384], index: 2, kind: input, shape index: {}]
  %s3 = inlined_call_operand.vmem [shape: f32[384,4], index: 3, kind: input, shape index: {}]
  %s4 = inlined_call_operand.vmem [shape: f32[1,4], index: 4, kind: input, shape index: {}]
  %s5 = inlined_call_operand.vmem [shape: f32[16,4], index: 5, kind: output, shape index: {}]
  %s6 = sld [smem:[#allocation0]]
  $region53: #{cnn_forward.1} parent=0
    _
  %s8 = ssub.s32 1, %s6
  %s9 = scalar_select 0, %s8, %s6
  loop: start=0, step=1, limit=4
  $region2: #{cnn_forward.1} parent=0 // loop_pre_header
    _
  $region3: #{cnn_forward.1} parent=0 // loop_header
    %s11 = sphi 0, %s15
    %p12 = scmp.ge.s32.totalorder %s11, 4
    %s21 = sphi 0, %s23
    %s24 = sphi 0, %s21
    %s25 = sphi 0, %s24
    %s41 = sphi 0, %s25
    %s45 = sphi 0, %s45
    %s47 = sphi 0, %s45
    %s48 = sphi 0, %s47
    %s62 = sphi 0, %s48
    %s66 = sphi 0, %s66
    %s68 = sphi 0, %s66
    %s69 = sphi 0, %s68
    %s83 = sphi 0, %s69
    %s87 = sphi 0, %s87
    %s89 = sphi 0, %s87
    %s90 = sphi 0, %s89
    %s104 = sphi 0, %s90
    %s108 = sphi 0, %s108
    %s110 = sphi 0, %s108
    %s111 = sphi 0, %s110
    %s125 = sphi 0, %s111
    %s131 = sphi 0, %s133
    %s134 = sphi 0, %s131
    %s135 = sphi 0, %s134
    %s151 = sphi 0, %s135
  $region4: #{cnn_forward.1} parent=0 // loop_header_branch
    %14 = sbr.rel (%p12) target = $region8
  $region5: #{cnn_forward.1} parent=0 // loop_body
    %s16 = ssub.s32 %s11, 1
    %s17 = ssub.s32 %s11, 2
    %s18 = sadd.s32 %s11, 1
    %s19 = ssub.s32 %s11, %s18
    %p20 = scmp.eq.s32.totalorder %s19, 0
    %s22 = sadd.s32 %s21, 1
    %s23 = scalar_select %p20, %s21, %s22
    %p26 = pneg %p20
    %p27 = scmp.eq.s32.totalorder %s11, 1
    %p28 = por %p26, %p27
    %p29 = scmp.ne.s32.totalorder %s21, %s24
    %p30 = scmp.eq.s32.totalorder %s11, 0
    %p31 = por %p29, %p30
    %p32 = scmp.ne.s32.totalorder %s21, %s24
    %p33 = scmp.eq.s32.totalorder %s16, 1
    %p34 = por %p32, %p33
    %p35 = scmp.ne.s32.totalorder %s24, %s25
    %p36 = scmp.eq.s32.totalorder %s16, 0
    %p37 = por %p35, %p36
    %p38 = scmp.ne.s32.totalorder %s24, %s25
    %p39 = scmp.eq.s32.totalorder %s17, 1
    %p40 = por %p38, %p39
    %p42 = scmp.ne.s32.totalorder %s25, %s41
    %p43 = scmp.eq.s32.totalorder %s17, 0
    %p44 = por %p42, %p43
    %s46 = sadd.s32 %s45, 1
    %p49 = scmp.eq.s32.totalorder %s11, 1
    %p50 = scmp.ne.s32.totalorder %s45, %s47
    %p51 = scmp.eq.s32.totalorder %s11, 0
    %p52 = por %p50, %p51
    %p53 = scmp.ne.s32.totalorder %s45, %s47
    %p54 = scmp.eq.s32.totalorder %s16, 1
    %p55 = por %p53, %p54
    %p56 = scmp.ne.s32.totalorder %s47, %s48
    %p57 = scmp.eq.s32.totalorder %s16, 0
    %p58 = por %p56, %p57
    %p59 = scmp.ne.s32.totalorder %s47, %s48
    %p60 = scmp.eq.s32.totalorder %s17, 1
    %p61 = por %p59, %p60
    %p63 = scmp.ne.s32.totalorder %s48, %s62
    %p64 = scmp.eq.s32.totalorder %s17, 0
    %p65 = por %p63, %p64
    %s67 = sadd.s32 %s66, 1
    %p70 = scmp.eq.s32.totalorder %s11, 1
    %p71 = scmp.ne.s32.totalorder %s66, %s68
    %p72 = scmp.eq.s32.totalorder %s11, 0
    %p73 = por %p71, %p72
    %p74 = scmp.ne.s32.totalorder %s66, %s68
    %p75 = scmp.eq.s32.totalorder %s16, 1
    %p76 = por %p74, %p75
    %p77 = scmp.ne.s32.totalorder %s68, %s69
    %p78 = scmp.eq.s32.totalorder %s16, 0
    %p79 = por %p77, %p78
    %p80 = scmp.ne.s32.totalorder %s68, %s69
    %p81 = scmp.eq.s32.totalorder %s17, 1
    %p82 = por %p80, %p81
    %p84 = scmp.ne.s32.totalorder %s69, %s83
    %p85 = scmp.eq.s32.totalorder %s17, 0
    %p86 = por %p84, %p85
    %s88 = sadd.s32 %s87, 1
    %p91 = scmp.eq.s32.totalorder %s11, 1
    %p92 = scmp.ne.s32.totalorder %s87, %s89
    %p93 = scmp.eq.s32.totalorder %s11, 0
    %p94 = por %p92, %p93
    %p95 = scmp.ne.s32.totalorder %s87, %s89
    %p96 = scmp.eq.s32.totalorder %s16, 1
    %p97 = por %p95, %p96
    %p98 = scmp.ne.s32.totalorder %s89, %s90
    %p99 = scmp.eq.s32.totalorder %s16, 0
    %p100 = por %p98, %p99
    %p101 = scmp.ne.s32.totalorder %s89, %s90
    %p102 = scmp.eq.s32.totalorder %s17, 1
    %p103 = por %p101, %p102
    %p105 = scmp.ne.s32.totalorder %s90, %s104
    %p106 = scmp.eq.s32.totalorder %s17, 0
    %p107 = por %p105, %p106
    %s109 = sadd.s32 %s108, 1
    %p112 = scmp.eq.s32.totalorder %s11, 1
    %p113 = scmp.ne.s32.totalorder %s108, %s110
    %p114 = scmp.eq.s32.totalorder %s11, 0
    %p115 = por %p113, %p114
    %p116 = scmp.ne.s32.totalorder %s108, %s110
    %p117 = scmp.eq.s32.totalorder %s16, 1
    %p118 = por %p116, %p117
    %p119 = scmp.ne.s32.totalorder %s110, %s111
    %p120 = scmp.eq.s32.totalorder %s16, 0
    %p121 = por %p119, %p120
    %p122 = scmp.ne.s32.totalorder %s110, %s111
    %p123 = scmp.eq.s32.totalorder %s17, 1
    %p124 = por %p122, %p123
    %p126 = scmp.ne.s32.totalorder %s111, %s125
    %p127 = scmp.eq.s32.totalorder %s17, 0
    %p128 = por %p126, %p127
    %s129 = ssub.s32 %s11, %s18
    %p130 = scmp.eq.s32.totalorder %s129, 0
    %s132 = sadd.s32 %s131, 1
    %s133 = scalar_select %p130, %s131, %s132
    %p136 = pneg %p130
    %p137 = scmp.eq.s32.totalorder %s11, 1
    %p138 = por %p136, %p137
    %p139 = scmp.ne.s32.totalorder %s131, %s134
    %p140 = scmp.eq.s32.totalorder %s11, 0
    %p141 = por %p139, %p140
    %p142 = scmp.ne.s32.totalorder %s131, %s134
    %p143 = scmp.eq.s32.totalorder %s16, 1
    %p144 = por %p142, %p143
    %p145 = scmp.ne.s32.totalorder %s134, %s135
    %p146 = scmp.eq.s32.totalorder %s16, 0
    %p147 = por %p145, %p146
    %p148 = scmp.ne.s32.totalorder %s134, %s135
    %p149 = scmp.eq.s32.totalorder %s17, 1
    %p150 = por %p148, %p149
    %p152 = scmp.ne.s32.totalorder %s135, %s151
    %p153 = scmp.eq.s32.totalorder %s17, 0
    %p154 = por %p152, %p153
    %p155 = scmp.le.s32.totalorder 1, %s11
    %p156 = scmp.lt.s32.totalorder %s11, 3
    %p157 = pnand %p155, %p156
    %p158 = pneg %p157
    // Predicated region
    $region9: #{cnn_forward.1} parent=5 // pred_check
      _
    $region10: #{cnn_forward.1} parent=5 // pred_check_branch
      %160 = sbr.rel (%p157) target = $region12
    $region11: #{cnn_forward.1} parent=5 // pred_region
      %s161 = ssub.s32 %s11, 1
      // Predicated region
      $region13: #{cnn_forward.1} parent=11 // pred_check
        %p162 = pneg %p58
      $region14: #{cnn_forward.1} parent=11 // pred_check_branch
        %164 = sbr.rel (%p162) target = $region16
      $region15: #{cnn_forward.1} parent=11 // pred_region
        _
      $region16: #{cnn_forward.1} parent=11 // pred_fallthru
        _
      // Predicated region
      $region17: #{cnn_forward.1} parent=11 // pred_check
        %p165 = pneg %p79
      $region18: #{cnn_forward.1} parent=11 // pred_check_branch
        %167 = sbr.rel (%p165) target = $region20
      $region19: #{cnn_forward.1} parent=11 // pred_region
        _
      $region20: #{cnn_forward.1} parent=11 // pred_fallthru
        _
      // Predicated region
      $region21: #{cnn_forward.1} parent=11 // pred_check
        %p168 = pneg %p100
      $region22: #{cnn_forward.1} parent=11 // pred_check_branch
        %170 = sbr.rel (%p168) target = $region24
      $region23: #{cnn_forward.1} parent=11 // pred_region
        _
      $region24: #{cnn_forward.1} parent=11 // pred_fallthru
        _
      // Predicated region
      $region25: #{cnn_forward.1} parent=11 // pred_check
        %p171 = pneg %p121
      $region26: #{cnn_forward.1} parent=11 // pred_check_branch
        %173 = sbr.rel (%p171) target = $region28
      $region27: #{cnn_forward.1} parent=11 // pred_region
        _
      $region28: #{cnn_forward.1} parent=11 // pred_fallthru
        _
    $region12: #{cnn_forward.1} parent=5 // pred_fallthru
      _
    %p174 = scmp.lt.s32.totalorder %s11, 2
    // Predicated region
    $region29: #{cnn_forward.1} parent=5 // pred_check
      %p175 = pneg %p174
    $region30: #{cnn_forward.1} parent=5 // pred_check_branch
      %177 = sbr.rel (%p175) target = $region32
    $region31: #{cnn_forward.1} parent=5 // pred_region
      // Predicated region
      $region33: #{cnn_forward.1} parent=31 // pred_check
        %p178 = pneg %p31
      $region34: #{cnn_forward.1} parent=31 // pred_check_branch
        %180 = sbr.rel (%p178) target = $region36
      $region35: #{cnn_forward.1} parent=31 // pred_region
        %s181 = smul.u32 8, %s11
        %p182 = scmp.lt.s32.totalorder %s181, 15
        %s183 = scalar_select %p182, %s181, 15
        %s184 = smul.addr %s183, 2
        %s185 = smul.addr %s184, 8
        %s186 = scalar_lea.vmem %s0, %s185
        %s187 = smul.u32 8, %s11
      $region36: #{cnn_forward.1} parent=31 // pred_fallthru
        _
    $region32: #{cnn_forward.1} parent=5 // pred_fallthru
      _
    %p188 = scmp.le.s32.totalorder 1, %s11
    %p189 = scmp.lt.s32.totalorder %s11, 3
    %p190 = pnand %p188, %p189
    %p191 = pneg %p190
    // Predicated region
    $region37: #{cnn_forward.1} parent=5 // pred_check
      _
    $region38: #{cnn_forward.1} parent=5 // pred_check_branch
      %193 = sbr.rel (%p190) target = $region40
    $region39: #{cnn_forward.1} parent=5 // pred_region
      %s194 = ssub.s32 %s11, 1
      %s195 = smul.u32 8, %s16
      %p196 = scmp.lt.s32.totalorder %s195, 15
      %s197 = scalar_select %p196, %s195, 15
      %s198 = smul.addr %s197, 2
      %s199 = smul.addr %s198, 8
      %s200 = scalar_lea.vmem %s0, %s199
      %p201 = pneg %p37
      %p202 = pneg %p34
      %p203 = pneg %p58
      %p204 = pneg %p55
      %p205 = pneg %p79
      %p206 = pneg %p76
      %p207 = pneg %p100
      %p208 = pneg %p97
      %p209 = pneg %p121
      %p210 = pneg %p118
      %p211 = pneg %p147
      %p212 = pneg %p144
      %p213 = scmp.lt.s32.totalorder %s16, 1
      %s214 = scalar_select %p213, %s16, 1
      %s215 = smul.addr %s214, 8
      %s216 = scalar_lea.vmem %s5, %s215
      %s217 = smul.u32 8, %s16
      %p218 = scmp.lt.s32.totalorder %s217, 15
      %s219 = scalar_select %p218, %s217, 15
      %s220 = smul.addr %s219, 2
      %s221 = smul.addr %s220, 8
      %s222 = scalar_lea.vmem %s0, %s221
      %s223 = smul.u32 8, %s16
      %p224 = scmp.lt.s32.totalorder %s16, 1
      %s225 = scalar_select %p224, %s16, 1
      %s226 = smul.addr %s225, 8
      %s227 = scalar_lea.vmem %s5, %s226
      %vm228 = vcmask 130048
      %229 = vst.msk [vmem:[#allocation2] sm:$0xff] %vm228, 0.0
      %230 = vst.msk [vmem:[#allocation2 + $0x8] sm:$0xff] %vm228, 0.0
      %231 = vst.msk [vmem:[#allocation2 + $0x10] sm:$0xff] %vm228, 0.0
      %232 = vst.msk [vmem:[#allocation2 + $0x18] sm:$0xff] %vm228, 0.0
      %233 = vst.msk [vmem:[#allocation2 + $0x20] sm:$0xff] %vm228, 0.0
      %234 = vst.msk [vmem:[#allocation2 + $0x28] sm:$0xff] %vm228, 0.0
      %235 = vst.msk [vmem:[#allocation2 + $0x30] sm:$0xff] %vm228, 0.0
      %236 = vst.msk [vmem:[#allocation2 + $0x38] sm:$0xff] %vm228, 0.0
      %237 = vst.msk [vmem:[#allocation2 + $0x40] sm:$0xff] %vm228, 0.0
      %238 = vst.msk [vmem:[#allocation2 + $0x48] sm:$0xff] %vm228, 0.0
      %239 = vst.msk [vmem:[#allocation2 + $0x50] sm:$0xff] %vm228, 0.0
      %240 = vst.msk [vmem:[#allocation2 + $0x58] sm:$0xff] %vm228, 0.0
      %241 = vst.msk [vmem:[#allocation2 + $0x60] sm:$0xff] %vm228, 0.0
      %242 = vst.msk [vmem:[#allocation2 + $0x68] sm:$0xff] %vm228, 0.0
      %243 = vst.msk [vmem:[#allocation2 + $0x70] sm:$0xff] %vm228, 0.0
      %244 = vst.msk [vmem:[#allocation2 + $0x78] sm:$0xff] %vm228, 0.0
      %245 = vst.msk [vmem:[#allocation2 + $0x80] sm:$0xff] %vm228, 0.0
      %246 = vst.msk [vmem:[#allocation2 + $0x88] sm:$0xff] %vm228, 0.0
      %247 = vst.msk [vmem:[#allocation2 + $0x90] sm:$0xff] %vm228, 0.0
      %248 = vst.msk [vmem:[#allocation2 + $0x98] sm:$0xff] %vm228, 0.0
      %249 = vst.msk [vmem:[#allocation2 + $0xa0] sm:$0xff] %vm228, 0.0
      %250 = vst.msk [vmem:[#allocation2 + $0xa8] sm:$0xff] %vm228, 0.0
      %251 = vst.msk [vmem:[#allocation2 + $0xb0] sm:$0xff] %vm228, 0.0
      %252 = vst.msk [vmem:[#allocation2 + $0xb8] sm:$0xff] %vm228, 0.0
      %253 = vst.msk [vmem:[#allocation2 + $0xc0] sm:$0xff] %vm228, 0.0
      %254 = vst.msk [vmem:[#allocation2 + $0xc8] sm:$0xff] %vm228, 0.0
      %255 = vst.msk [vmem:[#allocation2 + $0xd0] sm:$0xff] %vm228, 0.0
      %256 = vst.msk [vmem:[#allocation2 + $0xd8] sm:$0xff] %vm228, 0.0
      %257 = vst.msk [vmem:[#allocation2 + $0xe0] sm:$0xff] %vm228, 0.0
      %258 = vst.msk [vmem:[#allocation2 + $0xe8] sm:$0xff] %vm228, 0.0
      %259 = vst.msk [vmem:[#allocation2 + $0xf0] sm:$0xff] %vm228, 0.0
      %260 = vst.msk [vmem:[#allocation2 + $0xf8] sm:$0xff] %vm228, 0.0
      %v261 = vld [vmem:[%s222] sm:$0xff]
      %v262 = vld [vmem:[%s222 + $0x8] sm:$0xff]
      %v263 = vld [vmem:[%s222 + $0x10] sm:$0xff]
      %v264 = vld [vmem:[%s222 + $0x18] sm:$0xff]
      %v265 = vld [vmem:[%s222 + $0x20] sm:$0xff]
      %v266 = vld [vmem:[%s222 + $0x28] sm:$0xff]
      %v267 = vld [vmem:[%s222 + $0x30] sm:$0xff]
      %v268 = vld [vmem:[%s222 + $0x38] sm:$0xff]
      %v269 = vld [vmem:[%s222 + $0x40] sm:$0xff]
      %v270 = vld [vmem:[%s222 + $0x48] sm:$0xff]
      %v271 = vld [vmem:[%s222 + $0x50] sm:$0xff]
      %v272 = vld [vmem:[%s222 + $0x58] sm:$0xff]
      %v273 = vld [vmem:[%s222 + $0x60] sm:$0xff]
      %v274 = vld [vmem:[%s222 + $0x68] sm:$0xff]
      %v275 = vld [vmem:[%s222 + $0x70] sm:$0xff]
      %v276 = vld [vmem:[%s222 + $0x78] sm:$0xff]
      %277 = vst.msk [vmem:[#allocation2 + $0x5] sm:$0xff] %vm228, %v261
      %278 = vst.msk [vmem:[#allocation2 + $0xd] sm:$0xff] %vm228, %v262
      %279 = vst.msk [vmem:[#allocation2 + $0x25] sm:$0xff] %vm228, %v263
      %280 = vst.msk [vmem:[#allocation2 + $0x2d] sm:$0xff] %vm228, %v264
      %281 = vst.msk [vmem:[#allocation2 + $0x45] sm:$0xff] %vm228, %v265
      %282 = vst.msk [vmem:[#allocation2 + $0x4d] sm:$0xff] %vm228, %v266
      %283 = vst.msk [vmem:[#allocation2 + $0x65] sm:$0xff] %vm228, %v267
      %284 = vst.msk [vmem:[#allocation2 + $0x6d] sm:$0xff] %vm228, %v268
      %285 = vst.msk [vmem:[#allocation2 + $0x85] sm:$0xff] %vm228, %v269
      %286 = vst.msk [vmem:[#allocation2 + $0x8d] sm:$0xff] %vm228, %v270
      %287 = vst.msk [vmem:[#allocation2 + $0xa5] sm:$0xff] %vm228, %v271
      %288 = vst.msk [vmem:[#allocation2 + $0xad] sm:$0xff] %vm228, %v272
      %289 = vst.msk [vmem:[#allocation2 + $0xc5] sm:$0xff] %vm228, %v273
      %290 = vst.msk [vmem:[#allocation2 + $0xcd] sm:$0xff] %vm228, %v274
      %291 = vst.msk [vmem:[#allocation2 + $0xe5] sm:$0xff] %vm228, %v275
      %292 = vst.msk [vmem:[#allocation2 + $0xed] sm:$0xff] %vm228, %v276
      %v293 = vld [vmem:[#allocation2] sm:$0xff]
      %v294 = vld [vmem:[#allocation2 + $0x8] sm:$0xff]
      %v295 = vld [vmem:[#allocation2 + $0x10] sm:$0xff]
      %v296 = vld [vmem:[#allocation2 + $0x18] sm:$0xff]
      %v297 = vld [vmem:[#allocation2 + $0x20] sm:$0xff]
      %v298 = vld [vmem:[#allocation2 + $0x28] sm:$0xff]
      %v299 = vld [vmem:[#allocation2 + $0x30] sm:$0xff]
      %v300 = vld [vmem:[#allocation2 + $0x38] sm:$0xff]
      %v301 = vld [vmem:[#allocation2 + $0x40] sm:$0xff]
      %v302 = vld [vmem:[#allocation2 + $0x48] sm:$0xff]
      %v303 = vld [vmem:[#allocation2 + $0x50] sm:$0xff]
      %v304 = vld [vmem:[#allocation2 + $0x58] sm:$0xff]
      %v305 = vld [vmem:[#allocation2 + $0x60] sm:$0xff]
      %v306 = vld [vmem:[#allocation2 + $0x68] sm:$0xff]
      %v307 = vld [vmem:[#allocation2 + $0x70] sm:$0xff]
      %v308 = vld [vmem:[#allocation2 + $0x78] sm:$0xff]
      %v309 = vld [vmem:[#allocation2 + $0x80] sm:$0xff]
      %v310 = vld [vmem:[#allocation2 + $0x88] sm:$0xff]
      %v311 = vld [vmem:[#allocation2 + $0x90] sm:$0xff]
      %v312 = vld [vmem:[#allocation2 + $0x98] sm:$0xff]
      %v313 = vld [vmem:[#allocation2 + $0xa0] sm:$0xff]
      %v314 = vld [vmem:[#allocation2 + $0xa8] sm:$0xff]
      %v315 = vld [vmem:[#allocation2 + $0xb0] sm:$0xff]
      %v316 = vld [vmem:[#allocation2 + $0xb8] sm:$0xff]
      %v317 = vld [vmem:[#allocation2 + $0xc0] sm:$0xff]
      %v318 = vld [vmem:[#allocation2 + $0xc8] sm:$0xff]
      %v319 = vld [vmem:[#allocation2 + $0xd0] sm:$0xff]
      %v320 = vld [vmem:[#allocation2 + $0xd8] sm:$0xff]
      %v321 = vld [vmem:[#allocation2 + $0xe0] sm:$0xff]
      %v322 = vld [vmem:[#allocation2 + $0xe8] sm:$0xff]
      %v323 = vld [vmem:[#allocation2 + $0xf0] sm:$0xff]
      %v324 = vld [vmem:[#allocation2 + $0xf8] sm:$0xff]
      %v325 = vld [vmem:[%s1] sm:$0xff]
      %v326 = vld [vmem:[%s1 + $0x8] sm:$0xff]
      %v327 = vld [vmem:[%s1 + $0x10] sm:$0xff]
      %v328 = vld [vmem:[%s1 + $0x18] sm:$0xff]
      %v329 = vld [vmem:[%s1 + $0x20] sm:$0xff]
      %v330 = vld [vmem:[%s1 + $0x28] sm:$0xff]
      %v331 = vld [vmem:[%s1 + $0x30] sm:$0xff]
      %v332 = vld [vmem:[%s1 + $0x38] sm:$0xff]
      %v333 = vld [vmem:[%s1 + $0x40] sm:$0xff]
      %v334 = vld [vmem:[%s1 + $0x48] sm:$0xff]
      %v335 = vld [vmem:[%s1 + $0x50] sm:$0xff]
      %v336 = vld [vmem:[%s1 + $0x58] sm:$0xff]
      %v337 = vld [vmem:[%s1 + $0x60] sm:$0xff]
      %v338 = vld [vmem:[%s1 + $0x68] sm:$0xff]
      %v339 = vld [vmem:[%s1 + $0x70] sm:$0xff]
      %v340 = vld [vmem:[%s1 + $0x78] sm:$0xff]
      %v341 = vld [vmem:[%s1 + $0x80] sm:$0xff]
      %v342 = vld [vmem:[%s1 + $0x88] sm:$0xff]
      %v343 = vld [vmem:[%s1 + $0x90] sm:$0xff]
      %v344 = vld [vmem:[%s1 + $0x98] sm:$0xff]
      %v345 = vld [vmem:[%s1 + $0xa0] sm:$0xff]
      %v346 = vld [vmem:[%s1 + $0xa8] sm:$0xff]
      %v347 = vld [vmem:[%s1 + $0xb0] sm:$0xff]
      %v348 = vld [vmem:[%s1 + $0xb8] sm:$0xff]
      %v350 = vsel %vm228, %v293, 0
      %v353 = vsel %vm228, %v294, 0
      %v356 = vsel %vm228, %v295, 0
      %v359 = vsel %vm228, %v296, 0
      %v362 = vsel %vm228, %v297, 0
      %v365 = vsel %vm228, %v298, 0
      %v368 = vsel %vm228, %v299, 0
      %v371 = vsel %vm228, %v300, 0
      %v374 = vsel %vm228, %v301, 0
      %v377 = vsel %vm228, %v302, 0
      %v380 = vsel %vm228, %v303, 0
      %v383 = vsel %vm228, %v304, 0
      %v386 = vsel %vm228, %v305, 0
      %v389 = vsel %vm228, %v306, 0
      %v392 = vsel %vm228, %v307, 0
      %v395 = vsel %vm228, %v308, 0
      %v398 = vsel %vm228, %v309, 0
      %v401 = vsel %vm228, %v310, 0
      %v404 = vsel %vm228, %v311, 0
      %v407 = vsel %vm228, %v312, 0
      %v410 = vsel %vm228, %v313, 0
      %v413 = vsel %vm228, %v314, 0
      %v416 = vsel %vm228, %v315, 0
      %v419 = vsel %vm228, %v316, 0
      %v422 = vsel %vm228, %v317, 0
      %v425 = vsel %vm228, %v318, 0
      %v428 = vsel %vm228, %v319, 0
      %v431 = vsel %vm228, %v320, 0
      %v434 = vsel %vm228, %v321, 0
      %v437 = vsel %vm228, %v322, 0
      %v440 = vsel %vm228, %v323, 0
      %v443 = vsel %vm228, %v324, 0
      %445 = vmatprep.subr.mxu0 0.0
      %446 = vmatpush1.msra.mxu0 0.0
      %447 = vmatprep.subr.mxu0 0.0
      %448 = vmatpush1.msra.mxu0 0.0
      %449 = vmatprep.subr.mxu0 0.0
      %450 = vmatpush1.msra.mxu0 0.0
      %451 = vmatprep.subr.mxu0 0.0
      %452 = vmatpush1.msra.mxu0 0.0
      %453 = vmatprep.subr.mxu0 0.0
      %454 = vmatpush1.msra.mxu0 0.0
      %455 = vmatprep.subr.mxu0 0.0
      %456 = vmatpush1.msra.mxu0 0.0
      %457 = vmatprep.subr.mxu0 0.0
      %458 = vmatpush1.msra.mxu0 0.0
      %459 = vmatprep.subr.mxu0 0.0
      %460 = vmatpush1.msra.mxu0 0.0
      %461 = vmatprep.subr.mxu0 0.0
      %462 = vmatpush1.msra.mxu0 0.0
      %463 = vmatprep.subr.mxu0 0.0
      %464 = vmatpush1.msra.mxu0 0.0
      %465 = vmatprep.subr.mxu0 0.0
      %466 = vmatpush1.msra.mxu0 0.0
      %467 = vmatprep.subr.mxu0 0.0
      %468 = vmatpush1.msra.mxu0 0.0
      %469 = vmatprep.subr.mxu0 0.0
      %470 = vmatpush1.msra.mxu0 0.0
      %471 = vmatprep.subr.mxu0 0.0
      %472 = vmatpush1.msra.mxu0 0.0
      %473 = vmatprep.subr.mxu0 %v338
      %474 = vmatpush1.msra.mxu0 %v337
      %475 = vmatprep.subr.mxu0 %v326
      %476 = vmatpush1.msra.mxu0 %v325
      %477 = vmatprep.subr.mxu0 0.0
      %478 = vmatpush2.msra.mxu0 0.0
      %479 = vmatprep.subr.mxu0 0.0
      %480 = vmatpush2.msra.mxu0 0.0
      %481 = vmatprep.subr.mxu0 0.0
      %482 = vmatpush2.msra.mxu0 0.0
      %483 = vmatprep.subr.mxu0 0.0
      %484 = vmatpush2.msra.mxu0 0.0
      %485 = vmatprep.subr.mxu0 0.0
      %486 = vmatpush2.msra.mxu0 0.0
      %487 = vmatprep.subr.mxu0 0.0
      %488 = vmatpush2.msra.mxu0 0.0
      %489 = vmatprep.subr.mxu0 0.0
      %490 = vmatpush2.msra.mxu0 0.0
      %491 = vmatprep.subr.mxu0 0.0
      %492 = vmatpush2.msra.mxu0 0.0
      %493 = vmatprep.subr.mxu0 0.0
      %494 = vmatpush2.msra.mxu0 0.0
      %495 = vmatprep.subr.mxu0 0.0
      %496 = vmatpush2.msra.mxu0 0.0
      %497 = vmatprep.subr.mxu0 0.0
      %498 = vmatpush2.msra.mxu0 0.0
      %499 = vmatprep.subr.mxu0 0.0
      %500 = vmatpush2.msra.mxu0 0.0
      %501 = vmatprep.subr.mxu0 0.0
      %502 = vmatpush2.msra.mxu0 0.0
      %503 = vmatprep.subr.mxu0 0.0
      %504 = vmatpush2.msra.mxu0 0.0
      %505 = vmatprep.subr.mxu0 0.0
      %506 = vmatpush2.msra.mxu0 0.0
      %507 = vmatprep.subr.mxu0 0.0
      %508 = vmatpush2.msra.mxu0 0.0
      %509 = vmatprep.mubr.f32.mxu0 0.0
      %510 = vmatmul.mubr.f32.gmra.mxu0 %v350
      %v511 = vpop.f32.mrf.mxu0
      %v512 = vadd.f32 0.0, %v511
      %v513 = vpop.f32.mrf.mxu0
      %v514 = vadd.f32 0.0, %v513
      %515 = vmatprep.mubr.f32.mxu0 0.0
      %516 = vmatmul.mubr.f32.gmra.mxu0 %v353
      %v517 = vpop.f32.mrf.mxu0
      %v518 = vadd.f32 0.0, %v517
      %v519 = vpop.f32.mrf.mxu0
      %v520 = vadd.f32 0.0, %v519
      %521 = vmatprep.mubr.f32.mxu0 0.0
      %522 = vmatmul.mubr.f32.gmra.mxu0 %v356
      %v523 = vpop.f32.mrf.mxu0
      %v524 = vadd.f32 0.0, %v523
      %v525 = vpop.f32.mrf.mxu0
      %v526 = vadd.f32 0.0, %v525
      %527 = vmatprep.mubr.f32.mxu0 0.0
      %528 = vmatmul.mubr.f32.gmra.mxu0 %v359
      %v529 = vpop.f32.mrf.mxu0
      %v530 = vpop.f32.mrf.mxu0
      %531 = vmatprep.mubr.f32.mxu0 0.0
      %532 = vmatmul.mubr.f32.gmra.mxu0 %v362
      %v533 = vpop.f32.mrf.mxu0
      %v534 = vadd.f32 0.0, %v533
      %v535 = vpop.f32.mrf.mxu0
      %v536 = vadd.f32 0.0, %v535
      %537 = vmatprep.mubr.f32.mxu0 0.0
      %538 = vmatmul.mubr.f32.gmra.mxu0 %v365
      %v539 = vpop.f32.mrf.mxu0
      %v540 = vadd.f32 0.0, %v539
      %v541 = vpop.f32.mrf.mxu0
      %v542 = vadd.f32 0.0, %v541
      %543 = vmatprep.mubr.f32.mxu0 0.0
      %544 = vmatmul.mubr.f32.gmra.mxu0 %v368
      %v545 = vpop.f32.mrf.mxu0
      %v546 = vadd.f32 0.0, %v545
      %v547 = vpop.f32.mrf.mxu0
      %v548 = vadd.f32 0.0, %v547
      %549 = vmatprep.mubr.f32.mxu0 0.0
      %550 = vmatmul.mubr.f32.gmra.mxu0 %v371
      %v551 = vpop.f32.mrf.mxu0
      %v552 = vpop.f32.mrf.mxu0
      %553 = vmatprep.mubr.f32.mxu0 0.0
      %554 = vmatmul.mubr.f32.gmra.mxu0 %v374
      %v555 = vpop.f32.mrf.mxu0
      %v556 = vadd.f32 0.0, %v555
      %v557 = vpop.f32.mrf.mxu0
      %v558 = vadd.f32 0.0, %v557
      %559 = vmatprep.mubr.f32.mxu0 0.0
      %560 = vmatmul.mubr.f32.gmra.mxu0 %v377
      %v561 = vpop.f32.mrf.mxu0
      %v562 = vadd.f32 0.0, %v561
      %v563 = vpop.f32.mrf.mxu0
      %v564 = vadd.f32 0.0, %v563
      %565 = vmatprep.mubr.f32.mxu0 0.0
      %566 = vmatmul.mubr.f32.gmra.mxu0 %v380
      %v567 = vpop.f32.mrf.mxu0
      %v568 = vadd.f32 0.0, %v567
      %v569 = vpop.f32.mrf.mxu0
      %v570 = vadd.f32 0.0, %v569
      %571 = vmatprep.mubr.f32.mxu0 0.0
      %572 = vmatmul.mubr.f32.gmra.mxu0 %v383
      %v573 = vpop.f32.mrf.mxu0
      %v574 = vpop.f32.mrf.mxu0
      %575 = vmatprep.mubr.f32.mxu0 0.0
      %576 = vmatmul.mubr.f32.gmra.mxu0 %v386
      %v577 = vpop.f32.mrf.mxu0
      %v578 = vadd.f32 0.0, %v577
      %v579 = vpop.f32.mrf.mxu0
      %v580 = vadd.f32 0.0, %v579
      %581 = vmatprep.mubr.f32.mxu0 0.0
      %582 = vmatmul.mubr.f32.gmra.mxu0 %v389
      %v583 = vpop.f32.mrf.mxu0
      %v584 = vadd.f32 0.0, %v583
      %v585 = vpop.f32.mrf.mxu0
      %v586 = vadd.f32 0.0, %v585
      %587 = vmatprep.mubr.f32.mxu0 0.0
      %588 = vmatmul.mubr.f32.gmra.mxu0 %v392
      %v589 = vpop.f32.mrf.mxu0
      %v590 = vadd.f32 0.0, %v589
      %v591 = vpop.f32.mrf.mxu0
      %v592 = vadd.f32 0.0, %v591
      %593 = vmatprep.mubr.f32.mxu0 0.0
      %594 = vmatmul.mubr.f32.gmra.mxu0 %v395
      %v595 = vpop.f32.mrf.mxu0
      %v596 = vpop.f32.mrf.mxu0
      %597 = vmatprep.mubr.f32.mxu0 0.0
      %598 = vmatmul.mubr.f32.gmra.mxu0 %v398
      %v599 = vpop.f32.mrf.mxu0
      %v600 = vadd.f32 0.0, %v599
      %v601 = vpop.f32.mrf.mxu0
      %v602 = vadd.f32 0.0, %v601
      %603 = vmatprep.mubr.f32.mxu0 0.0
      %604 = vmatmul.mubr.f32.gmra.mxu0 %v401
      %v605 = vpop.f32.mrf.mxu0
      %v606 = vadd.f32 0.0, %v605
      %v607 = vpop.f32.mrf.mxu0
      %v608 = vadd.f32 0.0, %v607
      %609 = vmatprep.mubr.f32.mxu0 0.0
      %610 = vmatmul.mubr.f32.gmra.mxu0 %v404
      %v611 = vpop.f32.mrf.mxu0
      %v612 = vadd.f32 0.0, %v611
      %v613 = vpop.f32.mrf.mxu0
      %v614 = vadd.f32 0.0, %v613
      %615 = vmatprep.mubr.f32.mxu0 0.0
      %616 = vmatmul.mubr.f32.gmra.mxu0 %v407
      %v617 = vpop.f32.mrf.mxu0
      %v618 = vpop.f32.mrf.mxu0
      %619 = vmatprep.mubr.f32.mxu0 0.0
      %620 = vmatmul.mubr.f32.gmra.mxu0 %v410
      %v621 = vpop.f32.mrf.mxu0
      %v622 = vadd.f32 0.0, %v621
      %v623 = vpop.f32.mrf.mxu0
      %v624 = vadd.f32 0.0, %v623
      %625 = vmatprep.mubr.f32.mxu0 0.0
      %626 = vmatmul.mubr.f32.gmra.mxu0 %v413
      %v627 = vpop.f32.mrf.mxu0
      %v628 = vadd.f32 0.0, %v627
      %v629 = vpop.f32.mrf.mxu0
      %v630 = vadd.f32 0.0, %v629
      %631 = vmatprep.mubr.f32.mxu0 0.0
      %632 = vmatmul.mubr.f32.gmra.mxu0 %v416
      %v633 = vpop.f32.mrf.mxu0
      %v634 = vadd.f32 0.0, %v633
      %v635 = vpop.f32.mrf.mxu0
      %v636 = vadd.f32 0.0, %v635
      %637 = vmatprep.mubr.f32.mxu0 0.0
      %638 = vmatmul.mubr.f32.gmra.mxu0 %v419
      %v639 = vpop.f32.mrf.mxu0
      %v640 = vpop.f32.mrf.mxu0
      %641 = vmatprep.mubr.f32.mxu0 0.0
      %642 = vmatmul.mubr.f32.gmra.mxu0 %v422
      %v643 = vpop.f32.mrf.mxu0
      %v644 = vadd.f32 0.0, %v643
      %v645 = vpop.f32.mrf.mxu0
      %v646 = vadd.f32 0.0, %v645
      %647 = vmatprep.mubr.f32.mxu0 0.0
      %648 = vmatmul.mubr.f32.gmra.mxu0 %v425
      %v649 = vpop.f32.mrf.mxu0
      %v650 = vadd.f32 0.0, %v649
      %v651 = vpop.f32.mrf.mxu0
      %v652 = vadd.f32 0.0, %v651
      %653 = vmatprep.mubr.f32.mxu0 0.0
      %654 = vmatmul.mubr.f32.gmra.mxu0 %v428
      %v655 = vpop.f32.mrf.mxu0
      %v656 = vadd.f32 0.0, %v655
      %v657 = vpop.f32.mrf.mxu0
      %v658 = vadd.f32 0.0, %v657
      %659 = vmatprep.mubr.f32.mxu0 0.0
      %660 = vmatmul.mubr.f32.gmra.mxu0 %v431
      %v661 = vpop.f32.mrf.mxu0
      %v662 = vpop.f32.mrf.mxu0
      %663 = vmatprep.mubr.f32.mxu0 0.0
      %664 = vmatmul.mubr.f32.gmra.mxu0 %v434
      %v665 = vpop.f32.mrf.mxu0
      %v666 = vadd.f32 0.0, %v665
      %v667 = vpop.f32.mrf.mxu0
      %v668 = vadd.f32 0.0, %v667
      %669 = vmatprep.mubr.f32.mxu0 0.0
      %670 = vmatmul.mubr.f32.gmra.mxu0 %v437
      %v671 = vpop.f32.mrf.mxu0
      %v672 = vadd.f32 0.0, %v671
      %v673 = vpop.f32.mrf.mxu0
      %v674 = vadd.f32 0.0, %v673
      %675 = vmatprep.mubr.f32.mxu0 0.0
      %676 = vmatmul.mubr.f32.gmra.mxu0 %v440
      %v677 = vpop.f32.mrf.mxu0
      %v678 = vadd.f32 0.0, %v677
      %v679 = vpop.f32.mrf.mxu0
      %v680 = vadd.f32 0.0, %v679
      %681 = vmatprep.mubr.f32.mxu0 0.0
      %682 = vmatmul.mubr.f32.gmra.mxu0 %v443
      %v683 = vpop.f32.mrf.mxu0
      %v684 = vpop.f32.mrf.mxu0
      %685 = vdwg.mxu0
      %686 = vmatprep.subr.mxu0 0.0
      %687 = vmatpush1.msra.mxu0 0.0
      %688 = vmatprep.subr.mxu0 0.0
      %689 = vmatpush1.msra.mxu0 0.0
      %690 = vmatprep.subr.mxu0 0.0
      %691 = vmatpush1.msra.mxu0 0.0
      %692 = vmatprep.subr.mxu0 0.0
      %693 = vmatpush1.msra.mxu0 0.0
      %694 = vmatprep.subr.mxu0 0.0
      %695 = vmatpush1.msra.mxu0 0.0
      %696 = vmatprep.subr.mxu0 0.0
      %697 = vmatpush1.msra.mxu0 0.0
      %698 = vmatprep.subr.mxu0 0.0
      %699 = vmatpush1.msra.mxu0 0.0
      %700 = vmatprep.subr.mxu0 0.0
      %701 = vmatpush1.msra.mxu0 0.0
      %702 = vmatprep.subr.mxu0 0.0
      %703 = vmatpush1.msra.mxu0 0.0
      %704 = vmatprep.subr.mxu0 0.0
      %705 = vmatpush1.msra.mxu0 0.0
      %706 = vmatprep.subr.mxu0 0.0
      %707 = vmatpush1.msra.mxu0 0.0
      %708 = vmatprep.subr.mxu0 0.0
      %709 = vmatpush1.msra.mxu0 0.0
      %710 = vmatprep.subr.mxu0 0.0
      %711 = vmatpush1.msra.mxu0 0.0
      %712 = vmatprep.subr.mxu0 0.0
      %713 = vmatpush1.msra.mxu0 0.0
      %714 = vmatprep.subr.mxu0 %v340
      %715 = vmatpush1.msra.mxu0 %v339
      %716 = vmatprep.subr.mxu0 %v328
      %717 = vmatpush1.msra.mxu0 %v327
      %718 = vmatprep.subr.mxu0 0.0
      %719 = vmatpush2.msra.mxu0 0.0
      %720 = vmatprep.subr.mxu0 0.0
      %721 = vmatpush2.msra.mxu0 0.0
      %722 = vmatprep.subr.mxu0 0.0
      %723 = vmatpush2.msra.mxu0 0.0
      %724 = vmatprep.subr.mxu0 0.0
      %725 = vmatpush2.msra.mxu0 0.0
      %726 = vmatprep.subr.mxu0 0.0
      %727 = vmatpush2.msra.mxu0 0.0
      %728 = vmatprep.subr.mxu0 0.0
      %729 = vmatpush2.msra.mxu0 0.0
      %730 = vmatprep.subr.mxu0 0.0
      %731 = vmatpush2.msra.mxu0 0.0
      %732 = vmatprep.subr.mxu0 0.0
      %733 = vmatpush2.msra.mxu0 0.0
      %734 = vmatprep.subr.mxu0 0.0
      %735 = vmatpush2.msra.mxu0 0.0
      %736 = vmatprep.subr.mxu0 0.0
      %737 = vmatpush2.msra.mxu0 0.0
      %738 = vmatprep.subr.mxu0 0.0
      %739 = vmatpush2.msra.mxu0 0.0
      %740 = vmatprep.subr.mxu0 0.0
      %741 = vmatpush2.msra.mxu0 0.0
      %742 = vmatprep.subr.mxu0 0.0
      %743 = vmatpush2.msra.mxu0 0.0
      %744 = vmatprep.subr.mxu0 0.0
      %745 = vmatpush2.msra.mxu0 0.0
      %746 = vmatprep.subr.mxu0 0.0
      %747 = vmatpush2.msra.mxu0 0.0
      %748 = vmatprep.subr.mxu0 0.0
      %749 = vmatpush2.msra.mxu0 0.0
      %750 = vmatprep.mubr.f32.mxu0 0.0
      %751 = vmatmul.mubr.f32.gmra.mxu0 %v350
      %v752 = vpop.f32.mrf.mxu0
      %v753 = vadd.f32 0.0, %v752
      %v754 = vpop.f32.mrf.mxu0
      %v755 = vadd.f32 0.0, %v754
      %756 = vmatprep.mubr.f32.mxu0 0.0
      %757 = vmatmul.mubr.f32.gmra.mxu0 %v353
      %v758 = vpop.f32.mrf.mxu0
      %v759 = vadd.f32 0.0, %v758
      %v760 = vpop.f32.mrf.mxu0
      %v761 = vadd.f32 0.0, %v760
      %762 = vmatprep.mubr.f32.mxu0 0.0
      %763 = vmatmul.mubr.f32.gmra.mxu0 %v356
      %v764 = vpop.f32.mrf.mxu0
      %v765 = vadd.f32 0.0, %v764
      %v766 = vpop.f32.mrf.mxu0
      %v767 = vadd.f32 0.0, %v766
      %768 = vmatprep.mubr.f32.mxu0 0.0
      %769 = vmatmul.mubr.f32.gmra.mxu0 %v359
      %v770 = vpop.f32.mrf.mxu0
      %v771 = vpop.f32.mrf.mxu0
      %772 = vmatprep.mubr.f32.mxu0 0.0
      %773 = vmatmul.mubr.f32.gmra.mxu0 %v362
      %v774 = vpop.f32.mrf.mxu0
      %v775 = vadd.f32 0.0, %v774
      %v776 = vpop.f32.mrf.mxu0
      %v777 = vadd.f32 0.0, %v776
      %778 = vmatprep.mubr.f32.mxu0 0.0
      %779 = vmatmul.mubr.f32.gmra.mxu0 %v365
      %v780 = vpop.f32.mrf.mxu0
      %v781 = vadd.f32 0.0, %v780
      %v782 = vpop.f32.mrf.mxu0
      %v783 = vadd.f32 0.0, %v782
      %784 = vmatprep.mubr.f32.mxu0 0.0
      %785 = vmatmul.mubr.f32.gmra.mxu0 %v368
      %v786 = vpop.f32.mrf.mxu0
      %v787 = vadd.f32 0.0, %v786
      %v788 = vpop.f32.mrf.mxu0
      %v789 = vadd.f32 0.0, %v788
      %790 = vmatprep.mubr.f32.mxu0 0.0
      %791 = vmatmul.mubr.f32.gmra.mxu0 %v371
      %v792 = vpop.f32.mrf.mxu0
      %v793 = vpop.f32.mrf.mxu0
      %794 = vmatprep.mubr.f32.mxu0 0.0
      %795 = vmatmul.mubr.f32.gmra.mxu0 %v374
      %v796 = vpop.f32.mrf.mxu0
      %v797 = vadd.f32 0.0, %v796
      %v798 = vpop.f32.mrf.mxu0
      %v799 = vadd.f32 0.0, %v798
      %800 = vmatprep.mubr.f32.mxu0 0.0
      %801 = vmatmul.mubr.f32.gmra.mxu0 %v377
      %v802 = vpop.f32.mrf.mxu0
      %v803 = vadd.f32 0.0, %v802
      %v804 = vpop.f32.mrf.mxu0
      %v805 = vadd.f32 0.0, %v804
      %806 = vmatprep.mubr.f32.mxu0 0.0
      %807 = vmatmul.mubr.f32.gmra.mxu0 %v380
      %v808 = vpop.f32.mrf.mxu0
      %v809 = vadd.f32 0.0, %v808
      %v810 = vpop.f32.mrf.mxu0
      %v811 = vadd.f32 0.0, %v810
      %812 = vmatprep.mubr.f32.mxu0 0.0
      %813 = vmatmul.mubr.f32.gmra.mxu0 %v383
      %v814 = vpop.f32.mrf.mxu0
      %v815 = vpop.f32.mrf.mxu0
      %816 = vmatprep.mubr.f32.mxu0 0.0
      %817 = vmatmul.mubr.f32.gmra.mxu0 %v386
      %v818 = vpop.f32.mrf.mxu0
      %v819 = vadd.f32 0.0, %v818
      %v820 = vpop.f32.mrf.mxu0
      %v821 = vadd.f32 0.0, %v820
      %822 = vmatprep.mubr.f32.mxu0 0.0
      %823 = vmatmul.mubr.f32.gmra.mxu0 %v389
      %v824 = vpop.f32.mrf.mxu0
      %v825 = vadd.f32 0.0, %v824
      %v826 = vpop.f32.mrf.mxu0
      %v827 = vadd.f32 0.0, %v826
      %828 = vmatprep.mubr.f32.mxu0 0.0
      %829 = vmatmul.mubr.f32.gmra.mxu0 %v392
      %v830 = vpop.f32.mrf.mxu0
      %v831 = vadd.f32 0.0, %v830
      %v832 = vpop.f32.mrf.mxu0
      %v833 = vadd.f32 0.0, %v832
      %834 = vmatprep.mubr.f32.mxu0 0.0
      %835 = vmatmul.mubr.f32.gmra.mxu0 %v395
      %v836 = vpop.f32.mrf.mxu0
      %v837 = vpop.f32.mrf.mxu0
      %838 = vmatprep.mubr.f32.mxu0 0.0
      %839 = vmatmul.mubr.f32.gmra.mxu0 %v398
      %v840 = vpop.f32.mrf.mxu0
      %v841 = vadd.f32 0.0, %v840
      %v842 = vpop.f32.mrf.mxu0
      %v843 = vadd.f32 0.0, %v842
      %844 = vmatprep.mubr.f32.mxu0 0.0
      %845 = vmatmul.mubr.f32.gmra.mxu0 %v401
      %v846 = vpop.f32.mrf.mxu0
      %v847 = vadd.f32 0.0, %v846
      %v848 = vpop.f32.mrf.mxu0
      %v849 = vadd.f32 0.0, %v848
      %850 = vmatprep.mubr.f32.mxu0 0.0
      %851 = vmatmul.mubr.f32.gmra.mxu0 %v404
      %v852 = vpop.f32.mrf.mxu0
      %v853 = vadd.f32 0.0, %v852
      %v854 = vpop.f32.mrf.mxu0
      %v855 = vadd.f32 0.0, %v854
      %856 = vmatprep.mubr.f32.mxu0 0.0
      %857 = vmatmul.mubr.f32.gmra.mxu0 %v407
      %v858 = vpop.f32.mrf.mxu0
      %v859 = vpop.f32.mrf.mxu0
      %860 = vmatprep.mubr.f32.mxu0 0.0
      %861 = vmatmul.mubr.f32.gmra.mxu0 %v410
      %v862 = vpop.f32.mrf.mxu0
      %v863 = vadd.f32 0.0, %v862
      %v864 = vpop.f32.mrf.mxu0
      %v865 = vadd.f32 0.0, %v864
      %866 = vmatprep.mubr.f32.mxu0 0.0
      %867 = vmatmul.mubr.f32.gmra.mxu0 %v413
      %v868 = vpop.f32.mrf.mxu0
      %v869 = vadd.f32 0.0, %v868
      %v870 = vpop.f32.mrf.mxu0
      %v871 = vadd.f32 0.0, %v870
      %872 = vmatprep.mubr.f32.mxu0 0.0
      %873 = vmatmul.mubr.f32.gmra.mxu0 %v416
      %v874 = vpop.f32.mrf.mxu0
      %v875 = vadd.f32 0.0, %v874
      %v876 = vpop.f32.mrf.mxu0
      %v877 = vadd.f32 0.0, %v876
      %878 = vmatprep.mubr.f32.mxu0 0.0
      %879 = vmatmul.mubr.f32.gmra.mxu0 %v419
      %v880 = vpop.f32.mrf.mxu0
      %v881 = vpop.f32.mrf.mxu0
      %882 = vmatprep.mubr.f32.mxu0 0.0
      %883 = vmatmul.mubr.f32.gmra.mxu0 %v422
      %v884 = vpop.f32.mrf.mxu0
      %v885 = vadd.f32 0.0, %v884
      %v886 = vpop.f32.mrf.mxu0
      %v887 = vadd.f32 0.0, %v886
      %888 = vmatprep.mubr.f32.mxu0 0.0
      %889 = vmatmul.mubr.f32.gmra.mxu0 %v425
      %v890 = vpop.f32.mrf.mxu0
      %v891 = vadd.f32 0.0, %v890
      %v892 = vpop.f32.mrf.mxu0
      %v893 = vadd.f32 0.0, %v892
      %894 = vmatprep.mubr.f32.mxu0 0.0
      %895 = vmatmul.mubr.f32.gmra.mxu0 %v428
      %v896 = vpop.f32.mrf.mxu0
      %v897 = vadd.f32 0.0, %v896
      %v898 = vpop.f32.mrf.mxu0
      %v899 = vadd.f32 0.0, %v898
      %900 = vmatprep.mubr.f32.mxu0 0.0
      %901 = vmatmul.mubr.f32.gmra.mxu0 %v431
      %v902 = vpop.f32.mrf.mxu0
      %v903 = vpop.f32.mrf.mxu0
      %904 = vmatprep.mubr.f32.mxu0 0.0
      %905 = vmatmul.mubr.f32.gmra.mxu0 %v434
      %v906 = vpop.f32.mrf.mxu0
      %v907 = vadd.f32 0.0, %v906
      %v908 = vpop.f32.mrf.mxu0
      %v909 = vadd.f32 0.0, %v908
      %910 = vmatprep.mubr.f32.mxu0 0.0
      %911 = vmatmul.mubr.f32.gmra.mxu0 %v437
      %v912 = vpop.f32.mrf.mxu0
      %v913 = vadd.f32 0.0, %v912
      %v914 = vpop.f32.mrf.mxu0
      %v915 = vadd.f32 0.0, %v914
      %916 = vmatprep.mubr.f32.mxu0 0.0
      %917 = vmatmul.mubr.f32.gmra.mxu0 %v440
      %v918 = vpop.f32.mrf.mxu0
      %v919 = vadd.f32 0.0, %v918
      %v920 = vpop.f32.mrf.mxu0
      %v921 = vadd.f32 0.0, %v920
      %922 = vmatprep.mubr.f32.mxu0 0.0
      %923 = vmatmul.mubr.f32.gmra.mxu0 %v443
      %v924 = vpop.f32.mrf.mxu0
      %v925 = vpop.f32.mrf.mxu0
      %926 = vdwg.mxu0
      %927 = vmatprep.subr.mxu0 0.0
      %928 = vmatpush1.msra.mxu0 0.0
      %929 = vmatprep.subr.mxu0 0.0
      %930 = vmatpush1.msra.mxu0 0.0
      %931 = vmatprep.subr.mxu0 0.0
      %932 = vmatpush1.msra.mxu0 0.0
      %933 = vmatprep.subr.mxu0 0.0
      %934 = vmatpush1.msra.mxu0 0.0
      %935 = vmatprep.subr.mxu0 0.0
      %936 = vmatpush1.msra.mxu0 0.0
      %937 = vmatprep.subr.mxu0 0.0
      %938 = vmatpush1.msra.mxu0 0.0
      %939 = vmatprep.subr.mxu0 0.0
      %940 = vmatpush1.msra.mxu0 0.0
      %941 = vmatprep.subr.mxu0 0.0
      %942 = vmatpush1.msra.mxu0 0.0
      %943 = vmatprep.subr.mxu0 0.0
      %944 = vmatpush1.msra.mxu0 0.0
      %945 = vmatprep.subr.mxu0 0.0
      %946 = vmatpush1.msra.mxu0 0.0
      %947 = vmatprep.subr.mxu0 0.0
      %948 = vmatpush1.msra.mxu0 0.0
      %949 = vmatprep.subr.mxu0 0.0
      %950 = vmatpush1.msra.mxu0 0.0
      %951 = vmatprep.subr.mxu0 0.0
      %952 = vmatpush1.msra.mxu0 0.0
      %953 = vmatprep.subr.mxu0 0.0
      %954 = vmatpush1.msra.mxu0 0.0
      %955 = vmatprep.subr.mxu0 %v342
      %956 = vmatpush1.msra.mxu0 %v341
      %957 = vmatprep.subr.mxu0 %v330
      %958 = vmatpush1.msra.mxu0 %v329
      %959 = vmatprep.subr.mxu0 0.0
      %960 = vmatpush2.msra.mxu0 0.0
      %961 = vmatprep.subr.mxu0 0.0
      %962 = vmatpush2.msra.mxu0 0.0
      %963 = vmatprep.subr.mxu0 0.0
      %964 = vmatpush2.msra.mxu0 0.0
      %965 = vmatprep.subr.mxu0 0.0
      %966 = vmatpush2.msra.mxu0 0.0
      %967 = vmatprep.subr.mxu0 0.0
      %968 = vmatpush2.msra.mxu0 0.0
      %969 = vmatprep.subr.mxu0 0.0
      %970 = vmatpush2.msra.mxu0 0.0
      %971 = vmatprep.subr.mxu0 0.0
      %972 = vmatpush2.msra.mxu0 0.0
      %973 = vmatprep.subr.mxu0 0.0
      %974 = vmatpush2.msra.mxu0 0.0
      %975 = vmatprep.subr.mxu0 0.0
      %976 = vmatpush2.msra.mxu0 0.0
      %977 = vmatprep.subr.mxu0 0.0
      %978 = vmatpush2.msra.mxu0 0.0
      %979 = vmatprep.subr.mxu0 0.0
      %980 = vmatpush2.msra.mxu0 0.0
      %981 = vmatprep.subr.mxu0 0.0
      %982 = vmatpush2.msra.mxu0 0.0
      %983 = vmatprep.subr.mxu0 0.0
      %984 = vmatpush2.msra.mxu0 0.0
      %985 = vmatprep.subr.mxu0 0.0
      %986 = vmatpush2.msra.mxu0 0.0
      %987 = vmatprep.subr.mxu0 0.0
      %988 = vmatpush2.msra.mxu0 0.0
      %989 = vmatprep.subr.mxu0 0.0
      %990 = vmatpush2.msra.mxu0 0.0
      %991 = vmatprep.mubr.f32.mxu0 0.0
      %992 = vmatmul.mubr.f32.gmra.mxu0 %v350
      %v993 = vpop.f32.mrf.mxu0
      %v994 = vadd.f32 0.0, %v993
      %v995 = vpop.f32.mrf.mxu0
      %v996 = vadd.f32 0.0, %v995
      %997 = vmatprep.mubr.f32.mxu0 0.0
      %998 = vmatmul.mubr.f32.gmra.mxu0 %v353
      %v999 = vpop.f32.mrf.mxu0
      %v1000 = vadd.f32 0.0, %v999
      %v1001 = vpop.f32.mrf.mxu0
      %v1002 = vadd.f32 0.0, %v1001
      %1003 = vmatprep.mubr.f32.mxu0 0.0
      %1004 = vmatmul.mubr.f32.gmra.mxu0 %v356
      %v1005 = vpop.f32.mrf.mxu0
      %v1006 = vadd.f32 0.0, %v1005
      %v1007 = vpop.f32.mrf.mxu0
      %v1008 = vadd.f32 0.0, %v1007
      %1009 = vmatprep.mubr.f32.mxu0 0.0
      %1010 = vmatmul.mubr.f32.gmra.mxu0 %v359
      %v1011 = vpop.f32.mrf.mxu0
      %v1012 = vpop.f32.mrf.mxu0
      %1013 = vmatprep.mubr.f32.mxu0 0.0
      %1014 = vmatmul.mubr.f32.gmra.mxu0 %v362
      %v1015 = vpop.f32.mrf.mxu0
      %v1016 = vadd.f32 0.0, %v1015
      %v1017 = vpop.f32.mrf.mxu0
      %v1018 = vadd.f32 0.0, %v1017
      %1019 = vmatprep.mubr.f32.mxu0 0.0
      %1020 = vmatmul.mubr.f32.gmra.mxu0 %v365
      %v1021 = vpop.f32.mrf.mxu0
      %v1022 = vadd.f32 0.0, %v1021
      %v1023 = vpop.f32.mrf.mxu0
      %v1024 = vadd.f32 0.0, %v1023
      %1025 = vmatprep.mubr.f32.mxu0 0.0
      %1026 = vmatmul.mubr.f32.gmra.mxu0 %v368
      %v1027 = vpop.f32.mrf.mxu0
      %v1028 = vadd.f32 0.0, %v1027
      %v1029 = vpop.f32.mrf.mxu0
      %v1030 = vadd.f32 0.0, %v1029
      %1031 = vmatprep.mubr.f32.mxu0 0.0
      %1032 = vmatmul.mubr.f32.gmra.mxu0 %v371
      %v1033 = vpop.f32.mrf.mxu0
      %v1034 = vpop.f32.mrf.mxu0
      %1035 = vmatprep.mubr.f32.mxu0 0.0
      %1036 = vmatmul.mubr.f32.gmra.mxu0 %v374
      %v1037 = vpop.f32.mrf.mxu0
      %v1038 = vadd.f32 0.0, %v1037
      %v1039 = vpop.f32.mrf.mxu0
      %v1040 = vadd.f32 0.0, %v1039
      %1041 = vmatprep.mubr.f32.mxu0 0.0
      %1042 = vmatmul.mubr.f32.gmra.mxu0 %v377
      %v1043 = vpop.f32.mrf.mxu0
      %v1044 = vadd.f32 0.0, %v1043
      %v1045 = vpop.f32.mrf.mxu0
      %v1046 = vadd.f32 0.0, %v1045
      %1047 = vmatprep.mubr.f32.mxu0 0.0
      %1048 = vmatmul.mubr.f32.gmra.mxu0 %v380
      %v1049 = vpop.f32.mrf.mxu0
      %v1050 = vadd.f32 0.0, %v1049
      %v1051 = vpop.f32.mrf.mxu0
      %v1052 = vadd.f32 0.0, %v1051
      %1053 = vmatprep.mubr.f32.mxu0 0.0
      %1054 = vmatmul.mubr.f32.gmra.mxu0 %v383
      %v1055 = vpop.f32.mrf.mxu0
      %v1056 = vpop.f32.mrf.mxu0
      %1057 = vmatprep.mubr.f32.mxu0 0.0
      %1058 = vmatmul.mubr.f32.gmra.mxu0 %v386
      %v1059 = vpop.f32.mrf.mxu0
      %v1060 = vadd.f32 0.0, %v1059
      %v1061 = vpop.f32.mrf.mxu0
      %v1062 = vadd.f32 0.0, %v1061
      %1063 = vmatprep.mubr.f32.mxu0 0.0
      %1064 = vmatmul.mubr.f32.gmra.mxu0 %v389
      %v1065 = vpop.f32.mrf.mxu0
      %v1066 = vadd.f32 0.0, %v1065
      %v1067 = vpop.f32.mrf.mxu0
      %v1068 = vadd.f32 0.0, %v1067
      %1069 = vmatprep.mubr.f32.mxu0 0.0
      %1070 = vmatmul.mubr.f32.gmra.mxu0 %v392
      %v1071 = vpop.f32.mrf.mxu0
      %v1072 = vadd.f32 0.0, %v1071
      %v1073 = vpop.f32.mrf.mxu0
      %v1074 = vadd.f32 0.0, %v1073
      %1075 = vmatprep.mubr.f32.mxu0 0.0
      %1076 = vmatmul.mubr.f32.gmra.mxu0 %v395
      %v1077 = vpop.f32.mrf.mxu0
      %v1078 = vpop.f32.mrf.mxu0
      %1079 = vmatprep.mubr.f32.mxu0 0.0
      %1080 = vmatmul.mubr.f32.gmra.mxu0 %v398
      %v1081 = vpop.f32.mrf.mxu0
      %v1082 = vadd.f32 0.0, %v1081
      %v1083 = vpop.f32.mrf.mxu0
      %v1084 = vadd.f32 0.0, %v1083
      %1085 = vmatprep.mubr.f32.mxu0 0.0
      %1086 = vmatmul.mubr.f32.gmra.mxu0 %v401
      %v1087 = vpop.f32.mrf.mxu0
      %v1088 = vadd.f32 0.0, %v1087
      %v1089 = vpop.f32.mrf.mxu0
      %v1090 = vadd.f32 0.0, %v1089
      %1091 = vmatprep.mubr.f32.mxu0 0.0
      %1092 = vmatmul.mubr.f32.gmra.mxu0 %v404
      %v1093 = vpop.f32.mrf.mxu0
      %v1094 = vadd.f32 0.0, %v1093
      %v1095 = vpop.f32.mrf.mxu0
      %v1096 = vadd.f32 0.0, %v1095
      %1097 = vmatprep.mubr.f32.mxu0 0.0
      %1098 = vmatmul.mubr.f32.gmra.mxu0 %v407
      %v1099 = vpop.f32.mrf.mxu0
      %v1100 = vpop.f32.mrf.mxu0
      %1101 = vmatprep.mubr.f32.mxu0 0.0
      %1102 = vmatmul.mubr.f32.gmra.mxu0 %v410
      %v1103 = vpop.f32.mrf.mxu0
      %v1104 = vadd.f32 0.0, %v1103
      %v1105 = vpop.f32.mrf.mxu0
      %v1106 = vadd.f32 0.0, %v1105
      %1107 = vmatprep.mubr.f32.mxu0 0.0
      %1108 = vmatmul.mubr.f32.gmra.mxu0 %v413
      %v1109 = vpop.f32.mrf.mxu0
      %v1110 = vadd.f32 0.0, %v1109
      %v1111 = vpop.f32.mrf.mxu0
      %v1112 = vadd.f32 0.0, %v1111
      %1113 = vmatprep.mubr.f32.mxu0 0.0
      %1114 = vmatmul.mubr.f32.gmra.mxu0 %v416
      %v1115 = vpop.f32.mrf.mxu0
      %v1116 = vadd.f32 0.0, %v1115
      %v1117 = vpop.f32.mrf.mxu0
      %v1118 = vadd.f32 0.0, %v1117
      %1119 = vmatprep.mubr.f32.mxu0 0.0
      %1120 = vmatmul.mubr.f32.gmra.mxu0 %v419
      %v1121 = vpop.f32.mrf.mxu0
      %v1122 = vpop.f32.mrf.mxu0
      %1123 = vmatprep.mubr.f32.mxu0 0.0
      %1124 = vmatmul.mubr.f32.gmra.mxu0 %v422
      %v1125 = vpop.f32.mrf.mxu0
      %v1126 = vadd.f32 0.0, %v1125
      %v1127 = vpop.f32.mrf.mxu0
      %v1128 = vadd.f32 0.0, %v1127
      %1129 = vmatprep.mubr.f32.mxu0 0.0
      %1130 = vmatmul.mubr.f32.gmra.mxu0 %v425
      %v1131 = vpop.f32.mrf.mxu0
      %v1132 = vadd.f32 0.0, %v1131
      %v1133 = vpop.f32.mrf.mxu0
      %v1134 = vadd.f32 0.0, %v1133
      %1135 = vmatprep.mubr.f32.mxu0 0.0
      %1136 = vmatmul.mubr.f32.gmra.mxu0 %v428
      %v1137 = vpop.f32.mrf.mxu0
      %v1138 = vadd.f32 0.0, %v1137
      %v1139 = vpop.f32.mrf.mxu0
      %v1140 = vadd.f32 0.0, %v1139
      %1141 = vmatprep.mubr.f32.mxu0 0.0
      %1142 = vmatmul.mubr.f32.gmra.mxu0 %v431
      %v1143 = vpop.f32.mrf.mxu0
      %v1144 = vpop.f32.mrf.mxu0
      %1145 = vmatprep.mubr.f32.mxu0 0.0
      %1146 = vmatmul.mubr.f32.gmra.mxu0 %v434
      %v1147 = vpop.f32.mrf.mxu0
      %v1148 = vadd.f32 0.0, %v1147
      %v1149 = vpop.f32.mrf.mxu0
      %v1150 = vadd.f32 0.0, %v1149
      %1151 = vmatprep.mubr.f32.mxu0 0.0
      %1152 = vmatmul.mubr.f32.gmra.mxu0 %v437
      %v1153 = vpop.f32.mrf.mxu0
      %v1154 = vadd.f32 0.0, %v1153
      %v1155 = vpop.f32.mrf.mxu0
      %v1156 = vadd.f32 0.0, %v1155
      %1157 = vmatprep.mubr.f32.mxu0 0.0
      %1158 = vmatmul.mubr.f32.gmra.mxu0 %v440
      %v1159 = vpop.f32.mrf.mxu0
      %v1160 = vadd.f32 0.0, %v1159
      %v1161 = vpop.f32.mrf.mxu0
      %v1162 = vadd.f32 0.0, %v1161
      %1163 = vmatprep.mubr.f32.mxu0 0.0
      %1164 = vmatmul.mubr.f32.gmra.mxu0 %v443
      %v1165 = vpop.f32.mrf.mxu0
      %v1166 = vpop.f32.mrf.mxu0
      %1167 = vdwg.mxu0
      %1168 = vmatprep.subr.mxu0 0.0
      %1169 = vmatpush1.msra.mxu0 0.0
      %1170 = vmatprep.subr.mxu0 0.0
      %1171 = vmatpush1.msra.mxu0 0.0
      %1172 = vmatprep.subr.mxu0 0.0
      %1173 = vmatpush1.msra.mxu0 0.0
      %1174 = vmatprep.subr.mxu0 0.0
      %1175 = vmatpush1.msra.mxu0 0.0
      %1176 = vmatprep.subr.mxu0 0.0
      %1177 = vmatpush1.msra.mxu0 0.0
      %1178 = vmatprep.subr.mxu0 0.0
      %1179 = vmatpush1.msra.mxu0 0.0
      %1180 = vmatprep.subr.mxu0 0.0
      %1181 = vmatpush1.msra.mxu0 0.0
      %1182 = vmatprep.subr.mxu0 0.0
      %1183 = vmatpush1.msra.mxu0 0.0
      %1184 = vmatprep.subr.mxu0 0.0
      %1185 = vmatpush1.msra.mxu0 0.0
      %1186 = vmatprep.subr.mxu0 0.0
      %1187 = vmatpush1.msra.mxu0 0.0
      %1188 = vmatprep.subr.mxu0 0.0
      %1189 = vmatpush1.msra.mxu0 0.0
      %1190 = vmatprep.subr.mxu0 0.0
      %1191 = vmatpush1.msra.mxu0 0.0
      %1192 = vmatprep.subr.mxu0 0.0
      %1193 = vmatpush1.msra.mxu0 0.0
      %1194 = vmatprep.subr.mxu0 0.0
      %1195 = vmatpush1.msra.mxu0 0.0
      %1196 = vmatprep.subr.mxu0 %v344
      %1197 = vmatpush1.msra.mxu0 %v343
      %1198 = vmatprep.subr.mxu0 %v332
      %1199 = vmatpush1.msra.mxu0 %v331
      %1200 = vmatprep.subr.mxu0 0.0
      %1201 = vmatpush2.msra.mxu0 0.0
      %1202 = vmatprep.subr.mxu0 0.0
      %1203 = vmatpush2.msra.mxu0 0.0
      %1204 = vmatprep.subr.mxu0 0.0
      %1205 = vmatpush2.msra.mxu0 0.0
      %1206 = vmatprep.subr.mxu0 0.0
      %1207 = vmatpush2.msra.mxu0 0.0
      %1208 = vmatprep.subr.mxu0 0.0
      %1209 = vmatpush2.msra.mxu0 0.0
      %1210 = vmatprep.subr.mxu0 0.0
      %1211 = vmatpush2.msra.mxu0 0.0
      %1212 = vmatprep.subr.mxu0 0.0
      %1213 = vmatpush2.msra.mxu0 0.0
      %1214 = vmatprep.subr.mxu0 0.0
      %1215 = vmatpush2.msra.mxu0 0.0
      %1216 = vmatprep.subr.mxu0 0.0
      %1217 = vmatpush2.msra.mxu0 0.0
      %1218 = vmatprep.subr.mxu0 0.0
      %1219 = vmatpush2.msra.mxu0 0.0
      %1220 = vmatprep.subr.mxu0 0.0
      %1221 = vmatpush2.msra.mxu0 0.0
      %1222 = vmatprep.subr.mxu0 0.0
      %1223 = vmatpush2.msra.mxu0 0.0
      %1224 = vmatprep.subr.mxu0 0.0
      %1225 = vmatpush2.msra.mxu0 0.0
      %1226 = vmatprep.subr.mxu0 0.0
      %1227 = vmatpush2.msra.mxu0 0.0
      %1228 = vmatprep.subr.mxu0 0.0
      %1229 = vmatpush2.msra.mxu0 0.0
      %1230 = vmatprep.subr.mxu0 0.0
      %1231 = vmatpush2.msra.mxu0 0.0
      %1232 = vmatprep.mubr.f32.mxu0 0.0
      %1233 = vmatmul.mubr.f32.gmra.mxu0 %v350
      %v1234 = vpop.f32.mrf.mxu0
      %v1235 = vadd.f32 0.0, %v1234
      %v1236 = vpop.f32.mrf.mxu0
      %v1237 = vadd.f32 0.0, %v1236
      %1238 = vmatprep.mubr.f32.mxu0 0.0
      %1239 = vmatmul.mubr.f32.gmra.mxu0 %v353
      %v1240 = vpop.f32.mrf.mxu0
      %v1241 = vadd.f32 0.0, %v1240
      %v1242 = vpop.f32.mrf.mxu0
      %v1243 = vadd.f32 0.0, %v1242
      %1244 = vmatprep.mubr.f32.mxu0 0.0
      %1245 = vmatmul.mubr.f32.gmra.mxu0 %v356
      %v1246 = vpop.f32.mrf.mxu0
      %v1247 = vadd.f32 0.0, %v1246
      %v1248 = vpop.f32.mrf.mxu0
      %v1249 = vadd.f32 0.0, %v1248
      %1250 = vmatprep.mubr.f32.mxu0 0.0
      %1251 = vmatmul.mubr.f32.gmra.mxu0 %v359
      %v1252 = vpop.f32.mrf.mxu0
      %v1253 = vadd.f32 0.0, %v1252
      %v1254 = vpop.f32.mrf.mxu0
      %1255 = vmatprep.mubr.f32.mxu0 0.0
      %1256 = vmatmul.mubr.f32.gmra.mxu0 %v362
      %v1257 = vpop.f32.mrf.mxu0
      %v1258 = vadd.f32 0.0, %v1257
      %v1259 = vpop.f32.mrf.mxu0
      %v1260 = vadd.f32 0.0, %v1259
      %1261 = vmatprep.mubr.f32.mxu0 0.0
      %1262 = vmatmul.mubr.f32.gmra.mxu0 %v365
      %v1263 = vpop.f32.mrf.mxu0
      %v1264 = vadd.f32 0.0, %v1263
      %v1265 = vpop.f32.mrf.mxu0
      %v1266 = vadd.f32 0.0, %v1265
      %1267 = vmatprep.mubr.f32.mxu0 0.0
      %1268 = vmatmul.mubr.f32.gmra.mxu0 %v368
      %v1269 = vpop.f32.mrf.mxu0
      %v1270 = vadd.f32 0.0, %v1269
      %v1271 = vpop.f32.mrf.mxu0
      %v1272 = vadd.f32 0.0, %v1271
      %1273 = vmatprep.mubr.f32.mxu0 0.0
      %1274 = vmatmul.mubr.f32.gmra.mxu0 %v371
      %v1275 = vpop.f32.mrf.mxu0
      %v1276 = vadd.f32 0.0, %v1275
      %v1277 = vpop.f32.mrf.mxu0
      %1278 = vmatprep.mubr.f32.mxu0 0.0
      %1279 = vmatmul.mubr.f32.gmra.mxu0 %v374
      %v1280 = vpop.f32.mrf.mxu0
      %v1281 = vadd.f32 0.0, %v1280
      %v1282 = vpop.f32.mrf.mxu0
      %v1283 = vadd.f32 0.0, %v1282
      %1284 = vmatprep.mubr.f32.mxu0 0.0
      %1285 = vmatmul.mubr.f32.gmra.mxu0 %v377
      %v1286 = vpop.f32.mrf.mxu0
      %v1287 = vadd.f32 0.0, %v1286
      %v1288 = vpop.f32.mrf.mxu0
      %v1289 = vadd.f32 0.0, %v1288
      %1290 = vmatprep.mubr.f32.mxu0 0.0
      %1291 = vmatmul.mubr.f32.gmra.mxu0 %v380
      %v1292 = vpop.f32.mrf.mxu0
      %v1293 = vadd.f32 0.0, %v1292
      %v1294 = vpop.f32.mrf.mxu0
      %v1295 = vadd.f32 0.0, %v1294
      %1296 = vmatprep.mubr.f32.mxu0 0.0
      %1297 = vmatmul.mubr.f32.gmra.mxu0 %v383
      %v1298 = vpop.f32.mrf.mxu0
      %v1299 = vadd.f32 0.0, %v1298
      %v1300 = vpop.f32.mrf.mxu0
      %1301 = vmatprep.mubr.f32.mxu0 0.0
      %1302 = vmatmul.mubr.f32.gmra.mxu0 %v386
      %v1303 = vpop.f32.mrf.mxu0
      %v1304 = vadd.f32 0.0, %v1303
      %v1305 = vpop.f32.mrf.mxu0
      %v1306 = vadd.f32 0.0, %v1305
      %1307 = vmatprep.mubr.f32.mxu0 0.0
      %1308 = vmatmul.mubr.f32.gmra.mxu0 %v389
      %v1309 = vpop.f32.mrf.mxu0
      %v1310 = vadd.f32 0.0, %v1309
      %v1311 = vpop.f32.mrf.mxu0
      %v1312 = vadd.f32 0.0, %v1311
      %1313 = vmatprep.mubr.f32.mxu0 0.0
      %1314 = vmatmul.mubr.f32.gmra.mxu0 %v392
      %v1315 = vpop.f32.mrf.mxu0
      %v1316 = vadd.f32 0.0, %v1315
      %v1317 = vpop.f32.mrf.mxu0
      %v1318 = vadd.f32 0.0, %v1317
      %1319 = vmatprep.mubr.f32.mxu0 0.0
      %1320 = vmatmul.mubr.f32.gmra.mxu0 %v395
      %v1321 = vpop.f32.mrf.mxu0
      %v1322 = vadd.f32 0.0, %v1321
      %v1323 = vpop.f32.mrf.mxu0
      %1324 = vmatprep.mubr.f32.mxu0 0.0
      %1325 = vmatmul.mubr.f32.gmra.mxu0 %v398
      %v1326 = vpop.f32.mrf.mxu0
      %v1327 = vadd.f32 0.0, %v1326
      %v1328 = vpop.f32.mrf.mxu0
      %v1329 = vadd.f32 0.0, %v1328
      %1330 = vmatprep.mubr.f32.mxu0 0.0
      %1331 = vmatmul.mubr.f32.gmra.mxu0 %v401
      %v1332 = vpop.f32.mrf.mxu0
      %v1333 = vadd.f32 0.0, %v1332
      %v1334 = vpop.f32.mrf.mxu0
      %v1335 = vadd.f32 0.0, %v1334
      %1336 = vmatprep.mubr.f32.mxu0 0.0
      %1337 = vmatmul.mubr.f32.gmra.mxu0 %v404
      %v1338 = vpop.f32.mrf.mxu0
      %v1339 = vadd.f32 0.0, %v1338
      %v1340 = vpop.f32.mrf.mxu0
      %v1341 = vadd.f32 0.0, %v1340
      %1342 = vmatprep.mubr.f32.mxu0 0.0
      %1343 = vmatmul.mubr.f32.gmra.mxu0 %v407
      %v1344 = vpop.f32.mrf.mxu0
      %v1345 = vadd.f32 0.0, %v1344
      %v1346 = vpop.f32.mrf.mxu0
      %1347 = vmatprep.mubr.f32.mxu0 0.0
      %1348 = vmatmul.mubr.f32.gmra.mxu0 %v410
      %v1349 = vpop.f32.mrf.mxu0
      %v1350 = vadd.f32 0.0, %v1349
      %v1351 = vpop.f32.mrf.mxu0
      %v1352 = vadd.f32 0.0, %v1351
      %1353 = vmatprep.mubr.f32.mxu0 0.0
      %1354 = vmatmul.mubr.f32.gmra.mxu0 %v413
      %v1355 = vpop.f32.mrf.mxu0
      %v1356 = vadd.f32 0.0, %v1355
      %v1357 = vpop.f32.mrf.mxu0
      %v1358 = vadd.f32 0.0, %v1357
      %1359 = vmatprep.mubr.f32.mxu0 0.0
      %1360 = vmatmul.mubr.f32.gmra.mxu0 %v416
      %v1361 = vpop.f32.mrf.mxu0
      %v1362 = vadd.f32 0.0, %v1361
      %v1363 = vpop.f32.mrf.mxu0
      %v1364 = vadd.f32 0.0, %v1363
      %1365 = vmatprep.mubr.f32.mxu0 0.0
      %1366 = vmatmul.mubr.f32.gmra.mxu0 %v419
      %v1367 = vpop.f32.mrf.mxu0
      %v1368 = vadd.f32 0.0, %v1367
      %v1369 = vpop.f32.mrf.mxu0
      %1370 = vmatprep.mubr.f32.mxu0 0.0
      %1371 = vmatmul.mubr.f32.gmra.mxu0 %v422
      %v1372 = vpop.f32.mrf.mxu0
      %v1373 = vadd.f32 0.0, %v1372
      %v1374 = vpop.f32.mrf.mxu0
      %v1375 = vadd.f32 0.0, %v1374
      %1376 = vmatprep.mubr.f32.mxu0 0.0
      %1377 = vmatmul.mubr.f32.gmra.mxu0 %v425
      %v1378 = vpop.f32.mrf.mxu0
      %v1379 = vadd.f32 0.0, %v1378
      %v1380 = vpop.f32.mrf.mxu0
      %v1381 = vadd.f32 0.0, %v1380
      %1382 = vmatprep.mubr.f32.mxu0 0.0
      %1383 = vmatmul.mubr.f32.gmra.mxu0 %v428
      %v1384 = vpop.f32.mrf.mxu0
      %v1385 = vadd.f32 0.0, %v1384
      %v1386 = vpop.f32.mrf.mxu0
      %v1387 = vadd.f32 0.0, %v1386
      %1388 = vmatprep.mubr.f32.mxu0 0.0
      %1389 = vmatmul.mubr.f32.gmra.mxu0 %v431
      %v1390 = vpop.f32.mrf.mxu0
      %v1391 = vadd.f32 0.0, %v1390
      %v1392 = vpop.f32.mrf.mxu0
      %1393 = vmatprep.mubr.f32.mxu0 0.0
      %1394 = vmatmul.mubr.f32.gmra.mxu0 %v434
      %v1395 = vpop.f32.mrf.mxu0
      %v1396 = vadd.f32 0.0, %v1395
      %v1397 = vpop.f32.mrf.mxu0
      %v1398 = vadd.f32 0.0, %v1397
      %1399 = vmatprep.mubr.f32.mxu0 0.0
      %1400 = vmatmul.mubr.f32.gmra.mxu0 %v437
      %v1401 = vpop.f32.mrf.mxu0
      %v1402 = vadd.f32 0.0, %v1401
      %v1403 = vpop.f32.mrf.mxu0
      %v1404 = vadd.f32 0.0, %v1403
      %1405 = vmatprep.mubr.f32.mxu0 0.0
      %1406 = vmatmul.mubr.f32.gmra.mxu0 %v440
      %v1407 = vpop.f32.mrf.mxu0
      %v1408 = vadd.f32 0.0, %v1407
      %v1409 = vpop.f32.mrf.mxu0
      %v1410 = vadd.f32 0.0, %v1409
      %1411 = vmatprep.mubr.f32.mxu0 0.0
      %1412 = vmatmul.mubr.f32.gmra.mxu0 %v443
      %v1413 = vpop.f32.mrf.mxu0
      %v1414 = vadd.f32 0.0, %v1413
      %v1415 = vpop.f32.mrf.mxu0
      %1416 = vdwg.mxu0
      %1417 = vmatprep.subr.mxu0 0.0
      %1418 = vmatpush1.msra.mxu0 0.0
      %1419 = vmatprep.subr.mxu0 0.0
      %1420 = vmatpush1.msra.mxu0 0.0
      %1421 = vmatprep.subr.mxu0 0.0
      %1422 = vmatpush1.msra.mxu0 0.0
      %1423 = vmatprep.subr.mxu0 0.0
      %1424 = vmatpush1.msra.mxu0 0.0
      %1425 = vmatprep.subr.mxu0 0.0
      %1426 = vmatpush1.msra.mxu0 0.0
      %1427 = vmatprep.subr.mxu0 0.0
      %1428 = vmatpush1.msra.mxu0 0.0
      %1429 = vmatprep.subr.mxu0 0.0
      %1430 = vmatpush1.msra.mxu0 0.0
      %1431 = vmatprep.subr.mxu0 0.0
      %1432 = vmatpush1.msra.mxu0 0.0
      %1433 = vmatprep.subr.mxu0 0.0
      %1434 = vmatpush1.msra.mxu0 0.0
      %1435 = vmatprep.subr.mxu0 0.0
      %1436 = vmatpush1.msra.mxu0 0.0
      %1437 = vmatprep.subr.mxu0 0.0
      %1438 = vmatpush1.msra.mxu0 0.0
      %1439 = vmatprep.subr.mxu0 0.0
      %1440 = vmatpush1.msra.mxu0 0.0
      %1441 = vmatprep.subr.mxu0 0.0
      %1442 = vmatpush1.msra.mxu0 0.0
      %1443 = vmatprep.subr.mxu0 0.0
      %1444 = vmatpush1.msra.mxu0 0.0
      %1445 = vmatprep.subr.mxu0 %v346
      %1446 = vmatpush1.msra.mxu0 %v345
      %1447 = vmatprep.subr.mxu0 %v334
      %1448 = vmatpush1.msra.mxu0 %v333
      %1449 = vmatprep.subr.mxu0 0.0
      %1450 = vmatpush2.msra.mxu0 0.0
      %1451 = vmatprep.subr.mxu0 0.0
      %1452 = vmatpush2.msra.mxu0 0.0
      %1453 = vmatprep.subr.mxu0 0.0
      %1454 = vmatpush2.msra.mxu0 0.0
      %1455 = vmatprep.subr.mxu0 0.0
      %1456 = vmatpush2.msra.mxu0 0.0
      %1457 = vmatprep.subr.mxu0 0.0
      %1458 = vmatpush2.msra.mxu0 0.0
      %1459 = vmatprep.subr.mxu0 0.0
      %1460 = vmatpush2.msra.mxu0 0.0
      %1461 = vmatprep.subr.mxu0 0.0
      %1462 = vmatpush2.msra.mxu0 0.0
      %1463 = vmatprep.subr.mxu0 0.0
      %1464 = vmatpush2.msra.mxu0 0.0
      %1465 = vmatprep.subr.mxu0 0.0
      %1466 = vmatpush2.msra.mxu0 0.0
      %1467 = vmatprep.subr.mxu0 0.0
      %1468 = vmatpush2.msra.mxu0 0.0
      %1469 = vmatprep.subr.mxu0 0.0
      %1470 = vmatpush2.msra.mxu0 0.0
      %1471 = vmatprep.subr.mxu0 0.0
      %1472 = vmatpush2.msra.mxu0 0.0
      %1473 = vmatprep.subr.mxu0 0.0
      %1474 = vmatpush2.msra.mxu0 0.0
      %1475 = vmatprep.subr.mxu0 0.0
      %1476 = vmatpush2.msra.mxu0 0.0
      %1477 = vmatprep.subr.mxu0 0.0
      %1478 = vmatpush2.msra.mxu0 0.0
      %1479 = vmatprep.subr.mxu0 0.0
      %1480 = vmatpush2.msra.mxu0 0.0
      %1481 = vmatprep.mubr.f32.mxu0 0.0
      %1482 = vmatmul.mubr.f32.gmra.mxu0 %v350
      %v1483 = vpop.f32.mrf.mxu0
      %v1484 = vadd.f32 0.0, %v1483
      %v1485 = vpop.f32.mrf.mxu0
      %v1486 = vadd.f32 0.0, %v1485
      %1487 = vmatprep.mubr.f32.mxu0 0.0
      %1488 = vmatmul.mubr.f32.gmra.mxu0 %v353
      %v1489 = vpop.f32.mrf.mxu0
      %v1490 = vadd.f32 0.0, %v1489
      %v1491 = vpop.f32.mrf.mxu0
      %v1492 = vadd.f32 0.0, %v1491
      %1493 = vmatprep.mubr.f32.mxu0 0.0
      %1494 = vmatmul.mubr.f32.gmra.mxu0 %v356
      %v1495 = vpop.f32.mrf.mxu0
      %v1496 = vadd.f32 0.0, %v1495
      %v1497 = vpop.f32.mrf.mxu0
      %v1498 = vadd.f32 0.0, %v1497
      %1499 = vmatprep.mubr.f32.mxu0 0.0
      %1500 = vmatmul.mubr.f32.gmra.mxu0 %v359
      %v1501 = vpop.f32.mrf.mxu0
      %v1502 = vpop.f32.mrf.mxu0
      %1503 = vmatprep.mubr.f32.mxu0 0.0
      %1504 = vmatmul.mubr.f32.gmra.mxu0 %v362
      %v1505 = vpop.f32.mrf.mxu0
      %v1506 = vadd.f32 0.0, %v1505
      %v1507 = vpop.f32.mrf.mxu0
      %v1508 = vadd.f32 0.0, %v1507
      %1509 = vmatprep.mubr.f32.mxu0 0.0
      %1510 = vmatmul.mubr.f32.gmra.mxu0 %v365
      %v1511 = vpop.f32.mrf.mxu0
      %v1512 = vadd.f32 0.0, %v1511
      %v1513 = vpop.f32.mrf.mxu0
      %v1514 = vadd.f32 0.0, %v1513
      %1515 = vmatprep.mubr.f32.mxu0 0.0
      %1516 = vmatmul.mubr.f32.gmra.mxu0 %v368
      %v1517 = vpop.f32.mrf.mxu0
      %v1518 = vadd.f32 0.0, %v1517
      %v1519 = vpop.f32.mrf.mxu0
      %v1520 = vadd.f32 0.0, %v1519
      %1521 = vmatprep.mubr.f32.mxu0 0.0
      %1522 = vmatmul.mubr.f32.gmra.mxu0 %v371
      %v1523 = vpop.f32.mrf.mxu0
      %v1524 = vpop.f32.mrf.mxu0
      %1525 = vmatprep.mubr.f32.mxu0 0.0
      %1526 = vmatmul.mubr.f32.gmra.mxu0 %v374
      %v1527 = vpop.f32.mrf.mxu0
      %v1528 = vadd.f32 0.0, %v1527
      %v1529 = vpop.f32.mrf.mxu0
      %v1530 = vadd.f32 0.0, %v1529
      %1531 = vmatprep.mubr.f32.mxu0 0.0
      %1532 = vmatmul.mubr.f32.gmra.mxu0 %v377
      %v1533 = vpop.f32.mrf.mxu0
      %v1534 = vadd.f32 0.0, %v1533
      %v1535 = vpop.f32.mrf.mxu0
      %v1536 = vadd.f32 0.0, %v1535
      %1537 = vmatprep.mubr.f32.mxu0 0.0
      %1538 = vmatmul.mubr.f32.gmra.mxu0 %v380
      %v1539 = vpop.f32.mrf.mxu0
      %v1540 = vadd.f32 0.0, %v1539
      %v1541 = vpop.f32.mrf.mxu0
      %v1542 = vadd.f32 0.0, %v1541
      %1543 = vmatprep.mubr.f32.mxu0 0.0
      %1544 = vmatmul.mubr.f32.gmra.mxu0 %v383
      %v1545 = vpop.f32.mrf.mxu0
      %v1546 = vpop.f32.mrf.mxu0
      %1547 = vmatprep.mubr.f32.mxu0 0.0
      %1548 = vmatmul.mubr.f32.gmra.mxu0 %v386
      %v1549 = vpop.f32.mrf.mxu0
      %v1550 = vadd.f32 0.0, %v1549
      %v1551 = vpop.f32.mrf.mxu0
      %v1552 = vadd.f32 0.0, %v1551
      %1553 = vmatprep.mubr.f32.mxu0 0.0
      %1554 = vmatmul.mubr.f32.gmra.mxu0 %v389
      %v1555 = vpop.f32.mrf.mxu0
      %v1556 = vadd.f32 0.0, %v1555
      %v1557 = vpop.f32.mrf.mxu0
      %v1558 = vadd.f32 0.0, %v1557
      %1559 = vmatprep.mubr.f32.mxu0 0.0
      %1560 = vmatmul.mubr.f32.gmra.mxu0 %v392
      %v1561 = vpop.f32.mrf.mxu0
      %v1562 = vadd.f32 0.0, %v1561
      %v1563 = vpop.f32.mrf.mxu0
      %v1564 = vadd.f32 0.0, %v1563
      %1565 = vmatprep.mubr.f32.mxu0 0.0
      %1566 = vmatmul.mubr.f32.gmra.mxu0 %v395
      %v1567 = vpop.f32.mrf.mxu0
      %v1568 = vpop.f32.mrf.mxu0
      %1569 = vmatprep.mubr.f32.mxu0 0.0
      %1570 = vmatmul.mubr.f32.gmra.mxu0 %v398
      %v1571 = vpop.f32.mrf.mxu0
      %v1572 = vadd.f32 0.0, %v1571
      %v1573 = vpop.f32.mrf.mxu0
      %v1574 = vadd.f32 0.0, %v1573
      %1575 = vmatprep.mubr.f32.mxu0 0.0
      %1576 = vmatmul.mubr.f32.gmra.mxu0 %v401
      %v1577 = vpop.f32.mrf.mxu0
      %v1578 = vadd.f32 0.0, %v1577
      %v1579 = vpop.f32.mrf.mxu0
      %v1580 = vadd.f32 0.0, %v1579
      %1581 = vmatprep.mubr.f32.mxu0 0.0
      %1582 = vmatmul.mubr.f32.gmra.mxu0 %v404
      %v1583 = vpop.f32.mrf.mxu0
      %v1584 = vadd.f32 0.0, %v1583
      %v1585 = vpop.f32.mrf.mxu0
      %v1586 = vadd.f32 0.0, %v1585
      %1587 = vmatprep.mubr.f32.mxu0 0.0
      %1588 = vmatmul.mubr.f32.gmra.mxu0 %v407
      %v1589 = vpop.f32.mrf.mxu0
      %v1590 = vpop.f32.mrf.mxu0
      %1591 = vmatprep.mubr.f32.mxu0 0.0
      %1592 = vmatmul.mubr.f32.gmra.mxu0 %v410
      %v1593 = vpop.f32.mrf.mxu0
      %v1594 = vadd.f32 0.0, %v1593
      %v1595 = vpop.f32.mrf.mxu0
      %v1596 = vadd.f32 0.0, %v1595
      %1597 = vmatprep.mubr.f32.mxu0 0.0
      %1598 = vmatmul.mubr.f32.gmra.mxu0 %v413
      %v1599 = vpop.f32.mrf.mxu0
      %v1600 = vadd.f32 0.0, %v1599
      %v1601 = vpop.f32.mrf.mxu0
      %v1602 = vadd.f32 0.0, %v1601
      %1603 = vmatprep.mubr.f32.mxu0 0.0
      %1604 = vmatmul.mubr.f32.gmra.mxu0 %v416
      %v1605 = vpop.f32.mrf.mxu0
      %v1606 = vadd.f32 0.0, %v1605
      %v1607 = vpop.f32.mrf.mxu0
      %v1608 = vadd.f32 0.0, %v1607
      %1609 = vmatprep.mubr.f32.mxu0 0.0
      %1610 = vmatmul.mubr.f32.gmra.mxu0 %v419
      %v1611 = vpop.f32.mrf.mxu0
      %v1612 = vpop.f32.mrf.mxu0
      %1613 = vmatprep.mubr.f32.mxu0 0.0
      %1614 = vmatmul.mubr.f32.gmra.mxu0 %v422
      %v1615 = vpop.f32.mrf.mxu0
      %v1616 = vadd.f32 0.0, %v1615
      %v1617 = vpop.f32.mrf.mxu0
      %v1618 = vadd.f32 0.0, %v1617
      %1619 = vmatprep.mubr.f32.mxu0 0.0
      %1620 = vmatmul.mubr.f32.gmra.mxu0 %v425
      %v1621 = vpop.f32.mrf.mxu0
      %v1622 = vadd.f32 0.0, %v1621
      %v1623 = vpop.f32.mrf.mxu0
      %v1624 = vadd.f32 0.0, %v1623
      %1625 = vmatprep.mubr.f32.mxu0 0.0
      %1626 = vmatmul.mubr.f32.gmra.mxu0 %v428
      %v1627 = vpop.f32.mrf.mxu0
      %v1628 = vadd.f32 0.0, %v1627
      %v1629 = vpop.f32.mrf.mxu0
      %v1630 = vadd.f32 0.0, %v1629
      %1631 = vmatprep.mubr.f32.mxu0 0.0
      %1632 = vmatmul.mubr.f32.gmra.mxu0 %v431
      %v1633 = vpop.f32.mrf.mxu0
      %v1634 = vpop.f32.mrf.mxu0
      %1635 = vmatprep.mubr.f32.mxu0 0.0
      %1636 = vmatmul.mubr.f32.gmra.mxu0 %v434
      %v1637 = vpop.f32.mrf.mxu0
      %v1638 = vadd.f32 0.0, %v1637
      %v1639 = vpop.f32.mrf.mxu0
      %v1640 = vadd.f32 0.0, %v1639
      %1641 = vmatprep.mubr.f32.mxu0 0.0
      %1642 = vmatmul.mubr.f32.gmra.mxu0 %v437
      %v1643 = vpop.f32.mrf.mxu0
      %v1644 = vadd.f32 0.0, %v1643
      %v1645 = vpop.f32.mrf.mxu0
      %v1646 = vadd.f32 0.0, %v1645
      %1647 = vmatprep.mubr.f32.mxu0 0.0
      %1648 = vmatmul.mubr.f32.gmra.mxu0 %v440
      %v1649 = vpop.f32.mrf.mxu0
      %v1650 = vadd.f32 0.0, %v1649
      %v1651 = vpop.f32.mrf.mxu0
      %v1652 = vadd.f32 0.0, %v1651
      %1653 = vmatprep.mubr.f32.mxu0 0.0
      %1654 = vmatmul.mubr.f32.gmra.mxu0 %v443
      %v1655 = vpop.f32.mrf.mxu0
      %v1656 = vpop.f32.mrf.mxu0
      %1657 = vdwg.mxu0
      %1658 = vmatprep.subr.mxu0 0.0
      %1659 = vmatpush1.msra.mxu0 0.0
      %1660 = vmatprep.subr.mxu0 0.0
      %1661 = vmatpush1.msra.mxu0 0.0
      %1662 = vmatprep.subr.mxu0 0.0
      %1663 = vmatpush1.msra.mxu0 0.0
      %1664 = vmatprep.subr.mxu0 0.0
      %1665 = vmatpush1.msra.mxu0 0.0
      %1666 = vmatprep.subr.mxu0 0.0
      %1667 = vmatpush1.msra.mxu0 0.0
      %1668 = vmatprep.subr.mxu0 0.0
      %1669 = vmatpush1.msra.mxu0 0.0
      %1670 = vmatprep.subr.mxu0 0.0
      %1671 = vmatpush1.msra.mxu0 0.0
      %1672 = vmatprep.subr.mxu0 0.0
      %1673 = vmatpush1.msra.mxu0 0.0
      %1674 = vmatprep.subr.mxu0 0.0
      %1675 = vmatpush1.msra.mxu0 0.0
      %1676 = vmatprep.subr.mxu0 0.0
      %1677 = vmatpush1.msra.mxu0 0.0
      %1678 = vmatprep.subr.mxu0 0.0
      %1679 = vmatpush1.msra.mxu0 0.0
      %1680 = vmatprep.subr.mxu0 0.0
      %1681 = vmatpush1.msra.mxu0 0.0
      %1682 = vmatprep.subr.mxu0 0.0
      %1683 = vmatpush1.msra.mxu0 0.0
      %1684 = vmatprep.subr.mxu0 0.0
      %1685 = vmatpush1.msra.mxu0 0.0
      %1686 = vmatprep.subr.mxu0 %v348
      %1687 = vmatpush1.msra.mxu0 %v347
      %1688 = vmatprep.subr.mxu0 %v336
      %1689 = vmatpush1.msra.mxu0 %v335
      %1690 = vmatprep.subr.mxu0 0.0
      %1691 = vmatpush2.msra.mxu0 0.0
      %1692 = vmatprep.subr.mxu0 0.0
      %1693 = vmatpush2.msra.mxu0 0.0
      %1694 = vmatprep.subr.mxu0 0.0
      %1695 = vmatpush2.msra.mxu0 0.0
      %1696 = vmatprep.subr.mxu0 0.0
      %1697 = vmatpush2.msra.mxu0 0.0
      %1698 = vmatprep.subr.mxu0 0.0
      %1699 = vmatpush2.msra.mxu0 0.0
      %1700 = vmatprep.subr.mxu0 0.0
      %1701 = vmatpush2.msra.mxu0 0.0
      %1702 = vmatprep.subr.mxu0 0.0
      %1703 = vmatpush2.msra.mxu0 0.0
      %1704 = vmatprep.subr.mxu0 0.0
      %1705 = vmatpush2.msra.mxu0 0.0
      %1706 = vmatprep.subr.mxu0 0.0
      %1707 = vmatpush2.msra.mxu0 0.0
      %1708 = vmatprep.subr.mxu0 0.0
      %1709 = vmatpush2.msra.mxu0 0.0
      %1710 = vmatprep.subr.mxu0 0.0
      %1711 = vmatpush2.msra.mxu0 0.0
      %1712 = vmatprep.subr.mxu0 0.0
      %1713 = vmatpush2.msra.mxu0 0.0
      %1714 = vmatprep.subr.mxu0 0.0
      %1715 = vmatpush2.msra.mxu0 0.0
      %1716 = vmatprep.subr.mxu0 0.0
      %1717 = vmatpush2.msra.mxu0 0.0
      %1718 = vmatprep.subr.mxu0 0.0
      %1719 = vmatpush2.msra.mxu0 0.0
      %1720 = vmatprep.subr.mxu0 0.0
      %1721 = vmatpush2.msra.mxu0 0.0
      %1722 = vmatprep.mubr.f32.mxu0 0.0
      %1723 = vmatmul.mubr.f32.gmra.mxu0 %v350
      %v1724 = vpop.f32.mrf.mxu0
      %v1725 = vadd.f32 0.0, %v1724
      %v1726 = vpop.f32.mrf.mxu0
      %v1727 = vadd.f32 0.0, %v1726
      %1728 = vmatprep.mubr.f32.mxu0 0.0
      %1729 = vmatmul.mubr.f32.gmra.mxu0 %v353
      %v1730 = vpop.f32.mrf.mxu0
      %v1731 = vadd.f32 0.0, %v1730
      %v1732 = vpop.f32.mrf.mxu0
      %v1733 = vadd.f32 0.0, %v1732
      %1734 = vmatprep.mubr.f32.mxu0 0.0
      %1735 = vmatmul.mubr.f32.gmra.mxu0 %v356
      %v1736 = vpop.f32.mrf.mxu0
      %v1737 = vadd.f32 0.0, %v1736
      %v1738 = vpop.f32.mrf.mxu0
      %v1739 = vadd.f32 0.0, %v1738
      %1740 = vmatprep.mubr.f32.mxu0 0.0
      %1741 = vmatmul.mubr.f32.gmra.mxu0 %v359
      %v1742 = vpop.f32.mrf.mxu0
      %v1743 = vadd.f32 0.0, %v1742
      %v1744 = vpop.f32.mrf.mxu0
      %v1745 = vadd.f32 0.0, %v1744
      %1746 = vmatprep.mubr.f32.mxu0 0.0
      %1747 = vmatmul.mubr.f32.gmra.mxu0 %v362
      %v1748 = vpop.f32.mrf.mxu0
      %v1749 = vadd.f32 0.0, %v1748
      %v1750 = vpop.f32.mrf.mxu0
      %v1751 = vadd.f32 0.0, %v1750
      %1752 = vmatprep.mubr.f32.mxu0 0.0
      %1753 = vmatmul.mubr.f32.gmra.mxu0 %v365
      %v1754 = vpop.f32.mrf.mxu0
      %v1755 = vadd.f32 0.0, %v1754
      %v1756 = vpop.f32.mrf.mxu0
      %v1757 = vadd.f32 0.0, %v1756
      %1758 = vmatprep.mubr.f32.mxu0 0.0
      %1759 = vmatmul.mubr.f32.gmra.mxu0 %v368
      %v1760 = vpop.f32.mrf.mxu0
      %v1761 = vadd.f32 0.0, %v1760
      %v1762 = vpop.f32.mrf.mxu0
      %v1763 = vadd.f32 0.0, %v1762
      %1764 = vmatprep.mubr.f32.mxu0 0.0
      %1765 = vmatmul.mubr.f32.gmra.mxu0 %v371
      %v1766 = vpop.f32.mrf.mxu0
      %v1767 = vadd.f32 0.0, %v1766
      %v1768 = vpop.f32.mrf.mxu0
      %v1769 = vadd.f32 0.0, %v1768
      %1770 = vmatprep.mubr.f32.mxu0 0.0
      %1771 = vmatmul.mubr.f32.gmra.mxu0 %v374
      %v1772 = vpop.f32.mrf.mxu0
      %v1773 = vadd.f32 0.0, %v1772
      %v1774 = vpop.f32.mrf.mxu0
      %v1775 = vadd.f32 0.0, %v1774
      %1776 = vmatprep.mubr.f32.mxu0 0.0
      %1777 = vmatmul.mubr.f32.gmra.mxu0 %v377
      %v1778 = vpop.f32.mrf.mxu0
      %v1779 = vadd.f32 0.0, %v1778
      %v1780 = vpop.f32.mrf.mxu0
      %v1781 = vadd.f32 0.0, %v1780
      %1782 = vmatprep.mubr.f32.mxu0 0.0
      %1783 = vmatmul.mubr.f32.gmra.mxu0 %v380
      %v1784 = vpop.f32.mrf.mxu0
      %v1785 = vadd.f32 0.0, %v1784
      %v1786 = vpop.f32.mrf.mxu0
      %v1787 = vadd.f32 0.0, %v1786
      %1788 = vmatprep.mubr.f32.mxu0 0.0
      %1789 = vmatmul.mubr.f32.gmra.mxu0 %v383
      %v1790 = vpop.f32.mrf.mxu0
      %v1791 = vadd.f32 0.0, %v1790
      %v1792 = vpop.f32.mrf.mxu0
      %v1793 = vadd.f32 0.0, %v1792
      %1794 = vmatprep.mubr.f32.mxu0 0.0
      %1795 = vmatmul.mubr.f32.gmra.mxu0 %v386
      %v1796 = vpop.f32.mrf.mxu0
      %v1797 = vadd.f32 0.0, %v1796
      %v1798 = vpop.f32.mrf.mxu0
      %v1799 = vadd.f32 0.0, %v1798
      %1800 = vmatprep.mubr.f32.mxu0 0.0
      %1801 = vmatmul.mubr.f32.gmra.mxu0 %v389
      %v1802 = vpop.f32.mrf.mxu0
      %v1803 = vadd.f32 0.0, %v1802
      %v1804 = vpop.f32.mrf.mxu0
      %v1805 = vadd.f32 0.0, %v1804
      %1806 = vmatprep.mubr.f32.mxu0 0.0
      %1807 = vmatmul.mubr.f32.gmra.mxu0 %v392
      %v1808 = vpop.f32.mrf.mxu0
      %v1809 = vadd.f32 0.0, %v1808
      %v1810 = vpop.f32.mrf.mxu0
      %v1811 = vadd.f32 0.0, %v1810
      %1812 = vmatprep.mubr.f32.mxu0 0.0
      %1813 = vmatmul.mubr.f32.gmra.mxu0 %v395
      %v1814 = vpop.f32.mrf.mxu0
      %v1815 = vadd.f32 0.0, %v1814
      %v1816 = vpop.f32.mrf.mxu0
      %v1817 = vadd.f32 0.0, %v1816
      %1818 = vmatprep.mubr.f32.mxu0 0.0
      %1819 = vmatmul.mubr.f32.gmra.mxu0 %v398
      %v1820 = vpop.f32.mrf.mxu0
      %v1821 = vadd.f32 0.0, %v1820
      %v1822 = vpop.f32.mrf.mxu0
      %v1823 = vadd.f32 0.0, %v1822
      %1824 = vmatprep.mubr.f32.mxu0 0.0
      %1825 = vmatmul.mubr.f32.gmra.mxu0 %v401
      %v1826 = vpop.f32.mrf.mxu0
      %v1827 = vadd.f32 0.0, %v1826
      %v1828 = vpop.f32.mrf.mxu0
      %v1829 = vadd.f32 0.0, %v1828
      %1830 = vmatprep.mubr.f32.mxu0 0.0
      %1831 = vmatmul.mubr.f32.gmra.mxu0 %v404
      %v1832 = vpop.f32.mrf.mxu0
      %v1833 = vadd.f32 0.0, %v1832
      %v1834 = vpop.f32.mrf.mxu0
      %v1835 = vadd.f32 0.0, %v1834
      %1836 = vmatprep.mubr.f32.mxu0 0.0
      %1837 = vmatmul.mubr.f32.gmra.mxu0 %v407
      %v1838 = vpop.f32.mrf.mxu0
      %v1839 = vadd.f32 0.0, %v1838
      %v1840 = vpop.f32.mrf.mxu0
      %v1841 = vadd.f32 0.0, %v1840
      %1842 = vmatprep.mubr.f32.mxu0 0.0
      %1843 = vmatmul.mubr.f32.gmra.mxu0 %v410
      %v1844 = vpop.f32.mrf.mxu0
      %v1845 = vadd.f32 0.0, %v1844
      %v1846 = vpop.f32.mrf.mxu0
      %v1847 = vadd.f32 0.0, %v1846
      %1848 = vmatprep.mubr.f32.mxu0 0.0
      %1849 = vmatmul.mubr.f32.gmra.mxu0 %v413
      %v1850 = vpop.f32.mrf.mxu0
      %v1851 = vadd.f32 0.0, %v1850
      %v1852 = vpop.f32.mrf.mxu0
      %v1853 = vadd.f32 0.0, %v1852
      %1854 = vmatprep.mubr.f32.mxu0 0.0
      %1855 = vmatmul.mubr.f32.gmra.mxu0 %v416
      %v1856 = vpop.f32.mrf.mxu0
      %v1857 = vadd.f32 0.0, %v1856
      %v1858 = vpop.f32.mrf.mxu0
      %v1859 = vadd.f32 0.0, %v1858
      %1860 = vmatprep.mubr.f32.mxu0 0.0
      %1861 = vmatmul.mubr.f32.gmra.mxu0 %v419
      %v1862 = vpop.f32.mrf.mxu0
      %v1863 = vadd.f32 0.0, %v1862
      %v1864 = vpop.f32.mrf.mxu0
      %v1865 = vadd.f32 0.0, %v1864
      %1866 = vmatprep.mubr.f32.mxu0 0.0
      %1867 = vmatmul.mubr.f32.gmra.mxu0 %v422
      %v1868 = vpop.f32.mrf.mxu0
      %v1869 = vadd.f32 0.0, %v1868
      %v1870 = vpop.f32.mrf.mxu0
      %v1871 = vadd.f32 0.0, %v1870
      %1872 = vmatprep.mubr.f32.mxu0 0.0
      %1873 = vmatmul.mubr.f32.gmra.mxu0 %v425
      %v1874 = vpop.f32.mrf.mxu0
      %v1875 = vadd.f32 0.0, %v1874
      %v1876 = vpop.f32.mrf.mxu0
      %v1877 = vadd.f32 0.0, %v1876
      %1878 = vmatprep.mubr.f32.mxu0 0.0
      %1879 = vmatmul.mubr.f32.gmra.mxu0 %v428
      %v1880 = vpop.f32.mrf.mxu0
      %v1881 = vadd.f32 0.0, %v1880
      %v1882 = vpop.f32.mrf.mxu0
      %v1883 = vadd.f32 0.0, %v1882
      %1884 = vmatprep.mubr.f32.mxu0 0.0
      %1885 = vmatmul.mubr.f32.gmra.mxu0 %v431
      %v1886 = vpop.f32.mrf.mxu0
      %v1887 = vadd.f32 0.0, %v1886
      %v1888 = vpop.f32.mrf.mxu0
      %v1889 = vadd.f32 0.0, %v1888
      %1890 = vmatprep.mubr.f32.mxu0 0.0
      %1891 = vmatmul.mubr.f32.gmra.mxu0 %v434
      %v1892 = vpop.f32.mrf.mxu0
      %v1893 = vadd.f32 0.0, %v1892
      %v1894 = vpop.f32.mrf.mxu0
      %v1895 = vadd.f32 0.0, %v1894
      %1896 = vmatprep.mubr.f32.mxu0 0.0
      %1897 = vmatmul.mubr.f32.gmra.mxu0 %v437
      %v1898 = vpop.f32.mrf.mxu0
      %v1899 = vadd.f32 0.0, %v1898
      %v1900 = vpop.f32.mrf.mxu0
      %v1901 = vadd.f32 0.0, %v1900
      %1902 = vmatprep.mubr.f32.mxu0 0.0
      %1903 = vmatmul.mubr.f32.gmra.mxu0 %v440
      %v1904 = vpop.f32.mrf.mxu0
      %v1905 = vadd.f32 0.0, %v1904
      %v1906 = vpop.f32.mrf.mxu0
      %v1907 = vadd.f32 0.0, %v1906
      %1908 = vmatprep.mubr.f32.mxu0 0.0
      %1909 = vmatmul.mubr.f32.gmra.mxu0 %v443
      %v1910 = vpop.f32.mrf.mxu0
      %v1911 = vadd.f32 0.0, %v1910
      %v1912 = vpop.f32.mrf.mxu0
      %v1913 = vadd.f32 0.0, %v1912
      %1914 = vdwg.mxu0
      %v1915 = vld [vmem:[%s2] sm:$0x7]
      %vm1940 = vcmask 1046528
      %v1941 = vrot.slane %v514, 1
      %v1942 = vrot.slane %v520, 1
      %v1943 = vsel %vm1940, %v1941, %v1942
      %v1944 = vrot.slane %v526, 1
      %v1945 = vsel %vm1940, %v1942, %v1944
      %v1946 = vrot.slane %v536, 1
      %v1947 = vrot.slane %v542, 1
      %v1948 = vsel %vm1940, %v1946, %v1947
      %v1949 = vrot.slane %v548, 1
      %v1950 = vsel %vm1940, %v1947, %v1949
      %v1951 = vrot.slane %v558, 1
      %v1952 = vrot.slane %v564, 1
      %v1953 = vsel %vm1940, %v1951, %v1952
      %v1954 = vrot.slane %v570, 1
      %v1955 = vsel %vm1940, %v1952, %v1954
      %v1956 = vrot.slane %v580, 1
      %v1957 = vrot.slane %v586, 1
      %v1958 = vsel %vm1940, %v1956, %v1957
      %v1959 = vrot.slane %v592, 1
      %v1960 = vsel %vm1940, %v1957, %v1959
      %v1961 = vrot.slane %v602, 1
      %v1962 = vrot.slane %v608, 1
      %v1963 = vsel %vm1940, %v1961, %v1962
      %v1964 = vrot.slane %v614, 1
      %v1965 = vsel %vm1940, %v1962, %v1964
      %v1966 = vrot.slane %v624, 1
      %v1967 = vrot.slane %v630, 1
      %v1968 = vsel %vm1940, %v1966, %v1967
      %v1969 = vrot.slane %v636, 1
      %v1970 = vsel %vm1940, %v1967, %v1969
      %v1971 = vrot.slane %v646, 1
      %v1972 = vrot.slane %v652, 1
      %v1973 = vsel %vm1940, %v1971, %v1972
      %v1974 = vrot.slane %v658, 1
      %v1975 = vsel %vm1940, %v1972, %v1974
      %v1976 = vrot.slane %v668, 1
      %v1977 = vrot.slane %v674, 1
      %v1978 = vsel %vm1940, %v1976, %v1977
      %v1979 = vrot.slane %v680, 1
      %v1980 = vsel %vm1940, %v1977, %v1979
      %v2005 = vadd.f32 %v512, %v1943
      %v2006 = vadd.f32 %v518, %v1945
      %v2007 = vadd.f32 %v524, %v1944
      %v2008 = vadd.f32 %v534, %v1948
      %v2009 = vadd.f32 %v540, %v1950
      %v2010 = vadd.f32 %v546, %v1949
      %v2011 = vadd.f32 %v556, %v1953
      %v2012 = vadd.f32 %v562, %v1955
      %v2013 = vadd.f32 %v568, %v1954
      %v2014 = vadd.f32 %v578, %v1958
      %v2015 = vadd.f32 %v584, %v1960
      %v2016 = vadd.f32 %v590, %v1959
      %v2017 = vadd.f32 %v600, %v1963
      %v2018 = vadd.f32 %v606, %v1965
      %v2019 = vadd.f32 %v612, %v1964
      %v2020 = vadd.f32 %v622, %v1968
      %v2021 = vadd.f32 %v628, %v1970
      %v2022 = vadd.f32 %v634, %v1969
      %v2023 = vadd.f32 %v644, %v1973
      %v2024 = vadd.f32 %v650, %v1975
      %v2025 = vadd.f32 %v656, %v1974
      %v2026 = vadd.f32 %v666, %v1978
      %v2027 = vadd.f32 %v672, %v1980
      %v2028 = vadd.f32 %v678, %v1979
      %vm2053 = vcmask 1045504
      %v2054 = vrot.slane %v753, 2
      %v2055 = vrot.slane %v759, 2
      %v2056 = vsel %vm2053, %v2054, %v2055
      %v2057 = vrot.slane %v765, 2
      %v2058 = vsel %vm2053, %v2055, %v2057
      %v2059 = vrot.slane %v775, 2
      %v2060 = vrot.slane %v781, 2
      %v2061 = vsel %vm2053, %v2059, %v2060
      %v2062 = vrot.slane %v787, 2
      %v2063 = vsel %vm2053, %v2060, %v2062
      %v2064 = vrot.slane %v797, 2
      %v2065 = vrot.slane %v803, 2
      %v2066 = vsel %vm2053, %v2064, %v2065
      %v2067 = vrot.slane %v809, 2
      %v2068 = vsel %vm2053, %v2065, %v2067
      %v2069 = vrot.slane %v819, 2
      %v2070 = vrot.slane %v825, 2
      %v2071 = vsel %vm2053, %v2069, %v2070
      %v2072 = vrot.slane %v831, 2
      %v2073 = vsel %vm2053, %v2070, %v2072
      %v2074 = vrot.slane %v841, 2
      %v2075 = vrot.slane %v847, 2
      %v2076 = vsel %vm2053, %v2074, %v2075
      %v2077 = vrot.slane %v853, 2
      %v2078 = vsel %vm2053, %v2075, %v2077
      %v2079 = vrot.slane %v863, 2
      %v2080 = vrot.slane %v869, 2
      %v2081 = vsel %vm2053, %v2079, %v2080
      %v2082 = vrot.slane %v875, 2
      %v2083 = vsel %vm2053, %v2080, %v2082
      %v2084 = vrot.slane %v885, 2
      %v2085 = vrot.slane %v891, 2
      %v2086 = vsel %vm2053, %v2084, %v2085
      %v2087 = vrot.slane %v897, 2
      %v2088 = vsel %vm2053, %v2085, %v2087
      %v2089 = vrot.slane %v907, 2
      %v2090 = vrot.slane %v913, 2
      %v2091 = vsel %vm2053, %v2089, %v2090
      %v2092 = vrot.slane %v919, 2
      %v2093 = vsel %vm2053, %v2090, %v2092
      %v2118 = vadd.f32 %v2005, %v2056
      %v2119 = vadd.f32 %v2006, %v2058
      %v2120 = vadd.f32 %v2007, %v2057
      %v2121 = vadd.f32 %v2008, %v2061
      %v2122 = vadd.f32 %v2009, %v2063
      %v2123 = vadd.f32 %v2010, %v2062
      %v2124 = vadd.f32 %v2011, %v2066
      %v2125 = vadd.f32 %v2012, %v2068
      %v2126 = vadd.f32 %v2013, %v2067
      %v2127 = vadd.f32 %v2014, %v2071
      %v2128 = vadd.f32 %v2015, %v2073
      %v2129 = vadd.f32 %v2016, %v2072
      %v2130 = vadd.f32 %v2017, %v2076
      %v2131 = vadd.f32 %v2018, %v2078
      %v2132 = vadd.f32 %v2019, %v2077
      %v2133 = vadd.f32 %v2020, %v2081
      %v2134 = vadd.f32 %v2021, %v2083
      %v2135 = vadd.f32 %v2022, %v2082
      %v2136 = vadd.f32 %v2023, %v2086
      %v2137 = vadd.f32 %v2024, %v2088
      %v2138 = vadd.f32 %v2025, %v2087
      %v2139 = vadd.f32 %v2026, %v2091
      %v2140 = vadd.f32 %v2027, %v2093
      %v2141 = vadd.f32 %v2028, %v2092
      %v2143 = vlaneseq
      %v2144 = vshrl.u32 %v2143, 7
      %v2145 = vsub.s32 0, %v2144
      %v2146 = vrot.slane %v1915, %v2145
      %v2148 = vadd.f32 %v2118, %v2146
      %v2149 = vadd.f32 %v2119, %v2146
      %v2150 = vadd.f32 %v2120, %v2146
      %v2151 = vadd.f32 %v2121, %v2146
      %v2152 = vadd.f32 %v2122, %v2146
      %v2153 = vadd.f32 %v2123, %v2146
      %v2154 = vadd.f32 %v2124, %v2146
      %v2155 = vadd.f32 %v2125, %v2146
      %v2156 = vadd.f32 %v2126, %v2146
      %v2157 = vadd.f32 %v2127, %v2146
      %v2158 = vadd.f32 %v2128, %v2146
      %v2159 = vadd.f32 %v2129, %v2146
      %v2160 = vadd.f32 %v2130, %v2146
      %v2161 = vadd.f32 %v2131, %v2146
      %v2162 = vadd.f32 %v2132, %v2146
      %v2163 = vadd.f32 %v2133, %v2146
      %v2164 = vadd.f32 %v2134, %v2146
      %v2165 = vadd.f32 %v2135, %v2146
      %v2166 = vadd.f32 %v2136, %v2146
      %v2167 = vadd.f32 %v2137, %v2146
      %v2168 = vadd.f32 %v2138, %v2146
      %v2169 = vadd.f32 %v2139, %v2146
      %v2170 = vadd.f32 %v2140, %v2146
      %v2171 = vadd.f32 %v2141, %v2146
      %v2172 = vmax.f32 %v2148, 0.0
      %v2173 = vmax.f32 %v2149, 0.0
      %v2174 = vmax.f32 %v2150, 0.0
      %v2175 = vmax.f32 %v2151, 0.0
      %v2176 = vmax.f32 %v2152, 0.0
      %v2177 = vmax.f32 %v2153, 0.0
      %v2178 = vmax.f32 %v2154, 0.0
      %v2179 = vmax.f32 %v2155, 0.0
      %v2180 = vmax.f32 %v2156, 0.0
      %v2181 = vmax.f32 %v2157, 0.0
      %v2182 = vmax.f32 %v2158, 0.0
      %v2183 = vmax.f32 %v2159, 0.0
      %v2184 = vmax.f32 %v2160, 0.0
      %v2185 = vmax.f32 %v2161, 0.0
      %v2186 = vmax.f32 %v2162, 0.0
      %v2187 = vmax.f32 %v2163, 0.0
      %v2188 = vmax.f32 %v2164, 0.0
      %v2189 = vmax.f32 %v2165, 0.0
      %v2190 = vmax.f32 %v2166, 0.0
      %v2191 = vmax.f32 %v2167, 0.0
      %v2192 = vmax.f32 %v2168, 0.0
      %v2193 = vmax.f32 %v2169, 0.0
      %v2194 = vmax.f32 %v2170, 0.0
      %v2195 = vmax.f32 %v2171, 0.0
      %vm2196 = vcmask 1047554
      %v2197 = vsel %vm2196, %v2172, -inf
      %v2198 = vmax.f32 %v2197, %v2173
      %v2199 = vsel %vm2053, %v2174, -inf
      %v2200 = vmax.f32 %v2198, %v2199
      %v2201 = vrot.slane %v2200, 4
      %v2202 = vmax.f32 %v2200, %v2201
      %v2203 = vrot.slane %v2202, 2
      %v2204 = vmax.f32 %v2202, %v2203
      %v2205 = vrot.slane %v2204, 1
      %v2206 = vmax.f32 %v2204, %v2205
      %v2207 = vsel %vm2196, %v2175, -inf
      %v2208 = vmax.f32 %v2207, %v2176
      %v2209 = vsel %vm2053, %v2177, -inf
      %v2210 = vmax.f32 %v2208, %v2209
      %v2211 = vrot.slane %v2210, 4
      %v2212 = vmax.f32 %v2210, %v2211
      %v2213 = vrot.slane %v2212, 2
      %v2214 = vmax.f32 %v2212, %v2213
      %v2215 = vrot.slane %v2214, 1
      %v2216 = vmax.f32 %v2214, %v2215
      %v2217 = vsel %vm2196, %v2178, -inf
      %v2218 = vmax.f32 %v2217, %v2179
      %v2219 = vsel %vm2053, %v2180, -inf
      %v2220 = vmax.f32 %v2218, %v2219
      %v2221 = vrot.slane %v2220, 4
      %v2222 = vmax.f32 %v2220, %v2221
      %v2223 = vrot.slane %v2222, 2
      %v2224 = vmax.f32 %v2222, %v2223
      %v2225 = vrot.slane %v2224, 1
      %v2226 = vmax.f32 %v2224, %v2225
      %v2227 = vsel %vm2196, %v2181, -inf
      %v2228 = vmax.f32 %v2227, %v2182
      %v2229 = vsel %vm2053, %v2183, -inf
      %v2230 = vmax.f32 %v2228, %v2229
      %v2231 = vrot.slane %v2230, 4
      %v2232 = vmax.f32 %v2230, %v2231
      %v2233 = vrot.slane %v2232, 2
      %v2234 = vmax.f32 %v2232, %v2233
      %v2235 = vrot.slane %v2234, 1
      %v2236 = vmax.f32 %v2234, %v2235
      %v2237 = vsel %vm2196, %v2184, -inf
      %v2238 = vmax.f32 %v2237, %v2185
      %v2239 = vsel %vm2053, %v2186, -inf
      %v2240 = vmax.f32 %v2238, %v2239
      %v2241 = vrot.slane %v2240, 4
      %v2242 = vmax.f32 %v2240, %v2241
      %v2243 = vrot.slane %v2242, 2
      %v2244 = vmax.f32 %v2242, %v2243
      %v2245 = vrot.slane %v2244, 1
      %v2246 = vmax.f32 %v2244, %v2245
      %v2247 = vsel %vm2196, %v2187, -inf
      %v2248 = vmax.f32 %v2247, %v2188
      %v2249 = vsel %vm2053, %v2189, -inf
      %v2250 = vmax.f32 %v2248, %v2249
      %v2251 = vrot.slane %v2250, 4
      %v2252 = vmax.f32 %v2250, %v2251
      %v2253 = vrot.slane %v2252, 2
      %v2254 = vmax.f32 %v2252, %v2253
      %v2255 = vrot.slane %v2254, 1
      %v2256 = vmax.f32 %v2254, %v2255
      %v2257 = vsel %vm2196, %v2190, -inf
      %v2258 = vmax.f32 %v2257, %v2191
      %v2259 = vsel %vm2053, %v2192, -inf
      %v2260 = vmax.f32 %v2258, %v2259
      %v2261 = vrot.slane %v2260, 4
      %v2262 = vmax.f32 %v2260, %v2261
      %v2263 = vrot.slane %v2262, 2
      %v2264 = vmax.f32 %v2262, %v2263
      %v2265 = vrot.slane %v2264, 1
      %v2266 = vmax.f32 %v2264, %v2265
      %v2267 = vsel %vm2196, %v2193, -inf
      %v2268 = vmax.f32 %v2267, %v2194
      %v2269 = vsel %vm2053, %v2195, -inf
      %v2270 = vmax.f32 %v2268, %v2269
      %v2271 = vrot.slane %v2270, 4
      %v2272 = vmax.f32 %v2270, %v2271
      %v2273 = vrot.slane %v2272, 2
      %v2274 = vmax.f32 %v2272, %v2273
      %v2275 = vrot.slane %v2274, 1
      %v2276 = vmax.f32 %v2274, %v2275
      %vm2285 = vcmask 1041409
      %v2286 = vsel %vm2285, %v2216, %v2206
      %vm2287 = vcmask 1042434
      %v2288 = vsel %vm2287, %v2226, %v2286
      %vm2289 = vcmask 1043459
      %v2290 = vsel %vm2289, %v2236, %v2288
      %vm2291 = vcmask 1044484
      %v2292 = vsel %vm2291, %v2246, %v2290
      %vm2293 = vcmask 1045509
      %v2294 = vsel %vm2293, %v2256, %v2292
      %vm2295 = vcmask 1046534
      %v2296 = vsel %vm2295, %v2266, %v2294
      %vm2297 = vcmask 1047559
      %v2298 = vsel %vm2297, %v2276, %v2296
      %2300 = vst [vmem:[#allocation3] sm:$0xff] %v2298
      %v2325 = vrot.slane %v994, 1
      %v2326 = vrot.slane %v1000, 1
      %v2327 = vsel %vm1940, %v2325, %v2326
      %v2328 = vrot.slane %v1006, 1
      %v2329 = vsel %vm1940, %v2326, %v2328
      %v2330 = vrot.slane %v1016, 1
      %v2331 = vrot.slane %v1022, 1
      %v2332 = vsel %vm1940, %v2330, %v2331
      %v2333 = vrot.slane %v1028, 1
      %v2334 = vsel %vm1940, %v2331, %v2333
      %v2335 = vrot.slane %v1038, 1
      %v2336 = vrot.slane %v1044, 1
      %v2337 = vsel %vm1940, %v2335, %v2336
      %v2338 = vrot.slane %v1050, 1
      %v2339 = vsel %vm1940, %v2336, %v2338
      %v2340 = vrot.slane %v1060, 1
      %v2341 = vrot.slane %v1066, 1
      %v2342 = vsel %vm1940, %v2340, %v2341
      %v2343 = vrot.slane %v1072, 1
      %v2344 = vsel %vm1940, %v2341, %v2343
      %v2345 = vrot.slane %v1082, 1
      %v2346 = vrot.slane %v1088, 1
      %v2347 = vsel %vm1940, %v2345, %v2346
      %v2348 = vrot.slane %v1094, 1
      %v2349 = vsel %vm1940, %v2346, %v2348
      %v2350 = vrot.slane %v1104, 1
      %v2351 = vrot.slane %v1110, 1
      %v2352 = vsel %vm1940, %v2350, %v2351
      %v2353 = vrot.slane %v1116, 1
      %v2354 = vsel %vm1940, %v2351, %v2353
      %v2355 = vrot.slane %v1126, 1
      %v2356 = vrot.slane %v1132, 1
      %v2357 = vsel %vm1940, %v2355, %v2356
      %v2358 = vrot.slane %v1138, 1
      %v2359 = vsel %vm1940, %v2356, %v2358
      %v2360 = vrot.slane %v1148, 1
      %v2361 = vrot.slane %v1154, 1
      %v2362 = vsel %vm1940, %v2360, %v2361
      %v2363 = vrot.slane %v1160, 1
      %v2364 = vsel %vm1940, %v2361, %v2363
      %v2389 = vadd.f32 %v755, %v2327
      %v2390 = vadd.f32 %v761, %v2329
      %v2391 = vadd.f32 %v767, %v2328
      %v2392 = vadd.f32 %v777, %v2332
      %v2393 = vadd.f32 %v783, %v2334
      %v2394 = vadd.f32 %v789, %v2333
      %v2395 = vadd.f32 %v799, %v2337
      %v2396 = vadd.f32 %v805, %v2339
      %v2397 = vadd.f32 %v811, %v2338
      %v2398 = vadd.f32 %v821, %v2342
      %v2399 = vadd.f32 %v827, %v2344
      %v2400 = vadd.f32 %v833, %v2343
      %v2401 = vadd.f32 %v843, %v2347
      %v2402 = vadd.f32 %v849, %v2349
      %v2403 = vadd.f32 %v855, %v2348
      %v2404 = vadd.f32 %v865, %v2352
      %v2405 = vadd.f32 %v871, %v2354
      %v2406 = vadd.f32 %v877, %v2353
      %v2407 = vadd.f32 %v887, %v2357
      %v2408 = vadd.f32 %v893, %v2359
      %v2409 = vadd.f32 %v899, %v2358
      %v2410 = vadd.f32 %v909, %v2362
      %v2411 = vadd.f32 %v915, %v2364
      %v2412 = vadd.f32 %v921, %v2363
      %v2437 = vrot.slane %v996, 2
      %v2438 = vrot.slane %v1002, 2
      %v2439 = vsel %vm2053, %v2437, %v2438
      %v2440 = vrot.slane %v1008, 2
      %v2441 = vsel %vm2053, %v2438, %v2440
      %v2442 = vrot.slane %v1018, 2
      %v2443 = vrot.slane %v1024, 2
      %v2444 = vsel %vm2053, %v2442, %v2443
      %v2445 = vrot.slane %v1030, 2
      %v2446 = vsel %vm2053, %v2443, %v2445
      %v2447 = vrot.slane %v1040, 2
      %v2448 = vrot.slane %v1046, 2
      %v2449 = vsel %vm2053, %v2447, %v2448
      %v2450 = vrot.slane %v1052, 2
      %v2451 = vsel %vm2053, %v2448, %v2450
      %v2452 = vrot.slane %v1062, 2
      %v2453 = vrot.slane %v1068, 2
      %v2454 = vsel %vm2053, %v2452, %v2453
      %v2455 = vrot.slane %v1074, 2
      %v2456 = vsel %vm2053, %v2453, %v2455
      %v2457 = vrot.slane %v1084, 2
      %v2458 = vrot.slane %v1090, 2
      %v2459 = vsel %vm2053, %v2457, %v2458
      %v2460 = vrot.slane %v1096, 2
      %v2461 = vsel %vm2053, %v2458, %v2460
      %v2462 = vrot.slane %v1106, 2
      %v2463 = vrot.slane %v1112, 2
      %v2464 = vsel %vm2053, %v2462, %v2463
      %v2465 = vrot.slane %v1118, 2
      %v2466 = vsel %vm2053, %v2463, %v2465
      %v2467 = vrot.slane %v1128, 2
      %v2468 = vrot.slane %v1134, 2
      %v2469 = vsel %vm2053, %v2467, %v2468
      %v2470 = vrot.slane %v1140, 2
      %v2471 = vsel %vm2053, %v2468, %v2470
      %v2472 = vrot.slane %v1150, 2
      %v2473 = vrot.slane %v1156, 2
      %v2474 = vsel %vm2053, %v2472, %v2473
      %v2475 = vrot.slane %v1162, 2
      %v2476 = vsel %vm2053, %v2473, %v2475
      %v2501 = vadd.f32 %v2389, %v2439
      %v2502 = vadd.f32 %v2390, %v2441
      %v2503 = vadd.f32 %v2391, %v2440
      %v2504 = vadd.f32 %v2392, %v2444
      %v2505 = vadd.f32 %v2393, %v2446
      %v2506 = vadd.f32 %v2394, %v2445
      %v2507 = vadd.f32 %v2395, %v2449
      %v2508 = vadd.f32 %v2396, %v2451
      %v2509 = vadd.f32 %v2397, %v2450
      %v2510 = vadd.f32 %v2398, %v2454
      %v2511 = vadd.f32 %v2399, %v2456
      %v2512 = vadd.f32 %v2400, %v2455
      %v2513 = vadd.f32 %v2401, %v2459
      %v2514 = vadd.f32 %v2402, %v2461
      %v2515 = vadd.f32 %v2403, %v2460
      %v2516 = vadd.f32 %v2404, %v2464
      %v2517 = vadd.f32 %v2405, %v2466
      %v2518 = vadd.f32 %v2406, %v2465
      %v2519 = vadd.f32 %v2407, %v2469
      %v2520 = vadd.f32 %v2408, %v2471
      %v2521 = vadd.f32 %v2409, %v2470
      %v2522 = vadd.f32 %v2410, %v2474
      %v2523 = vadd.f32 %v2411, %v2476
      %v2524 = vadd.f32 %v2412, %v2475
      %vm2557 = vcmask 1044480
      %v2558 = vrot.slane %v1235, 3
      %v2559 = vrot.slane %v1241, 3
      %v2560 = vsel %vm2557, %v2558, %v2559
      %v2561 = vrot.slane %v1247, 3
      %v2562 = vsel %vm2557, %v2559, %v2561
      %v2563 = vrot.slane %v1253, 3
      %v2564 = vsel %vm2557, %v2561, %v2563
      %v2565 = vrot.slane %v1258, 3
      %v2566 = vrot.slane %v1264, 3
      %v2567 = vsel %vm2557, %v2565, %v2566
      %v2568 = vrot.slane %v1270, 3
      %v2569 = vsel %vm2557, %v2566, %v2568
      %v2570 = vrot.slane %v1276, 3
      %v2571 = vsel %vm2557, %v2568, %v2570
      %v2572 = vrot.slane %v1281, 3
      %v2573 = vrot.slane %v1287, 3
      %v2574 = vsel %vm2557, %v2572, %v2573
      %v2575 = vrot.slane %v1293, 3
      %v2576 = vsel %vm2557, %v2573, %v2575
      %v2577 = vrot.slane %v1299, 3
      %v2578 = vsel %vm2557, %v2575, %v2577
      %v2579 = vrot.slane %v1304, 3
      %v2580 = vrot.slane %v1310, 3
      %v2581 = vsel %vm2557, %v2579, %v2580
      %v2582 = vrot.slane %v1316, 3
      %v2583 = vsel %vm2557, %v2580, %v2582
      %v2584 = vrot.slane %v1322, 3
      %v2585 = vsel %vm2557, %v2582, %v2584
      %v2586 = vrot.slane %v1327, 3
      %v2587 = vrot.slane %v1333, 3
      %v2588 = vsel %vm2557, %v2586, %v2587
      %v2589 = vrot.slane %v1339, 3
      %v2590 = vsel %vm2557, %v2587, %v2589
      %v2591 = vrot.slane %v1345, 3
      %v2592 = vsel %vm2557, %v2589, %v2591
      %v2593 = vrot.slane %v1350, 3
      %v2594 = vrot.slane %v1356, 3
      %v2595 = vsel %vm2557, %v2593, %v2594
      %v2596 = vrot.slane %v1362, 3
      %v2597 = vsel %vm2557, %v2594, %v2596
      %v2598 = vrot.slane %v1368, 3
      %v2599 = vsel %vm2557, %v2596, %v2598
      %v2600 = vrot.slane %v1373, 3
      %v2601 = vrot.slane %v1379, 3
      %v2602 = vsel %vm2557, %v2600, %v2601
      %v2603 = vrot.slane %v1385, 3
      %v2604 = vsel %vm2557, %v2601, %v2603
      %v2605 = vrot.slane %v1391, 3
      %v2606 = vsel %vm2557, %v2603, %v2605
      %v2607 = vrot.slane %v1396, 3
      %v2608 = vrot.slane %v1402, 3
      %v2609 = vsel %vm2557, %v2607, %v2608
      %v2610 = vrot.slane %v1408, 3
      %v2611 = vsel %vm2557, %v2608, %v2610
      %v2612 = vrot.slane %v1414, 3
      %v2613 = vsel %vm2557, %v2610, %v2612
      %v2638 = vadd.f32 %v2501, %v2560
      %v2639 = vadd.f32 %v2502, %v2562
      %v2640 = vadd.f32 %v2503, %v2564
      %v2641 = vadd.f32 %v2504, %v2567
      %v2642 = vadd.f32 %v2505, %v2569
      %v2643 = vadd.f32 %v2506, %v2571
      %v2644 = vadd.f32 %v2507, %v2574
      %v2645 = vadd.f32 %v2508, %v2576
      %v2646 = vadd.f32 %v2509, %v2578
      %v2647 = vadd.f32 %v2510, %v2581
      %v2648 = vadd.f32 %v2511, %v2583
      %v2649 = vadd.f32 %v2512, %v2585
      %v2650 = vadd.f32 %v2513, %v2588
      %v2651 = vadd.f32 %v2514, %v2590
      %v2652 = vadd.f32 %v2515, %v2592
      %v2653 = vadd.f32 %v2516, %v2595
      %v2654 = vadd.f32 %v2517, %v2597
      %v2655 = vadd.f32 %v2518, %v2599
      %v2656 = vadd.f32 %v2519, %v2602
      %v2657 = vadd.f32 %v2520, %v2604
      %v2658 = vadd.f32 %v2521, %v2606
      %v2659 = vadd.f32 %v2522, %v2609
      %v2660 = vadd.f32 %v2523, %v2611
      %v2661 = vadd.f32 %v2524, %v2613
      %v2662 = vrot.slane %v1915, 1
      %v2663 = vlaneseq
      %v2664 = vshrl.u32 %v2663, 7
      %v2665 = vsub.s32 0, %v2664
      %v2666 = vrot.slane %v2662, %v2665
      %v2668 = vadd.f32 %v2638, %v2666
      %v2669 = vadd.f32 %v2639, %v2666
      %v2670 = vadd.f32 %v2640, %v2666
      %v2671 = vadd.f32 %v2641, %v2666
      %v2672 = vadd.f32 %v2642, %v2666
      %v2673 = vadd.f32 %v2643, %v2666
      %v2674 = vadd.f32 %v2644, %v2666
      %v2675 = vadd.f32 %v2645, %v2666
      %v2676 = vadd.f32 %v2646, %v2666
      %v2677 = vadd.f32 %v2647, %v2666
      %v2678 = vadd.f32 %v2648, %v2666
      %v2679 = vadd.f32 %v2649, %v2666
      %v2680 = vadd.f32 %v2650, %v2666
      %v2681 = vadd.f32 %v2651, %v2666
      %v2682 = vadd.f32 %v2652, %v2666
      %v2683 = vadd.f32 %v2653, %v2666
      %v2684 = vadd.f32 %v2654, %v2666
      %v2685 = vadd.f32 %v2655, %v2666
      %v2686 = vadd.f32 %v2656, %v2666
      %v2687 = vadd.f32 %v2657, %v2666
      %v2688 = vadd.f32 %v2658, %v2666
      %v2689 = vadd.f32 %v2659, %v2666
      %v2690 = vadd.f32 %v2660, %v2666
      %v2691 = vadd.f32 %v2661, %v2666
      %v2692 = vmax.f32 %v2668, 0.0
      %v2693 = vmax.f32 %v2669, 0.0
      %v2694 = vmax.f32 %v2670, 0.0
      %v2695 = vmax.f32 %v2671, 0.0
      %v2696 = vmax.f32 %v2672, 0.0
      %v2697 = vmax.f32 %v2673, 0.0
      %v2698 = vmax.f32 %v2674, 0.0
      %v2699 = vmax.f32 %v2675, 0.0
      %v2700 = vmax.f32 %v2676, 0.0
      %v2701 = vmax.f32 %v2677, 0.0
      %v2702 = vmax.f32 %v2678, 0.0
      %v2703 = vmax.f32 %v2679, 0.0
      %v2704 = vmax.f32 %v2680, 0.0
      %v2705 = vmax.f32 %v2681, 0.0
      %v2706 = vmax.f32 %v2682, 0.0
      %v2707 = vmax.f32 %v2683, 0.0
      %v2708 = vmax.f32 %v2684, 0.0
      %v2709 = vmax.f32 %v2685, 0.0
      %v2710 = vmax.f32 %v2686, 0.0
      %v2711 = vmax.f32 %v2687, 0.0
      %v2712 = vmax.f32 %v2688, 0.0
      %v2713 = vmax.f32 %v2689, 0.0
      %v2714 = vmax.f32 %v2690, 0.0
      %v2715 = vmax.f32 %v2691, 0.0
      %vm2716 = vcmask 1047553
      %v2717 = vsel %vm2716, %v2692, -inf
      %v2718 = vmax.f32 %v2717, %v2693
      %v2719 = vsel %vm2053, %v2694, -inf
      %v2720 = vmax.f32 %v2718, %v2719
      %v2721 = vrot.slane %v2720, 4
      %v2722 = vmax.f32 %v2720, %v2721
      %v2723 = vrot.slane %v2722, 2
      %v2724 = vmax.f32 %v2722, %v2723
      %v2725 = vrot.slane %v2724, 1
      %v2726 = vmax.f32 %v2724, %v2725
      %v2727 = vsel %vm2716, %v2695, -inf
      %v2728 = vmax.f32 %v2727, %v2696
      %v2729 = vsel %vm2053, %v2697, -inf
      %v2730 = vmax.f32 %v2728, %v2729
      %v2731 = vrot.slane %v2730, 4
      %v2732 = vmax.f32 %v2730, %v2731
      %v2733 = vrot.slane %v2732, 2
      %v2734 = vmax.f32 %v2732, %v2733
      %v2735 = vrot.slane %v2734, 1
      %v2736 = vmax.f32 %v2734, %v2735
      %v2737 = vsel %vm2716, %v2698, -inf
      %v2738 = vmax.f32 %v2737, %v2699
      %v2739 = vsel %vm2053, %v2700, -inf
      %v2740 = vmax.f32 %v2738, %v2739
      %v2741 = vrot.slane %v2740, 4
      %v2742 = vmax.f32 %v2740, %v2741
      %v2743 = vrot.slane %v2742, 2
      %v2744 = vmax.f32 %v2742, %v2743
      %v2745 = vrot.slane %v2744, 1
      %v2746 = vmax.f32 %v2744, %v2745
      %v2747 = vsel %vm2716, %v2701, -inf
      %v2748 = vmax.f32 %v2747, %v2702
      %v2749 = vsel %vm2053, %v2703, -inf
      %v2750 = vmax.f32 %v2748, %v2749
      %v2751 = vrot.slane %v2750, 4
      %v2752 = vmax.f32 %v2750, %v2751
      %v2753 = vrot.slane %v2752, 2
      %v2754 = vmax.f32 %v2752, %v2753
      %v2755 = vrot.slane %v2754, 1
      %v2756 = vmax.f32 %v2754, %v2755
      %v2757 = vsel %vm2716, %v2704, -inf
      %v2758 = vmax.f32 %v2757, %v2705
      %v2759 = vsel %vm2053, %v2706, -inf
      %v2760 = vmax.f32 %v2758, %v2759
      %v2761 = vrot.slane %v2760, 4
      %v2762 = vmax.f32 %v2760, %v2761
      %v2763 = vrot.slane %v2762, 2
      %v2764 = vmax.f32 %v2762, %v2763
      %v2765 = vrot.slane %v2764, 1
      %v2766 = vmax.f32 %v2764, %v2765
      %v2767 = vsel %vm2716, %v2707, -inf
      %v2768 = vmax.f32 %v2767, %v2708
      %v2769 = vsel %vm2053, %v2709, -inf
      %v2770 = vmax.f32 %v2768, %v2769
      %v2771 = vrot.slane %v2770, 4
      %v2772 = vmax.f32 %v2770, %v2771
      %v2773 = vrot.slane %v2772, 2
      %v2774 = vmax.f32 %v2772, %v2773
      %v2775 = vrot.slane %v2774, 1
      %v2776 = vmax.f32 %v2774, %v2775
      %v2777 = vsel %vm2716, %v2710, -inf
      %v2778 = vmax.f32 %v2777, %v2711
      %v2779 = vsel %vm2053, %v2712, -inf
      %v2780 = vmax.f32 %v2778, %v2779
      %v2781 = vrot.slane %v2780, 4
      %v2782 = vmax.f32 %v2780, %v2781
      %v2783 = vrot.slane %v2782, 2
      %v2784 = vmax.f32 %v2782, %v2783
      %v2785 = vrot.slane %v2784, 1
      %v2786 = vmax.f32 %v2784, %v2785
      %v2787 = vsel %vm2716, %v2713, -inf
      %v2788 = vmax.f32 %v2787, %v2714
      %v2789 = vsel %vm2053, %v2715, -inf
      %v2790 = vmax.f32 %v2788, %v2789
      %v2791 = vrot.slane %v2790, 4
      %v2792 = vmax.f32 %v2790, %v2791
      %v2793 = vrot.slane %v2792, 2
      %v2794 = vmax.f32 %v2792, %v2793
      %v2795 = vrot.slane %v2794, 1
      %v2796 = vmax.f32 %v2794, %v2795
      %v2805 = vsel %vm2285, %v2736, %v2726
      %v2806 = vsel %vm2287, %v2746, %v2805
      %v2807 = vsel %vm2289, %v2756, %v2806
      %v2808 = vsel %vm2291, %v2766, %v2807
      %v2809 = vsel %vm2293, %v2776, %v2808
      %v2810 = vsel %vm2295, %v2786, %v2809
      %v2811 = vsel %vm2297, %v2796, %v2810
      %2813 = vst [vmem:[#allocation3 + $0x8] sm:$0xff] %v2811
      %v2838 = vrot.slane %v1484, 1
      %v2839 = vrot.slane %v1490, 1
      %v2840 = vsel %vm1940, %v2838, %v2839
      %v2841 = vrot.slane %v1496, 1
      %v2842 = vsel %vm1940, %v2839, %v2841
      %v2843 = vrot.slane %v1506, 1
      %v2844 = vrot.slane %v1512, 1
      %v2845 = vsel %vm1940, %v2843, %v2844
      %v2846 = vrot.slane %v1518, 1
      %v2847 = vsel %vm1940, %v2844, %v2846
      %v2848 = vrot.slane %v1528, 1
      %v2849 = vrot.slane %v1534, 1
      %v2850 = vsel %vm1940, %v2848, %v2849
      %v2851 = vrot.slane %v1540, 1
      %v2852 = vsel %vm1940, %v2849, %v2851
      %v2853 = vrot.slane %v1550, 1
      %v2854 = vrot.slane %v1556, 1
      %v2855 = vsel %vm1940, %v2853, %v2854
      %v2856 = vrot.slane %v1562, 1
      %v2857 = vsel %vm1940, %v2854, %v2856
      %v2858 = vrot.slane %v1572, 1
      %v2859 = vrot.slane %v1578, 1
      %v2860 = vsel %vm1940, %v2858, %v2859
      %v2861 = vrot.slane %v1584, 1
      %v2862 = vsel %vm1940, %v2859, %v2861
      %v2863 = vrot.slane %v1594, 1
      %v2864 = vrot.slane %v1600, 1
      %v2865 = vsel %vm1940, %v2863, %v2864
      %v2866 = vrot.slane %v1606, 1
      %v2867 = vsel %vm1940, %v2864, %v2866
      %v2868 = vrot.slane %v1616, 1
      %v2869 = vrot.slane %v1622, 1
      %v2870 = vsel %vm1940, %v2868, %v2869
      %v2871 = vrot.slane %v1628, 1
      %v2872 = vsel %vm1940, %v2869, %v2871
      %v2873 = vrot.slane %v1638, 1
      %v2874 = vrot.slane %v1644, 1
      %v2875 = vsel %vm1940, %v2873, %v2874
      %v2876 = vrot.slane %v1650, 1
      %v2877 = vsel %vm1940, %v2874, %v2876
      %v2902 = vadd.f32 %v1237, %v2840
      %v2903 = vadd.f32 %v1243, %v2842
      %v2904 = vadd.f32 %v1249, %v2841
      %v2905 = vadd.f32 %v1260, %v2845
      %v2906 = vadd.f32 %v1266, %v2847
      %v2907 = vadd.f32 %v1272, %v2846
      %v2908 = vadd.f32 %v1283, %v2850
      %v2909 = vadd.f32 %v1289, %v2852
      %v2910 = vadd.f32 %v1295, %v2851
      %v2911 = vadd.f32 %v1306, %v2855
      %v2912 = vadd.f32 %v1312, %v2857
      %v2913 = vadd.f32 %v1318, %v2856
      %v2914 = vadd.f32 %v1329, %v2860
      %v2915 = vadd.f32 %v1335, %v2862
      %v2916 = vadd.f32 %v1341, %v2861
      %v2917 = vadd.f32 %v1352, %v2865
      %v2918 = vadd.f32 %v1358, %v2867
      %v2919 = vadd.f32 %v1364, %v2866
      %v2920 = vadd.f32 %v1375, %v2870
      %v2921 = vadd.f32 %v1381, %v2872
      %v2922 = vadd.f32 %v1387, %v2871
      %v2923 = vadd.f32 %v1398, %v2875
      %v2924 = vadd.f32 %v1404, %v2877
      %v2925 = vadd.f32 %v1410, %v2876
      %v2950 = vrot.slane %v1486, 2
      %v2951 = vrot.slane %v1492, 2
      %v2952 = vsel %vm2053, %v2950, %v2951
      %v2953 = vrot.slane %v1498, 2
      %v2954 = vsel %vm2053, %v2951, %v2953
      %v2955 = vrot.slane %v1508, 2
      %v2956 = vrot.slane %v1514, 2
      %v2957 = vsel %vm2053, %v2955, %v2956
      %v2958 = vrot.slane %v1520, 2
      %v2959 = vsel %vm2053, %v2956, %v2958
      %v2960 = vrot.slane %v1530, 2
      %v2961 = vrot.slane %v1536, 2
      %v2962 = vsel %vm2053, %v2960, %v2961
      %v2963 = vrot.slane %v1542, 2
      %v2964 = vsel %vm2053, %v2961, %v2963
      %v2965 = vrot.slane %v1552, 2
      %v2966 = vrot.slane %v1558, 2
      %v2967 = vsel %vm2053, %v2965, %v2966
      %v2968 = vrot.slane %v1564, 2
      %v2969 = vsel %vm2053, %v2966, %v2968
      %v2970 = vrot.slane %v1574, 2
      %v2971 = vrot.slane %v1580, 2
      %v2972 = vsel %vm2053, %v2970, %v2971
      %v2973 = vrot.slane %v1586, 2
      %v2974 = vsel %vm2053, %v2971, %v2973
      %v2975 = vrot.slane %v1596, 2
      %v2976 = vrot.slane %v1602, 2
      %v2977 = vsel %vm2053, %v2975, %v2976
      %v2978 = vrot.slane %v1608, 2
      %v2979 = vsel %vm2053, %v2976, %v2978
      %v2980 = vrot.slane %v1618, 2
      %v2981 = vrot.slane %v1624, 2
      %v2982 = vsel %vm2053, %v2980, %v2981
      %v2983 = vrot.slane %v1630, 2
      %v2984 = vsel %vm2053, %v2981, %v2983
      %v2985 = vrot.slane %v1640, 2
      %v2986 = vrot.slane %v1646, 2
      %v2987 = vsel %vm2053, %v2985, %v2986
      %v2988 = vrot.slane %v1652, 2
      %v2989 = vsel %vm2053, %v2986, %v2988
      %v3014 = vadd.f32 %v2902, %v2952
      %v3015 = vadd.f32 %v2903, %v2954
      %v3016 = vadd.f32 %v2904, %v2953
      %v3017 = vadd.f32 %v2905, %v2957
      %v3018 = vadd.f32 %v2906, %v2959
      %v3019 = vadd.f32 %v2907, %v2958
      %v3020 = vadd.f32 %v2908, %v2962
      %v3021 = vadd.f32 %v2909, %v2964
      %v3022 = vadd.f32 %v2910, %v2963
      %v3023 = vadd.f32 %v2911, %v2967
      %v3024 = vadd.f32 %v2912, %v2969
      %v3025 = vadd.f32 %v2913, %v2968
      %v3026 = vadd.f32 %v2914, %v2972
      %v3027 = vadd.f32 %v2915, %v2974
      %v3028 = vadd.f32 %v2916, %v2973
      %v3029 = vadd.f32 %v2917, %v2977
      %v3030 = vadd.f32 %v2918, %v2979
      %v3031 = vadd.f32 %v2919, %v2978
      %v3032 = vadd.f32 %v2920, %v2982
      %v3033 = vadd.f32 %v2921, %v2984
      %v3034 = vadd.f32 %v2922, %v2983
      %v3035 = vadd.f32 %v2923, %v2987
      %v3036 = vadd.f32 %v2924, %v2989
      %v3037 = vadd.f32 %v2925, %v2988
      %v3070 = vrot.slane %v1725, 3
      %v3071 = vrot.slane %v1731, 3
      %v3072 = vsel %vm2557, %v3070, %v3071
      %v3073 = vrot.slane %v1737, 3
      %v3074 = vsel %vm2557, %v3071, %v3073
      %v3075 = vrot.slane %v1743, 3
      %v3076 = vsel %vm2557, %v3073, %v3075
      %v3077 = vrot.slane %v1749, 3
      %v3078 = vrot.slane %v1755, 3
      %v3079 = vsel %vm2557, %v3077, %v3078
      %v3080 = vrot.slane %v1761, 3
      %v3081 = vsel %vm2557, %v3078, %v3080
      %v3082 = vrot.slane %v1767, 3
      %v3083 = vsel %vm2557, %v3080, %v3082
      %v3084 = vrot.slane %v1773, 3
      %v3085 = vrot.slane %v1779, 3
      %v3086 = vsel %vm2557, %v3084, %v3085
      %v3087 = vrot.slane %v1785, 3
      %v3088 = vsel %vm2557, %v3085, %v3087
      %v3089 = vrot.slane %v1791, 3
      %v3090 = vsel %vm2557, %v3087, %v3089
      %v3091 = vrot.slane %v1797, 3
      %v3092 = vrot.slane %v1803, 3
      %v3093 = vsel %vm2557, %v3091, %v3092
      %v3094 = vrot.slane %v1809, 3
      %v3095 = vsel %vm2557, %v3092, %v3094
      %v3096 = vrot.slane %v1815, 3
      %v3097 = vsel %vm2557, %v3094, %v3096
      %v3098 = vrot.slane %v1821, 3
      %v3099 = vrot.slane %v1827, 3
      %v3100 = vsel %vm2557, %v3098, %v3099
      %v3101 = vrot.slane %v1833, 3
      %v3102 = vsel %vm2557, %v3099, %v3101
      %v3103 = vrot.slane %v1839, 3
      %v3104 = vsel %vm2557, %v3101, %v3103
      %v3105 = vrot.slane %v1845, 3
      %v3106 = vrot.slane %v1851, 3
      %v3107 = vsel %vm2557, %v3105, %v3106
      %v3108 = vrot.slane %v1857, 3
      %v3109 = vsel %vm2557, %v3106, %v3108
      %v3110 = vrot.slane %v1863, 3
      %v3111 = vsel %vm2557, %v3108, %v3110
      %v3112 = vrot.slane %v1869, 3
      %v3113 = vrot.slane %v1875, 3
      %v3114 = vsel %vm2557, %v3112, %v3113
      %v3115 = vrot.slane %v1881, 3
      %v3116 = vsel %vm2557, %v3113, %v3115
      %v3117 = vrot.slane %v1887, 3
      %v3118 = vsel %vm2557, %v3115, %v3117
      %v3119 = vrot.slane %v1893, 3
      %v3120 = vrot.slane %v1899, 3
      %v3121 = vsel %vm2557, %v3119, %v3120
      %v3122 = vrot.slane %v1905, 3
      %v3123 = vsel %vm2557, %v3120, %v3122
      %v3124 = vrot.slane %v1911, 3
      %v3125 = vsel %vm2557, %v3122, %v3124
      %v3150 = vadd.f32 %v3014, %v3072
      %v3151 = vadd.f32 %v3015, %v3074
      %v3152 = vadd.f32 %v3016, %v3076
      %v3153 = vadd.f32 %v3017, %v3079
      %v3154 = vadd.f32 %v3018, %v3081
      %v3155 = vadd.f32 %v3019, %v3083
      %v3156 = vadd.f32 %v3020, %v3086
      %v3157 = vadd.f32 %v3021, %v3088
      %v3158 = vadd.f32 %v3022, %v3090
      %v3159 = vadd.f32 %v3023, %v3093
      %v3160 = vadd.f32 %v3024, %v3095
      %v3161 = vadd.f32 %v3025, %v3097
      %v3162 = vadd.f32 %v3026, %v3100
      %v3163 = vadd.f32 %v3027, %v3102
      %v3164 = vadd.f32 %v3028, %v3104
      %v3165 = vadd.f32 %v3029, %v3107
      %v3166 = vadd.f32 %v3030, %v3109
      %v3167 = vadd.f32 %v3031, %v3111
      %v3168 = vadd.f32 %v3032, %v3114
      %v3169 = vadd.f32 %v3033, %v3116
      %v3170 = vadd.f32 %v3034, %v3118
      %v3171 = vadd.f32 %v3035, %v3121
      %v3172 = vadd.f32 %v3036, %v3123
      %v3173 = vadd.f32 %v3037, %v3125
      %vm3206 = vcmask 1043456
      %v3207 = vrot.slane %v1727, 4
      %v3208 = vrot.slane %v1733, 4
      %v3209 = vsel %vm3206, %v3207, %v3208
      %v3210 = vrot.slane %v1739, 4
      %v3211 = vsel %vm3206, %v3208, %v3210
      %v3212 = vrot.slane %v1745, 4
      %v3213 = vsel %vm3206, %v3210, %v3212
      %v3214 = vrot.slane %v1751, 4
      %v3215 = vrot.slane %v1757, 4
      %v3216 = vsel %vm3206, %v3214, %v3215
      %v3217 = vrot.slane %v1763, 4
      %v3218 = vsel %vm3206, %v3215, %v3217
      %v3219 = vrot.slane %v1769, 4
      %v3220 = vsel %vm3206, %v3217, %v3219
      %v3221 = vrot.slane %v1775, 4
      %v3222 = vrot.slane %v1781, 4
      %v3223 = vsel %vm3206, %v3221, %v3222
      %v3224 = vrot.slane %v1787, 4
      %v3225 = vsel %vm3206, %v3222, %v3224
      %v3226 = vrot.slane %v1793, 4
      %v3227 = vsel %vm3206, %v3224, %v3226
      %v3228 = vrot.slane %v1799, 4
      %v3229 = vrot.slane %v1805, 4
      %v3230 = vsel %vm3206, %v3228, %v3229
      %v3231 = vrot.slane %v1811, 4
      %v3232 = vsel %vm3206, %v3229, %v3231
      %v3233 = vrot.slane %v1817, 4
      %v3234 = vsel %vm3206, %v3231, %v3233
      %v3235 = vrot.slane %v1823, 4
      %v3236 = vrot.slane %v1829, 4
      %v3237 = vsel %vm3206, %v3235, %v3236
      %v3238 = vrot.slane %v1835, 4
      %v3239 = vsel %vm3206, %v3236, %v3238
      %v3240 = vrot.slane %v1841, 4
      %v3241 = vsel %vm3206, %v3238, %v3240
      %v3242 = vrot.slane %v1847, 4
      %v3243 = vrot.slane %v1853, 4
      %v3244 = vsel %vm3206, %v3242, %v3243
      %v3245 = vrot.slane %v1859, 4
      %v3246 = vsel %vm3206, %v3243, %v3245
      %v3247 = vrot.slane %v1865, 4
      %v3248 = vsel %vm3206, %v3245, %v3247
      %v3249 = vrot.slane %v1871, 4
      %v3250 = vrot.slane %v1877, 4
      %v3251 = vsel %vm3206, %v3249, %v3250
      %v3252 = vrot.slane %v1883, 4
      %v3253 = vsel %vm3206, %v3250, %v3252
      %v3254 = vrot.slane %v1889, 4
      %v3255 = vsel %vm3206, %v3252, %v3254
      %v3256 = vrot.slane %v1895, 4
      %v3257 = vrot.slane %v1901, 4
      %v3258 = vsel %vm3206, %v3256, %v3257
      %v3259 = vrot.slane %v1907, 4
      %v3260 = vsel %vm3206, %v3257, %v3259
      %v3261 = vrot.slane %v1913, 4
      %v3262 = vsel %vm3206, %v3259, %v3261
      %v3287 = vadd.f32 %v3150, %v3209
      %v3288 = vadd.f32 %v3151, %v3211
      %v3289 = vadd.f32 %v3152, %v3213
      %v3290 = vadd.f32 %v3153, %v3216
      %v3291 = vadd.f32 %v3154, %v3218
      %v3292 = vadd.f32 %v3155, %v3220
      %v3293 = vadd.f32 %v3156, %v3223
      %v3294 = vadd.f32 %v3157, %v3225
      %v3295 = vadd.f32 %v3158, %v3227
      %v3296 = vadd.f32 %v3159, %v3230
      %v3297 = vadd.f32 %v3160, %v3232
      %v3298 = vadd.f32 %v3161, %v3234
      %v3299 = vadd.f32 %v3162, %v3237
      %v3300 = vadd.f32 %v3163, %v3239
      %v3301 = vadd.f32 %v3164, %v3241
      %v3302 = vadd.f32 %v3165, %v3244
      %v3303 = vadd.f32 %v3166, %v3246
      %v3304 = vadd.f32 %v3167, %v3248
      %v3305 = vadd.f32 %v3168, %v3251
      %v3306 = vadd.f32 %v3169, %v3253
      %v3307 = vadd.f32 %v3170, %v3255
      %v3308 = vadd.f32 %v3171, %v3258
      %v3309 = vadd.f32 %v3172, %v3260
      %v3310 = vadd.f32 %v3173, %v3262
      %v3311 = vrot.slane %v1915, 2
      %v3312 = vlaneseq
      %v3313 = vshrl.u32 %v3312, 7
      %v3314 = vsub.s32 0, %v3313
      %v3315 = vrot.slane %v3311, %v3314
      %v3317 = vadd.f32 %v3287, %v3315
      %v3318 = vadd.f32 %v3288, %v3315
      %v3319 = vadd.f32 %v3289, %v3315
      %v3320 = vadd.f32 %v3290, %v3315
      %v3321 = vadd.f32 %v3291, %v3315
      %v3322 = vadd.f32 %v3292, %v3315
      %v3323 = vadd.f32 %v3293, %v3315
      %v3324 = vadd.f32 %v3294, %v3315
      %v3325 = vadd.f32 %v3295, %v3315
      %v3326 = vadd.f32 %v3296, %v3315
      %v3327 = vadd.f32 %v3297, %v3315
      %v3328 = vadd.f32 %v3298, %v3315
      %v3329 = vadd.f32 %v3299, %v3315
      %v3330 = vadd.f32 %v3300, %v3315
      %v3331 = vadd.f32 %v3301, %v3315
      %v3332 = vadd.f32 %v3302, %v3315
      %v3333 = vadd.f32 %v3303, %v3315
      %v3334 = vadd.f32 %v3304, %v3315
      %v3335 = vadd.f32 %v3305, %v3315
      %v3336 = vadd.f32 %v3306, %v3315
      %v3337 = vadd.f32 %v3307, %v3315
      %v3338 = vadd.f32 %v3308, %v3315
      %v3339 = vadd.f32 %v3309, %v3315
      %v3340 = vadd.f32 %v3310, %v3315
      %v3341 = vmax.f32 %v3317, 0.0
      %v3342 = vmax.f32 %v3318, 0.0
      %v3343 = vmax.f32 %v3319, 0.0
      %v3344 = vmax.f32 %v3320, 0.0
      %v3345 = vmax.f32 %v3321, 0.0
      %v3346 = vmax.f32 %v3322, 0.0
      %v3347 = vmax.f32 %v3323, 0.0
      %v3348 = vmax.f32 %v3324, 0.0
      %v3349 = vmax.f32 %v3325, 0.0
      %v3350 = vmax.f32 %v3326, 0.0
      %v3351 = vmax.f32 %v3327, 0.0
      %v3352 = vmax.f32 %v3328, 0.0
      %v3353 = vmax.f32 %v3329, 0.0
      %v3354 = vmax.f32 %v3330, 0.0
      %v3355 = vmax.f32 %v3331, 0.0
      %v3356 = vmax.f32 %v3332, 0.0
      %v3357 = vmax.f32 %v3333, 0.0
      %v3358 = vmax.f32 %v3334, 0.0
      %v3359 = vmax.f32 %v3335, 0.0
      %v3360 = vmax.f32 %v3336, 0.0
      %v3361 = vmax.f32 %v3337, 0.0
      %v3362 = vmax.f32 %v3338, 0.0
      %v3363 = vmax.f32 %v3339, 0.0
      %v3364 = vmax.f32 %v3340, 0.0
      %v3365 = vmax.f32 %v3341, %v3342
      %v3366 = vsel %vm2053, %v3343, -inf
      %v3367 = vmax.f32 %v3365, %v3366
      %v3368 = vrot.slane %v3367, 4
      %v3369 = vmax.f32 %v3367, %v3368
      %v3370 = vrot.slane %v3369, 2
      %v3371 = vmax.f32 %v3369, %v3370
      %v3372 = vrot.slane %v3371, 1
      %v3373 = vmax.f32 %v3371, %v3372
      %v3374 = vmax.f32 %v3344, %v3345
      %v3375 = vsel %vm2053, %v3346, -inf
      %v3376 = vmax.f32 %v3374, %v3375
      %v3377 = vrot.slane %v3376, 4
      %v3378 = vmax.f32 %v3376, %v3377
      %v3379 = vrot.slane %v3378, 2
      %v3380 = vmax.f32 %v3378, %v3379
      %v3381 = vrot.slane %v3380, 1
      %v3382 = vmax.f32 %v3380, %v3381
      %v3383 = vmax.f32 %v3347, %v3348
      %v3384 = vsel %vm2053, %v3349, -inf
      %v3385 = vmax.f32 %v3383, %v3384
      %v3386 = vrot.slane %v3385, 4
      %v3387 = vmax.f32 %v3385, %v3386
      %v3388 = vrot.slane %v3387, 2
      %v3389 = vmax.f32 %v3387, %v3388
      %v3390 = vrot.slane %v3389, 1
      %v3391 = vmax.f32 %v3389, %v3390
      %v3392 = vmax.f32 %v3350, %v3351
      %v3393 = vsel %vm2053, %v3352, -inf
      %v3394 = vmax.f32 %v3392, %v3393
      %v3395 = vrot.slane %v3394, 4
      %v3396 = vmax.f32 %v3394, %v3395
      %v3397 = vrot.slane %v3396, 2
      %v3398 = vmax.f32 %v3396, %v3397
      %v3399 = vrot.slane %v3398, 1
      %v3400 = vmax.f32 %v3398, %v3399
      %v3401 = vmax.f32 %v3353, %v3354
      %v3402 = vsel %vm2053, %v3355, -inf
      %v3403 = vmax.f32 %v3401, %v3402
      %v3404 = vrot.slane %v3403, 4
      %v3405 = vmax.f32 %v3403, %v3404
      %v3406 = vrot.slane %v3405, 2
      %v3407 = vmax.f32 %v3405, %v3406
      %v3408 = vrot.slane %v3407, 1
      %v3409 = vmax.f32 %v3407, %v3408
      %v3410 = vmax.f32 %v3356, %v3357
      %v3411 = vsel %vm2053, %v3358, -inf
      %v3412 = vmax.f32 %v3410, %v3411
      %v3413 = vrot.slane %v3412, 4
      %v3414 = vmax.f32 %v3412, %v3413
      %v3415 = vrot.slane %v3414, 2
      %v3416 = vmax.f32 %v3414, %v3415
      %v3417 = vrot.slane %v3416, 1
      %v3418 = vmax.f32 %v3416, %v3417
      %v3419 = vmax.f32 %v3359, %v3360
      %v3420 = vsel %vm2053, %v3361, -inf
      %v3421 = vmax.f32 %v3419, %v3420
      %v3422 = vrot.slane %v3421, 4
      %v3423 = vmax.f32 %v3421, %v3422
      %v3424 = vrot.slane %v3423, 2
      %v3425 = vmax.f32 %v3423, %v3424
      %v3426 = vrot.slane %v3425, 1
      %v3427 = vmax.f32 %v3425, %v3426
      %v3428 = vmax.f32 %v3362, %v3363
      %v3429 = vsel %vm2053, %v3364, -inf
      %v3430 = vmax.f32 %v3428, %v3429
      %v3431 = vrot.slane %v3430, 4
      %v3432 = vmax.f32 %v3430, %v3431
      %v3433 = vrot.slane %v3432, 2
      %v3434 = vmax.f32 %v3432, %v3433
      %v3435 = vrot.slane %v3434, 1
      %v3436 = vmax.f32 %v3434, %v3435
      %v3445 = vsel %vm2285, %v3382, %v3373
      %v3446 = vsel %vm2287, %v3391, %v3445
      %v3447 = vsel %vm2289, %v3400, %v3446
      %v3448 = vsel %vm2291, %v3409, %v3447
      %v3449 = vsel %vm2293, %v3418, %v3448
      %v3450 = vsel %vm2295, %v3427, %v3449
      %v3451 = vsel %vm2297, %v3436, %v3450
      %3453 = vst [vmem:[#allocation3 + $0x10] sm:$0xff] %v3451
      %v3454 = vld [vmem:[#allocation3] sm:$0xff]
      %v3455 = vld [vmem:[#allocation3 + $0x8] sm:$0xff]
      %v3456 = vld [vmem:[#allocation3 + $0x10] sm:$0xff]
      %v3457 = vld [vmem:[%s3] sm:$0xff]
      %v3458 = vld [vmem:[%s3 + $0x8] sm:$0xff]
      %v3459 = vld [vmem:[%s3 + $0x10] sm:$0xff]
      %v3460 = vld [vmem:[%s3 + $0x18] sm:$0xff]
      %v3461 = vld [vmem:[%s3 + $0x20] sm:$0xff]
      %v3462 = vld [vmem:[%s3 + $0x28] sm:$0xff]
      %v3463 = vld [vmem:[%s3 + $0x30] sm:$0xff]
      %v3464 = vld [vmem:[%s3 + $0x38] sm:$0xff]
      %v3465 = vld [vmem:[%s3 + $0x40] sm:$0xff]
      %v3466 = vld [vmem:[%s3 + $0x48] sm:$0xff]
      %v3467 = vld [vmem:[%s3 + $0x50] sm:$0xff]
      %v3468 = vld [vmem:[%s3 + $0x58] sm:$0xff]
      %v3469 = vld [vmem:[%s3 + $0x60] sm:$0xff]
      %v3470 = vld [vmem:[%s3 + $0x68] sm:$0xff]
      %v3471 = vld [vmem:[%s3 + $0x70] sm:$0xff]
      %v3472 = vld [vmem:[%s3 + $0x78] sm:$0xff]
      %v3473 = vld [vmem:[%s3 + $0x80] sm:$0xff]
      %v3474 = vld [vmem:[%s3 + $0x88] sm:$0xff]
      %v3475 = vld [vmem:[%s3 + $0x90] sm:$0xff]
      %v3476 = vld [vmem:[%s3 + $0x98] sm:$0xff]
      %v3477 = vld [vmem:[%s3 + $0xa0] sm:$0xff]
      %v3478 = vld [vmem:[%s3 + $0xa8] sm:$0xff]
      %v3479 = vld [vmem:[%s3 + $0xb0] sm:$0xff]
      %v3480 = vld [vmem:[%s3 + $0xb8] sm:$0xff]
      %v3481 = vld [vmem:[%s3 + $0xc0] sm:$0xff]
      %v3482 = vld [vmem:[%s3 + $0xc8] sm:$0xff]
      %v3483 = vld [vmem:[%s3 + $0xd0] sm:$0xff]
      %v3484 = vld [vmem:[%s3 + $0xd8] sm:$0xff]
      %v3485 = vld [vmem:[%s3 + $0xe0] sm:$0xff]
      %v3486 = vld [vmem:[%s3 + $0xe8] sm:$0xff]
      %v3487 = vld [vmem:[%s3 + $0xf0] sm:$0xff]
      %v3488 = vld [vmem:[%s3 + $0xf8] sm:$0xff]
      %v3489 = vld [vmem:[%s3 + $0x100] sm:$0xff]
      %v3490 = vld [vmem:[%s3 + $0x108] sm:$0xff]
      %v3491 = vld [vmem:[%s3 + $0x110] sm:$0xff]
      %v3492 = vld [vmem:[%s3 + $0x118] sm:$0xff]
      %v3493 = vld [vmem:[%s3 + $0x120] sm:$0xff]
      %v3494 = vld [vmem:[%s3 + $0x128] sm:$0xff]
      %v3495 = vld [vmem:[%s3 + $0x130] sm:$0xff]
      %v3496 = vld [vmem:[%s3 + $0x138] sm:$0xff]
      %v3497 = vld [vmem:[%s3 + $0x140] sm:$0xff]
      %v3498 = vld [vmem:[%s3 + $0x148] sm:$0xff]
      %v3499 = vld [vmem:[%s3 + $0x150] sm:$0xff]
      %v3500 = vld [vmem:[%s3 + $0x158] sm:$0xff]
      %v3501 = vld [vmem:[%s3 + $0x160] sm:$0xff]
      %v3502 = vld [vmem:[%s3 + $0x168] sm:$0xff]
      %v3503 = vld [vmem:[%s3 + $0x170] sm:$0xff]
      %v3504 = vld [vmem:[%s3 + $0x178] sm:$0xff]
      %v3505 = vld [vmem:[%s4] sm:$0x1]
      %v3507 = vlaneseq
      %v3508 = vshrl.u32 %v3507, 7
      %v3509 = vsub.s32 0, %v3508
      %v3510 = vrot.slane %v3505, %v3509
      %3512 = vmatprep.subr.mxu0 0.0
      %3513 = vmatpush1.msra.mxu0 %v3472
      %3514 = vmatprep.subr.mxu0 0.0
      %3515 = vmatpush1.msra.mxu0 %v3471
      %3516 = vmatprep.subr.mxu0 0.0
      %3517 = vmatpush1.msra.mxu0 %v3470
      %3518 = vmatprep.subr.mxu0 0.0
      %3519 = vmatpush1.msra.mxu0 %v3469
      %3520 = vmatprep.subr.mxu0 0.0
      %3521 = vmatpush1.msra.mxu0 %v3468
      %3522 = vmatprep.subr.mxu0 0.0
      %3523 = vmatpush1.msra.mxu0 %v3467
      %3524 = vmatprep.subr.mxu0 0.0
      %3525 = vmatpush1.msra.mxu0 %v3466
      %3526 = vmatprep.subr.mxu0 0.0
      %3527 = vmatpush1.msra.mxu0 %v3465
      %3528 = vmatprep.subr.mxu0 0.0
      %3529 = vmatpush1.msra.mxu0 %v3464
      %3530 = vmatprep.subr.mxu0 0.0
      %3531 = vmatpush1.msra.mxu0 %v3463
      %3532 = vmatprep.subr.mxu0 0.0
      %3533 = vmatpush1.msra.mxu0 %v3462
      %3534 = vmatprep.subr.mxu0 0.0
      %3535 = vmatpush1.msra.mxu0 %v3461
      %3536 = vmatprep.subr.mxu0 0.0
      %3537 = vmatpush1.msra.mxu0 %v3460
      %3538 = vmatprep.subr.mxu0 0.0
      %3539 = vmatpush1.msra.mxu0 %v3459
      %3540 = vmatprep.subr.mxu0 0.0
      %3541 = vmatpush1.msra.mxu0 %v3458
      %3542 = vmatprep.subr.mxu0 0.0
      %3543 = vmatpush1.msra.mxu0 %v3457
      %3544 = vmatprep.subr.mxu0 0.0
      %3545 = vmatpush2.msra.mxu0 %v3488
      %3546 = vmatprep.subr.mxu0 0.0
      %3547 = vmatpush2.msra.mxu0 %v3487
      %3548 = vmatprep.subr.mxu0 0.0
      %3549 = vmatpush2.msra.mxu0 %v3486
      %3550 = vmatprep.subr.mxu0 0.0
      %3551 = vmatpush2.msra.mxu0 %v3485
      %3552 = vmatprep.subr.mxu0 0.0
      %3553 = vmatpush2.msra.mxu0 %v3484
      %3554 = vmatprep.subr.mxu0 0.0
      %3555 = vmatpush2.msra.mxu0 %v3483
      %3556 = vmatprep.subr.mxu0 0.0
      %3557 = vmatpush2.msra.mxu0 %v3482
      %3558 = vmatprep.subr.mxu0 0.0
      %3559 = vmatpush2.msra.mxu0 %v3481
      %3560 = vmatprep.subr.mxu0 0.0
      %3561 = vmatpush2.msra.mxu0 %v3480
      %3562 = vmatprep.subr.mxu0 0.0
      %3563 = vmatpush2.msra.mxu0 %v3479
      %3564 = vmatprep.subr.mxu0 0.0
      %3565 = vmatpush2.msra.mxu0 %v3478
      %3566 = vmatprep.subr.mxu0 0.0
      %3567 = vmatpush2.msra.mxu0 %v3477
      %3568 = vmatprep.subr.mxu0 0.0
      %3569 = vmatpush2.msra.mxu0 %v3476
      %3570 = vmatprep.subr.mxu0 0.0
      %3571 = vmatpush2.msra.mxu0 %v3475
      %3572 = vmatprep.subr.mxu0 0.0
      %3573 = vmatpush2.msra.mxu0 %v3474
      %3574 = vmatprep.subr.mxu0 0.0
      %3575 = vmatpush2.msra.mxu0 %v3473
      %3576 = vmatprep.mubr.f32.mxu0 %v3455
      %3577 = vmatmul.mubr.f32.gmra.mxu0 %v3454
      %v3578 = vpop.f32.mrf.mxu0
      %v3579 = vadd.f32 %v3510, %v3578
      %v3580 = vpop.f32.mrf.mxu0
      %3581 = vdwg.mxu0
      %3582 = vmatprep.subr.mxu0 0.0
      %3583 = vmatpush1.msra.mxu0 %v3504
      %3584 = vmatprep.subr.mxu0 0.0
      %3585 = vmatpush1.msra.mxu0 %v3503
      %3586 = vmatprep.subr.mxu0 0.0
      %3587 = vmatpush1.msra.mxu0 %v3502
      %3588 = vmatprep.subr.mxu0 0.0
      %3589 = vmatpush1.msra.mxu0 %v3501
      %3590 = vmatprep.subr.mxu0 0.0
      %3591 = vmatpush1.msra.mxu0 %v3500
      %3592 = vmatprep.subr.mxu0 0.0
      %3593 = vmatpush1.msra.mxu0 %v3499
      %3594 = vmatprep.subr.mxu0 0.0
      %3595 = vmatpush1.msra.mxu0 %v3498
      %3596 = vmatprep.subr.mxu0 0.0
      %3597 = vmatpush1.msra.mxu0 %v3497
      %3598 = vmatprep.subr.mxu0 0.0
      %3599 = vmatpush1.msra.mxu0 %v3496
      %3600 = vmatprep.subr.mxu0 0.0
      %3601 = vmatpush1.msra.mxu0 %v3495
      %3602 = vmatprep.subr.mxu0 0.0
      %3603 = vmatpush1.msra.mxu0 %v3494
      %3604 = vmatprep.subr.mxu0 0.0
      %3605 = vmatpush1.msra.mxu0 %v3493
      %3606 = vmatprep.subr.mxu0 0.0
      %3607 = vmatpush1.msra.mxu0 %v3492
      %3608 = vmatprep.subr.mxu0 0.0
      %3609 = vmatpush1.msra.mxu0 %v3491
      %3610 = vmatprep.subr.mxu0 0.0
      %3611 = vmatpush1.msra.mxu0 %v3490
      %3612 = vmatprep.subr.mxu0 0.0
      %3613 = vmatpush1.msra.mxu0 %v3489
      %3614 = vmatprep.subr.mxu0 0.0
      %3615 = vmatpush2.msra.mxu0 0.0
      %3616 = vmatprep.subr.mxu0 0.0
      %3617 = vmatpush2.msra.mxu0 0.0
      %3618 = vmatprep.subr.mxu0 0.0
      %3619 = vmatpush2.msra.mxu0 0.0
      %3620 = vmatprep.subr.mxu0 0.0
      %3621 = vmatpush2.msra.mxu0 0.0
      %3622 = vmatprep.subr.mxu0 0.0
      %3623 = vmatpush2.msra.mxu0 0.0
      %3624 = vmatprep.subr.mxu0 0.0
      %3625 = vmatpush2.msra.mxu0 0.0
      %3626 = vmatprep.subr.mxu0 0.0
      %3627 = vmatpush2.msra.mxu0 0.0
      %3628 = vmatprep.subr.mxu0 0.0
      %3629 = vmatpush2.msra.mxu0 0.0
      %3630 = vmatprep.subr.mxu0 0.0
      %3631 = vmatpush2.msra.mxu0 0.0
      %3632 = vmatprep.subr.mxu0 0.0
      %3633 = vmatpush2.msra.mxu0 0.0
      %3634 = vmatprep.subr.mxu0 0.0
      %3635 = vmatpush2.msra.mxu0 0.0
      %3636 = vmatprep.subr.mxu0 0.0
      %3637 = vmatpush2.msra.mxu0 0.0
      %3638 = vmatprep.subr.mxu0 0.0
      %3639 = vmatpush2.msra.mxu0 0.0
      %3640 = vmatprep.subr.mxu0 0.0
      %3641 = vmatpush2.msra.mxu0 0.0
      %3642 = vmatprep.subr.mxu0 0.0
      %3643 = vmatpush2.msra.mxu0 0.0
      %3644 = vmatprep.subr.mxu0 0.0
      %3645 = vmatpush2.msra.mxu0 0.0
      %3646 = vmatprep.mubr.f32.mxu0 0.0
      %3647 = vmatmul.mubr.f32.gmra.mxu0 %v3456
      %v3648 = vpop.f32.mrf.mxu0
      %v3649 = vadd.f32 %v3579, %v3648
      %v3650 = vpop.f32.mrf.mxu0
      %3651 = vdwg.mxu0
      %vm3652 = vcmask 31744
      %3653 = vst.msk [vmem:[%s227] sm:$0xff] %vm3652, %v3649
      %p3654 = scmp.lt.s32.totalorder %s16, 1
      %s3655 = scalar_select %p3654, %s16, 1
      %s3656 = smul.addr %s3655, 8
      %s3657 = scalar_lea.vmem %s5, %s3656
      // Predicated region
      $region41: #{cnn_forward.1} parent=39 // pred_check
        %p3658 = pneg %p144
      $region42: #{cnn_forward.1} parent=39 // pred_check_branch
        %3660 = sbr.rel (%p3658) target = $region44
      $region43: #{cnn_forward.1} parent=39 // pred_region
        _
      $region44: #{cnn_forward.1} parent=39 // pred_fallthru
        _
    $region40: #{cnn_forward.1} parent=5 // pred_fallthru
      _
    %p3661 = scmp.le.s32.totalorder 2, %s11
    // Predicated region
    $region45: #{cnn_forward.1} parent=5 // pred_check
      %p3662 = pneg %p3661
    $region46: #{cnn_forward.1} parent=5 // pred_check_branch
      %3664 = sbr.rel (%p3662) target = $region48
    $region47: #{cnn_forward.1} parent=5 // pred_region
      %s3665 = ssub.s32 %s11, 2
      // Predicated region
      $region49: #{cnn_forward.1} parent=47 // pred_check
        %p3666 = pneg %p150
      $region50: #{cnn_forward.1} parent=47 // pred_check_branch
        %3668 = sbr.rel (%p3666) target = $region52
      $region51: #{cnn_forward.1} parent=47 // pred_region
        %p3669 = scmp.lt.s32.totalorder %s17, 1
        %s3670 = scalar_select %p3669, %s17, 1
        %s3671 = smul.addr %s3670, 8
        %s3672 = scalar_lea.vmem %s5, %s3671
      $region52: #{cnn_forward.1} parent=47 // pred_fallthru
        _
    $region48: #{cnn_forward.1} parent=5 // pred_fallthru
      _
  $region6: #{cnn_forward.1} parent=0 // loop_footer
    %s15 = sadd.s32 1, %s11
  $region7: #{cnn_forward.1} parent=0 // loop_footer_branch
    %10 = sbr.rel target = $region3
  $region8: #{cnn_forward.1} parent=0 // loop_exit
    _

</llo_original>
